<compile_context>
chip_gen: v5e
topology: v5e:2x2
jax: 0.10.0
libtpu: 0.0.40
codegen_flags: <defaults>
</compile_context>

<pallas_src>
import jax
import jax.numpy as jnp
from jax import lax
from jax.experimental import pallas as pl
from jax.experimental.pallas import tpu as pltpu


def bilstm_kernel(x_ref, w_in_fw_ref, w_in_bw_ref, b_in_fw_ref, b_in_bw_ref,
                  whh_fw_ref, whh_bw_ref, wtop_ref, wbot_ref, bemb_ref, out_ref,
                  gx_fw_ref, gx_bw_ref, h_fw_ref, h_bw_ref):
    """One batch block per grid step; everything resides in VMEM.

    Inputs (activations-@-weights layout, gate order i, f, g, o):
      x_ref       : (T, B, nIn) f32
      w_in_*_ref  : (nIn, 4H) bf16   input->gate weights per direction
      b_in_*_ref  : (1, 4H)   f32    combined b_ih + b_hh per direction
      whh_*_ref   : (H, 4H)   bf16   hidden->gate weights per direction
      wtop_ref    : (H, nOut) bf16   embedding rows multiplying h_fw
      wbot_ref    : (H, nOut) bf16   embedding rows multiplying h_bw
      bemb_ref    : (1, nOut) f32
    Output:
      out_ref     : (T, B, nOut) f32
    Scratch:
      gx_*_ref    : (T, B, 4H) bf16  precomputed x-part of the gates per direction
      h_*_ref     : (T, B, H)  bf16  per-timestep hidden states per direction
    """
    T, B, nIn = x_ref.shape
    H = whh_fw_ref.shape[0]
    H4 = 4 * H
    nOut = out_ref.shape[2]

    x = x_ref[...].reshape(T * B, nIn).astype(jnp.bfloat16)

    # Hot path 1: input->gate projections (one MXU pass per direction, bf16
    # operands / f32 accumulation), cached in bf16 scratch.
    # TODO(synk): for very large T, chunk this projection over the time axis
    # (front cursor for fw, back cursor for bw) so each chunk's projection
    # overlaps the previous chunk's recurrence and gx never exceeds VMEM.
    gx_fw_ref[...] = (jnp.dot(x, w_in_fw_ref[...],
                              preferred_element_type=jnp.float32)
                      + b_in_fw_ref[...]).reshape(T, B, H4).astype(jnp.bfloat16)
    gx_bw_ref[...] = (jnp.dot(x, w_in_bw_ref[...],
                              preferred_element_type=jnp.float32)
                      + b_in_bw_ref[...]).reshape(T, B, H4).astype(jnp.bfloat16)

    # Hoist recurrent weights out of the time loop (single VMEM->vreg load).
    whh_fw = whh_fw_ref[...]
    whh_bw = whh_bw_ref[...]

    # TODO(synk): if production H is not a multiple of 128, repack the gate
    # layout so the i/f/g/o slices below land on 128-lane boundaries.
    def gate_math(gates, c):
        sig = jax.nn.sigmoid(gates)              # one full-width EUP pass (i, f, _, o)
        i = sig[:, 0 * H:1 * H]
        f = sig[:, 1 * H:2 * H]
        o = sig[:, 3 * H:4 * H]
        g = jnp.tanh(gates[:, 2 * H:3 * H])
        c_new = f * c + i * g                    # cell state kept in f32
        h_new = o * jnp.tanh(c_new)
        return h_new.astype(jnp.bfloat16), c_new # h in bf16 -> next-step MXU operand

    h0 = jnp.zeros((B, H), jnp.bfloat16)
    c0 = jnp.zeros((B, H), jnp.float32)

    # Hot path 2: interleaved forward/backward recurrence.  The two per-step
    # (B,H)@(H,4H) bf16 matmuls are independent, so one direction's VPU/EUP gate
    # math hides under the other's MXU latency; unrolling gives the scheduler
    # visibility (kept modest to stay under vreg pressure for large H).
    def body(t, carry):
        h_f, c_f, h_b, c_b = carry
        tb = T - 1 - t
        gates_f = gx_fw_ref[t].astype(jnp.float32) + jnp.dot(
            h_f, whh_fw, preferred_element_type=jnp.float32)
        gates_b = gx_bw_ref[tb].astype(jnp.float32) + jnp.dot(
            h_b, whh_bw, preferred_element_type=jnp.float32)
        h_f, c_f = gate_math(gates_f, c_f)
        h_b, c_b = gate_math(gates_b, c_b)
        h_fw_ref[t] = h_f
        h_bw_ref[tb] = h_b
        return (h_f, c_f, h_b, c_b)

    unroll = T if T <= 8 else 4
    lax.fori_loop(0, T, body, (h0, c0, h0, c0), unroll=unroll)

    # Hot path 3: concat-free final Linear over the flattened recurrent output
    # (bf16 LHS straight from the h scratches, f32 accumulation).
    out = (jnp.dot(h_fw_ref[...].reshape(T * B, H), wtop_ref[...],
                   preferred_element_type=jnp.float32)
           + jnp.dot(h_bw_ref[...].reshape(T * B, H), wbot_ref[...],
                     preferred_element_type=jnp.float32)
           + bemb_ref[...])
    out_ref[...] = out.reshape(T, B, nOut).astype(out_ref.dtype)


def _chip_info():
    """(vmem_capacity_bytes, tensorcores_per_chip) with conservative fallbacks."""
    vmem_cap = 128 << 20
    cores = 1
    try:
        kind = jax.devices()[0].device_kind.lower()
    except Exception:
        kind = ""
    if "v7" in kind or "7x" in kind:
        cores, vmem_cap = 2, 64 << 20
    try:
        info = pltpu.get_tpu_info()
        vmem_cap = int(getattr(info, "vmem_capacity_bytes", vmem_cap))
    except Exception:
        pass
    return vmem_cap, cores


def _padded_bytes(shape, itemsize):
    """VMEM footprint of an array padded to the (sublane, 128) tile on its last 2 dims."""
    dims = list(shape)
    dims[-1] = -(-dims[-1] // 128) * 128
    if len(dims) >= 2:
        sub = 8 if itemsize >= 4 else 16
        dims[-2] = -(-dims[-2] // sub) * sub
    n = 1
    for d in dims:
        n *= d
    return n * itemsize


def bidirectional_lstm_pallas(x, params):
    """x: (T, B, nIn) float32. params: dict of PyTorch-convention weights (f32)."""
    T, B, nIn = x.shape
    H = params["whh_fw"].shape[1]
    nOut = params["w_emb"].shape[0]
    H4 = 4 * H

    vmem_cap, cores = _chip_info()

    # Pad the batch to a sublane multiple so per-step h stores are unmasked and
    # the (T*B, .) reshapes do not cross (8,128) tile boundaries.
    B_pad = -(-B // 8) * 8
    # Batch-grid split only on multi-TensorCore chips (v7x); on single-TC
    # v5e/v6e a grid of (2,) would just serialize the latency-bound recurrence.
    nb = 2 if (cores >= 2 and B_pad % 16 == 0) else 1
    bt = B_pad // nb
    if B_pad != B:
        x = jnp.pad(x, ((0, 0), (0, B_pad - B), (0, 0)))

    f32, bf16 = jnp.float32, jnp.bfloat16
    # PyTorch -> activations-@-weights layout; MXU operands pre-cast to bf16.
    w_in_fw = params["wih_fw"].T.astype(bf16)                       # (nIn, 4H)
    w_in_bw = params["wih_bw"].T.astype(bf16)                       # (nIn, 4H)
    b_in_fw = (params["bih_fw"] + params["bhh_fw"]).reshape(1, H4).astype(f32)
    b_in_bw = (params["bih_bw"] + params["bhh_bw"]).reshape(1, H4).astype(f32)
    whh_fw_t = params["whh_fw"].T.astype(bf16)                      # (H, 4H)
    whh_bw_t = params["whh_bw"].T.astype(bf16)                      # (H, 4H)
    wemb_t = params["w_emb"].T                                      # (2H, nOut)
    wemb_top = wemb_t[:H].astype(bf16)                              # multiplies h_fw
    wemb_bot = wemb_t[H:].astype(bf16)                              # multiplies h_bw
    bemb = params["b_emb"].reshape(1, nOut).astype(f32)

    # VMEM budget: x/out double-buffered across the batch grid, weights counted
    # once more as slack, plus bf16 scratches and compiler headroom; clamp below
    # the chip's physical capacity (64 MiB/TC on v7x).
    weight_bytes = (2 * _padded_bytes((nIn, H4), 2) + 2 * _padded_bytes((1, H4), 4)
                    + 2 * _padded_bytes((H, H4), 2) + 2 * _padded_bytes((H, nOut), 2)
                    + _padded_bytes((1, nOut), 4))
    io_bytes = _padded_bytes((T, bt, nIn), 4) + _padded_bytes((T, bt, nOut), 4)
    scratch_bytes = (2 * _padded_bytes((T, bt, H4), 2)
                     + 2 * _padded_bytes((T, bt, H), 2))
    need = 2 * (io_bytes + weight_bytes) + scratch_bytes + (4 << 20)
    vmem_limit = int(min(max(need, 32 << 20), vmem_cap - (8 << 20)))

    flops = (2 * T * B_pad * nIn * 8 * H            # fused input projections
             + 2 * T * 2 * B_pad * H * H4           # recurrence, both directions
             + 2 * T * B_pad * 2 * H * nOut)        # final Linear
    transcendentals = T * B_pad * 2 * 6 * H         # sigmoid(4H) + 2*tanh(H) per dir/step
    bytes_accessed = (4 * T * B_pad * (nIn + nOut)
                      + 2 * (2 * nIn * H4 + 2 * H * H4 + 2 * H * nOut)
                      + 4 * (2 * H4 + nOut))

    def build(buffered_weights):
        wkw = dict(pipeline_mode=pl.Buffered(1)) if buffered_weights else {}
        const2 = lambda b: (0, 0)
        in_specs = [
            pl.BlockSpec((T, bt, nIn), lambda b: (0, b, 0)),          # x
            pl.BlockSpec((nIn, H4), const2, **wkw),                   # w_in_fw
            pl.BlockSpec((nIn, H4), const2, **wkw),                   # w_in_bw
            pl.BlockSpec((1, H4), const2, **wkw),                     # b_in_fw
            pl.BlockSpec((1, H4), const2, **wkw),                     # b_in_bw
            pl.BlockSpec((H, H4), const2, **wkw),                     # whh_fw
            pl.BlockSpec((H, H4), const2, **wkw),                     # whh_bw
            pl.BlockSpec((H, nOut), const2, **wkw),                   # wemb_top
            pl.BlockSpec((H, nOut), const2, **wkw),                   # wemb_bot
            pl.BlockSpec((1, nOut), const2, **wkw),                   # bemb
        ]
        out_specs = pl.BlockSpec((T, bt, nOut), lambda b: (0, b, 0))
        scratch_shapes = [
            pltpu.VMEM((T, bt, H4), jnp.bfloat16),   # gx_fw
            pltpu.VMEM((T, bt, H4), jnp.bfloat16),   # gx_bw
            pltpu.VMEM((T, bt, H), jnp.bfloat16),    # h_fw
            pltpu.VMEM((T, bt, H), jnp.bfloat16),    # h_bw
        ]
        grid_spec = pltpu.PrefetchScalarGridSpec(
            num_scalar_prefetch=0,
            grid=(nb,),
            in_specs=in_specs,
            out_specs=out_specs,
            scratch_shapes=scratch_shapes,
        )
        return pl.pallas_call(
            bilstm_kernel,
            out_shape=jax.ShapeDtypeStruct((T, B_pad, nOut), jnp.float32),
            grid_spec=grid_spec,
            compiler_params=pltpu.CompilerParams(
                dimension_semantics=("parallel",),
                vmem_limit_bytes=vmem_limit),
            cost_estimate=pl.CostEstimate(
                flops=int(flops),
                transcendentals=int(transcendentals),
                bytes_accessed=int(bytes_accessed)),
        )

    args = (x, w_in_fw, w_in_bw, b_in_fw, b_in_bw,
            whh_fw_t, whh_bw_t, wemb_top, wemb_bot, bemb)
    try:
        out = build(True)(*args)
    except Exception:
        # pl.Buffered(1) unsupported on this jax version: fall back to default
        # pipelining (weights double-buffered like everything else).
        out = build(False)(*args)
    return out[:, :B, :]


# ----------------------------- pure-JAX reference -----------------------------
def _lstm_dir_ref(x, wih, whh, bih, bhh):
    H = whh.shape[1]
    B = x.shape[1]

    def step(carry, xt):
        h, c = carry
        gates = xt @ wih.T + bih + h @ whh.T + bhh
        i, f, g, o = jnp.split(gates, 4, axis=-1)
        i, f, o = jax.nn.sigmoid(i), jax.nn.sigmoid(f), jax.nn.sigmoid(o)
        g = jnp.tanh(g)
        c = f * c + i * g
        h = o * jnp.tanh(c)
        return (h, c), h

    _, hs = lax.scan(step, (jnp.zeros((B, H)), jnp.zeros((B, H))), x)
    return hs


def bidirectional_lstm_ref(x, p):
    hs_fw = _lstm_dir_ref(x, p["wih_fw"], p["whh_fw"], p["bih_fw"], p["bhh_fw"])
    hs_bw = _lstm_dir_ref(x[::-1], p["wih_bw"], p["whh_bw"], p["bih_bw"],
                          p["bhh_bw"])[::-1]
    rec = jnp.concatenate([hs_fw, hs_bw], axis=-1)          # (T, B, 2H)
    T, B, h2 = rec.shape
    out = rec.reshape(T * B, h2) @ p["w_emb"].T + p["b_emb"]
    return out.reshape(T, B, -1)


# ----------------------------------- main -----------------------------------
if __name__ == "__main__":
    T, B, nIn, nHidden, nOut = 8, 2, 32, 32, 16
    key = jax.random.PRNGKey(0)
    ks = jax.random.split(key, 12)
    k = 1.0 / jnp.sqrt(jnp.float32(nHidden))

    def u(kk, shape):
        return jax.random.uniform(kk, shape, jnp.float32, -k, k)

    params = {
        "wih_fw": u(ks[0], (4 * nHidden, nIn)),
        "whh_fw": u(ks[1], (4 * nHidden, nHidden)),
        "bih_fw": u(ks[2], (4 * nHidden,)),
        "bhh_fw": u(ks[3], (4 * nHidden,)),
        "wih_bw": u(ks[4], (4 * nHidden, nIn)),
        "whh_bw": u(ks[5], (4 * nHidden, nHidden)),
        "bih_bw": u(ks[6], (4 * nHidden,)),
        "bhh_bw": u(ks[7], (4 * nHidden,)),
        "w_emb": u(ks[8], (nOut, 2 * nHidden)),
        "b_emb": u(ks[9], (nOut,)),
    }
    x = jax.random.normal(ks[10], (T, B, nIn), jnp.float32)

    out = jax.block_until_ready(bidirectional_lstm_pallas(x, params))
    ref = jax.block_until_ready(bidirectional_lstm_ref(x, params))

    assert out.shape == (T, B, nOut), out.shape
    # Tolerance loosened vs the f32 reference because MXU operands are bf16.
    assert jnp.allclose(out, ref, rtol=5e-2, atol=5e-2), \
        f"max abs err {jnp.max(jnp.abs(out - ref))}"
    print("KERNEL_OK")
</pallas_src>

<mosaic_0001>
module attributes {stable_mosaic.version = 11 : i64} {
  func.func @bilstm_kernel(%arg0: i32, %arg1: memref<8x8x32xf32, #tpu.memory_space<vmem>>, %arg2: memref<32x128xbf16, #tpu.memory_space<vmem>>, %arg3: memref<32x128xbf16, #tpu.memory_space<vmem>>, %arg4: memref<1x128xf32, #tpu.memory_space<vmem>>, %arg5: memref<1x128xf32, #tpu.memory_space<vmem>>, %arg6: memref<32x128xbf16, #tpu.memory_space<vmem>>, %arg7: memref<32x128xbf16, #tpu.memory_space<vmem>>, %arg8: memref<32x16xbf16, #tpu.memory_space<vmem>>, %arg9: memref<32x16xbf16, #tpu.memory_space<vmem>>, %arg10: memref<1x16xf32, #tpu.memory_space<vmem>>, %arg11: memref<8x8x16xf32, #tpu.memory_space<vmem>>, %arg12: memref<8x8x128xbf16, #tpu.memory_space<vmem>>, %arg13: memref<8x8x128xbf16, #tpu.memory_space<vmem>>, %arg14: memref<8x8x32xbf16, #tpu.memory_space<vmem>>, %arg15: memref<8x8x32xbf16, #tpu.memory_space<vmem>>) attributes {dimension_semantics = [#tpu.dimension_semantics<parallel>], iteration_bounds = array<i64: 1>, scalar_prefetch = 0 : i64, scratch_operands = 4 : i64, tpu.core_type = #tpu.core_type<tc>, window_params = [{transform_indices = @transform_0, window_bounds = array<i64: 8, 8, 32>}, {pipeline_mode = #tpu.pipeline_mode<synchronous>, transform_indices = @transform_1, window_bounds = array<i64: 32, 128>}, {pipeline_mode = #tpu.pipeline_mode<synchronous>, transform_indices = @transform_2, window_bounds = array<i64: 32, 128>}, {pipeline_mode = #tpu.pipeline_mode<synchronous>, transform_indices = @transform_3, window_bounds = array<i64: 1, 128>}, {pipeline_mode = #tpu.pipeline_mode<synchronous>, transform_indices = @transform_4, window_bounds = array<i64: 1, 128>}, {pipeline_mode = #tpu.pipeline_mode<synchronous>, transform_indices = @transform_5, window_bounds = array<i64: 32, 128>}, {pipeline_mode = #tpu.pipeline_mode<synchronous>, transform_indices = @transform_6, window_bounds = array<i64: 32, 128>}, {pipeline_mode = #tpu.pipeline_mode<synchronous>, transform_indices = @transform_7, window_bounds = array<i64: 32, 16>}, {pipeline_mode = #tpu.pipeline_mode<synchronous>, transform_indices = @transform_8, window_bounds = array<i64: 32, 16>}, {pipeline_mode = #tpu.pipeline_mode<synchronous>, transform_indices = @transform_9, window_bounds = array<i64: 1, 16>}, {transform_indices = @transform_10, window_bounds = array<i64: 8, 8, 16>}]} {
    %c0 = arith.constant 0 : index
    %c0_0 = arith.constant 0 : index
    %c0_1 = arith.constant 0 : index
    %0 = vector.load %arg1[%c0, %c0_0, %c0_1] : memref<8x8x32xf32, #tpu.memory_space<vmem>>, vector<8x8x32xf32>
    %1 = vector.shape_cast %0 : vector<8x8x32xf32> to vector<64x32xf32>
    %2 = arith.truncf %1 : vector<64x32xf32> to vector<64x32xbf16>
    %c0_2 = arith.constant 0 : index
    %c0_3 = arith.constant 0 : index
    %3 = vector.load %arg2[%c0_2, %c0_3] : memref<32x128xbf16, #tpu.memory_space<vmem>>, vector<32x128xbf16>
    %cst = arith.constant dense<0.000000e+00> : vector<64x128xf32>
    %4 = tpu.matmul %2, %3, %cst {dimension_numbers = #tpu.dot_dimension_numbers<[1], [0], [0], [1], [0, 0, 1, 1], [], []>} : vector<64x32xbf16>, vector<32x128xbf16>, vector<64x128xf32> -> vector<64x128xf32>
    %c0_4 = arith.constant 0 : index
    %c0_5 = arith.constant 0 : index
    %5 = vector.load %arg4[%c0_4, %c0_5] : memref<1x128xf32, #tpu.memory_space<vmem>>, vector<1x128xf32>
    %6 = vector.broadcast %5 : vector<1x128xf32> to vector<64x128xf32>
    %7 = arith.addf %4, %6 : vector<64x128xf32>
    %8 = vector.shape_cast %7 : vector<64x128xf32> to vector<8x8x128xf32>
    %9 = arith.truncf %8 : vector<8x8x128xf32> to vector<8x8x128xbf16>
    %c0_6 = arith.constant 0 : index
    %c0_7 = arith.constant 0 : index
    %c0_8 = arith.constant 0 : index
    %10 = vector.load %arg12[%c0_6, %c0_7, %c0_8] : memref<8x8x128xbf16, #tpu.memory_space<vmem>>, vector<8x8x128xbf16>
    tpu.vector_store %arg12[%c0_6, %c0_7, %c0_8], %9 {strides = array<i32>} : memref<8x8x128xbf16, #tpu.memory_space<vmem>>, vector<8x8x128xbf16>,
    %c0_9 = arith.constant 0 : index
    %c0_10 = arith.constant 0 : index
    %11 = vector.load %arg3[%c0_9, %c0_10] : memref<32x128xbf16, #tpu.memory_space<vmem>>, vector<32x128xbf16>
    %cst_11 = arith.constant dense<0.000000e+00> : vector<64x128xf32>
    %12 = tpu.matmul %2, %11, %cst_11 {dimension_numbers = #tpu.dot_dimension_numbers<[1], [0], [0], [1], [0, 0, 1, 1], [], []>} : vector<64x32xbf16>, vector<32x128xbf16>, vector<64x128xf32> -> vector<64x128xf32>
    %c0_12 = arith.constant 0 : index
    %c0_13 = arith.constant 0 : index
    %13 = vector.load %arg5[%c0_12, %c0_13] : memref<1x128xf32, #tpu.memory_space<vmem>>, vector<1x128xf32>
    %14 = vector.broadcast %13 : vector<1x128xf32> to vector<64x128xf32>
    %15 = arith.addf %12, %14 : vector<64x128xf32>
    %16 = vector.shape_cast %15 : vector<64x128xf32> to vector<8x8x128xf32>
    %17 = arith.truncf %16 : vector<8x8x128xf32> to vector<8x8x128xbf16>
    %c0_14 = arith.constant 0 : index
    %c0_15 = arith.constant 0 : index
    %c0_16 = arith.constant 0 : index
    %18 = vector.load %arg13[%c0_14, %c0_15, %c0_16] : memref<8x8x128xbf16, #tpu.memory_space<vmem>>, vector<8x8x128xbf16>
    tpu.vector_store %arg13[%c0_14, %c0_15, %c0_16], %17 {strides = array<i32>} : memref<8x8x128xbf16, #tpu.memory_space<vmem>>, vector<8x8x128xbf16>,
    %c0_17 = arith.constant 0 : index
    %c0_18 = arith.constant 0 : index
    %19 = vector.load %arg6[%c0_17, %c0_18] : memref<32x128xbf16, #tpu.memory_space<vmem>>, vector<32x128xbf16>
    %c0_19 = arith.constant 0 : index
    %c0_20 = arith.constant 0 : index
    %20 = vector.load %arg7[%c0_19, %c0_20] : memref<32x128xbf16, #tpu.memory_space<vmem>>, vector<32x128xbf16>
    %cst_21 = arith.constant 0.000000e+00 : bf16
    %21 = vector.broadcast %cst_21 : bf16 to vector<8x32xbf16>
    %cst_22 = arith.constant 0.000000e+00 : f32
    %22 = vector.broadcast %cst_22 : f32 to vector<8x32xf32>
    %c0_i32 = arith.constant 0 : i32
    %c7_i32 = arith.constant 7 : i32
    %23 = arith.subi %c7_i32, %c0_i32 : i32
    %24 = arith.index_cast %c0_i32 : i32 to index
    %c0_23 = arith.constant 0 : index
    %c0_24 = arith.constant 0 : index
    %25 = vector.load %arg12[%24, %c0_23, %c0_24] : memref<8x8x128xbf16, #tpu.memory_space<vmem>>, vector<1x8x128xbf16>
    %26 = vector.shape_cast %25 : vector<1x8x128xbf16> to vector<8x128xbf16>
    %27 = arith.extf %26 : vector<8x128xbf16> to vector<8x128xf32>
    %cst_25 = arith.constant dense<0.000000e+00> : vector<8x128xf32>
    %28 = tpu.matmul %21, %19, %cst_25 {dimension_numbers = #tpu.dot_dimension_numbers<[1], [0], [0], [1], [0, 0, 1, 1], [], []>} : vector<8x32xbf16>, vector<32x128xbf16>, vector<8x128xf32> -> vector<8x128xf32>
    %29 = arith.addf %27, %28 : vector<8x128xf32>
    %30 = arith.index_cast %23 : i32 to index
    %c0_26 = arith.constant 0 : index
    %c0_27 = arith.constant 0 : index
    %31 = vector.load %arg13[%30, %c0_26, %c0_27] : memref<8x8x128xbf16, #tpu.memory_space<vmem>>, vector<1x8x128xbf16>
    %32 = vector.shape_cast %31 : vector<1x8x128xbf16> to vector<8x128xbf16>
    %33 = arith.extf %32 : vector<8x128xbf16> to vector<8x128xf32>
    %cst_28 = arith.constant dense<0.000000e+00> : vector<8x128xf32>
    %34 = tpu.matmul %21, %20, %cst_28 {dimension_numbers = #tpu.dot_dimension_numbers<[1], [0], [0], [1], [0, 0, 1, 1], [], []>} : vector<8x32xbf16>, vector<32x128xbf16>, vector<8x128xf32> -> vector<8x128xf32>
    %35 = arith.addf %33, %34 : vector<8x128xf32>
    %36 = arith.negf %29 : vector<8x128xf32>
    %37 = math.exp %36 : vector<8x128xf32>
    %cst_29 = arith.constant 1.000000e+00 : f32
    %38 = vector.broadcast %cst_29 : f32 to vector<8x128xf32>
    %39 = arith.addf %38, %37 : vector<8x128xf32>
    %40 = arith.divf %38, %39 : vector<8x128xf32>
    %41 = vector.extract_strided_slice %40 {offsets = [0, 0], sizes = [8, 32], strides = [1, 1]} : vector<8x128xf32> to vector<8x32xf32>
    %42 = vector.extract_strided_slice %40 {offsets = [0, 32], sizes = [8, 32], strides = [1, 1]} : vector<8x128xf32> to vector<8x32xf32>
    %43 = vector.extract_strided_slice %40 {offsets = [0, 96], sizes = [8, 32], strides = [1, 1]} : vector<8x128xf32> to vector<8x32xf32>
    %44 = vector.extract_strided_slice %29 {offsets = [0, 64], sizes = [8, 32], strides = [1, 1]} : vector<8x128xf32> to vector<8x32xf32>
    %45 = math.tanh %44 : vector<8x32xf32>
    %46 = arith.mulf %42, %22 : vector<8x32xf32>
    %47 = arith.mulf %41, %45 : vector<8x32xf32>
    %48 = arith.addf %46, %47 : vector<8x32xf32>
    %49 = math.tanh %48 : vector<8x32xf32>
    %50 = arith.mulf %43, %49 : vector<8x32xf32>
    %51 = arith.truncf %50 : vector<8x32xf32> to vector<8x32xbf16>
    %52 = arith.negf %35 : vector<8x128xf32>
    %53 = math.exp %52 : vector<8x128xf32>
    %cst_30 = arith.constant 1.000000e+00 : f32
    %54 = vector.broadcast %cst_30 : f32 to vector<8x128xf32>
    %55 = arith.addf %54, %53 : vector<8x128xf32>
    %56 = arith.divf %54, %55 : vector<8x128xf32>
    %57 = vector.extract_strided_slice %56 {offsets = [0, 0], sizes = [8, 32], strides = [1, 1]} : vector<8x128xf32> to vector<8x32xf32>
    %58 = vector.extract_strided_slice %56 {offsets = [0, 32], sizes = [8, 32], strides = [1, 1]} : vector<8x128xf32> to vector<8x32xf32>
    %59 = vector.extract_strided_slice %56 {offsets = [0, 96], sizes = [8, 32], strides = [1, 1]} : vector<8x128xf32> to vector<8x32xf32>
    %60 = vector.extract_strided_slice %35 {offsets = [0, 64], sizes = [8, 32], strides = [1, 1]} : vector<8x128xf32> to vector<8x32xf32>
    %61 = math.tanh %60 : vector<8x32xf32>
    %62 = arith.mulf %58, %22 : vector<8x32xf32>
    %63 = arith.mulf %57, %61 : vector<8x32xf32>
    %64 = arith.addf %62, %63 : vector<8x32xf32>
    %65 = math.tanh %64 : vector<8x32xf32>
    %66 = arith.mulf %59, %65 : vector<8x32xf32>
    %67 = arith.truncf %66 : vector<8x32xf32> to vector<8x32xbf16>
    %68 = arith.index_cast %c0_i32 : i32 to index
    %c0_31 = arith.constant 0 : index
    %c0_32 = arith.constant 0 : index
    %69 = vector.load %arg14[%68, %c0_31, %c0_32] : memref<8x8x32xbf16, #tpu.memory_space<vmem>>, vector<1x8x32xbf16>
    %70 = vector.shape_cast %69 : vector<1x8x32xbf16> to vector<8x32xbf16>
    %71 = vector.shape_cast %51 : vector<8x32xbf16> to vector<1x8x32xbf16>
    tpu.vector_store %arg14[%68, %c0_31, %c0_32], %71 {strides = array<i32>} : memref<8x8x32xbf16, #tpu.memory_space<vmem>>, vector<1x8x32xbf16>,
    %72 = arith.index_cast %23 : i32 to index
    %c0_33 = arith.constant 0 : index
    %c0_34 = arith.constant 0 : index
    %73 = vector.load %arg15[%72, %c0_33, %c0_34] : memref<8x8x32xbf16, #tpu.memory_space<vmem>>, vector<1x8x32xbf16>
    %74 = vector.shape_cast %73 : vector<1x8x32xbf16> to vector<8x32xbf16>
    %75 = vector.shape_cast %67 : vector<8x32xbf16> to vector<1x8x32xbf16>
    tpu.vector_store %arg15[%72, %c0_33, %c0_34], %75 {strides = array<i32>} : memref<8x8x32xbf16, #tpu.memory_space<vmem>>, vector<1x8x32xbf16>,
    %c1_i32 = arith.constant 1 : i32
    %c7_i32_35 = arith.constant 7 : i32
    %76 = arith.subi %c7_i32_35, %c1_i32 : i32
    %77 = arith.index_cast %c1_i32 : i32 to index
    %c0_36 = arith.constant 0 : index
    %c0_37 = arith.constant 0 : index
    %78 = vector.load %arg12[%77, %c0_36, %c0_37] : memref<8x8x128xbf16, #tpu.memory_space<vmem>>, vector<1x8x128xbf16>
    %79 = vector.shape_cast %78 : vector<1x8x128xbf16> to vector<8x128xbf16>
    %80 = arith.extf %79 : vector<8x128xbf16> to vector<8x128xf32>
    %cst_38 = arith.constant dense<0.000000e+00> : vector<8x128xf32>
    %81 = tpu.matmul %51, %19, %cst_38 {dimension_numbers = #tpu.dot_dimension_numbers<[1], [0], [0], [1], [0, 0, 1, 1], [], []>} : vector<8x32xbf16>, vector<32x128xbf16>, vector<8x128xf32> -> vector<8x128xf32>
    %82 = arith.addf %80, %81 : vector<8x128xf32>
    %83 = arith.index_cast %76 : i32 to index
    %c0_39 = arith.constant 0 : index
    %c0_40 = arith.constant 0 : index
    %84 = vector.load %arg13[%83, %c0_39, %c0_40] : memref<8x8x128xbf16, #tpu.memory_space<vmem>>, vector<1x8x128xbf16>
    %85 = vector.shape_cast %84 : vector<1x8x128xbf16> to vector<8x128xbf16>
    %86 = arith.extf %85 : vector<8x128xbf16> to vector<8x128xf32>
    %cst_41 = arith.constant dense<0.000000e+00> : vector<8x128xf32>
    %87 = tpu.matmul %67, %20, %cst_41 {dimension_numbers = #tpu.dot_dimension_numbers<[1], [0], [0], [1], [0, 0, 1, 1], [], []>} : vector<8x32xbf16>, vector<32x128xbf16>, vector<8x128xf32> -> vector<8x128xf32>
    %88 = arith.addf %86, %87 : vector<8x128xf32>
    %89 = arith.negf %82 : vector<8x128xf32>
    %90 = math.exp %89 : vector<8x128xf32>
    %cst_42 = arith.constant 1.000000e+00 : f32
    %91 = vector.broadcast %cst_42 : f32 to vector<8x128xf32>
    %92 = arith.addf %91, %90 : vector<8x128xf32>
    %93 = arith.divf %91, %92 : vector<8x128xf32>
    %94 = vector.extract_strided_slice %93 {offsets = [0, 0], sizes = [8, 32], strides = [1, 1]} : vector<8x128xf32> to vector<8x32xf32>
    %95 = vector.extract_strided_slice %93 {offsets = [0, 32], sizes = [8, 32], strides = [1, 1]} : vector<8x128xf32> to vector<8x32xf32>
    %96 = vector.extract_strided_slice %93 {offsets = [0, 96], sizes = [8, 32], strides = [1, 1]} : vector<8x128xf32> to vector<8x32xf32>
    %97 = vector.extract_strided_slice %82 {offsets = [0, 64], sizes = [8, 32], strides = [1, 1]} : vector<8x128xf32> to vector<8x32xf32>
    %98 = math.tanh %97 : vector<8x32xf32>
    %99 = arith.mulf %95, %48 : vector<8x32xf32>
    %100 = arith.mulf %94, %98 : vector<8x32xf32>
    %101 = arith.addf %99, %100 : vector<8x32xf32>
    %102 = math.tanh %101 : vector<8x32xf32>
    %103 = arith.mulf %96, %102 : vector<8x32xf32>
    %104 = arith.truncf %103 : vector<8x32xf32> to vector<8x32xbf16>
    %105 = arith.negf %88 : vector<8x128xf32>
    %106 = math.exp %105 : vector<8x128xf32>
    %cst_43 = arith.constant 1.000000e+00 : f32
    %107 = vector.broadcast %cst_43 : f32 to vector<8x128xf32>
    %108 = arith.addf %107, %106 : vector<8x128xf32>
    %109 = arith.divf %107, %108 : vector<8x128xf32>
    %110 = vector.extract_strided_slice %109 {offsets = [0, 0], sizes = [8, 32], strides = [1, 1]} : vector<8x128xf32> to vector<8x32xf32>
    %111 = vector.extract_strided_slice %109 {offsets = [0, 32], sizes = [8, 32], strides = [1, 1]} : vector<8x128xf32> to vector<8x32xf32>
    %112 = vector.extract_strided_slice %109 {offsets = [0, 96], sizes = [8, 32], strides = [1, 1]} : vector<8x128xf32> to vector<8x32xf32>
    %113 = vector.extract_strided_slice %88 {offsets = [0, 64], sizes = [8, 32], strides = [1, 1]} : vector<8x128xf32> to vector<8x32xf32>
    %114 = math.tanh %113 : vector<8x32xf32>
    %115 = arith.mulf %111, %64 : vector<8x32xf32>
    %116 = arith.mulf %110, %114 : vector<8x32xf32>
    %117 = arith.addf %115, %116 : vector<8x32xf32>
    %118 = math.tanh %117 : vector<8x32xf32>
    %119 = arith.mulf %112, %118 : vector<8x32xf32>
    %120 = arith.truncf %119 : vector<8x32xf32> to vector<8x32xbf16>
    %121 = arith.index_cast %c1_i32 : i32 to index
    %c0_44 = arith.constant 0 : index
    %c0_45 = arith.constant 0 : index
    %122 = vector.load %arg14[%121, %c0_44, %c0_45] : memref<8x8x32xbf16, #tpu.memory_space<vmem>>, vector<1x8x32xbf16>
    %123 = vector.shape_cast %122 : vector<1x8x32xbf16> to vector<8x32xbf16>
    %124 = vector.shape_cast %104 : vector<8x32xbf16> to vector<1x8x32xbf16>
    tpu.vector_store %arg14[%121, %c0_44, %c0_45], %124 {strides = array<i32>} : memref<8x8x32xbf16, #tpu.memory_space<vmem>>, vector<1x8x32xbf16>,
    %125 = arith.index_cast %76 : i32 to index
    %c0_46 = arith.constant 0 : index
    %c0_47 = arith.constant 0 : index
    %126 = vector.load %arg15[%125, %c0_46, %c0_47] : memref<8x8x32xbf16, #tpu.memory_space<vmem>>, vector<1x8x32xbf16>
    %127 = vector.shape_cast %126 : vector<1x8x32xbf16> to vector<8x32xbf16>
    %128 = vector.shape_cast %120 : vector<8x32xbf16> to vector<1x8x32xbf16>
    tpu.vector_store %arg15[%125, %c0_46, %c0_47], %128 {strides = array<i32>} : memref<8x8x32xbf16, #tpu.memory_space<vmem>>, vector<1x8x32xbf16>,
    %c2_i32 = arith.constant 2 : i32
    %c7_i32_48 = arith.constant 7 : i32
    %129 = arith.subi %c7_i32_48, %c2_i32 : i32
    %130 = arith.index_cast %c2_i32 : i32 to index
    %c0_49 = arith.constant 0 : index
    %c0_50 = arith.constant 0 : index
    %131 = vector.load %arg12[%130, %c0_49, %c0_50] : memref<8x8x128xbf16, #tpu.memory_space<vmem>>, vector<1x8x128xbf16>
    %132 = vector.shape_cast %131 : vector<1x8x128xbf16> to vector<8x128xbf16>
    %133 = arith.extf %132 : vector<8x128xbf16> to vector<8x128xf32>
    %cst_51 = arith.constant dense<0.000000e+00> : vector<8x128xf32>
    %134 = tpu.matmul %104, %19, %cst_51 {dimension_numbers = #tpu.dot_dimension_numbers<[1], [0], [0], [1], [0, 0, 1, 1], [], []>} : vector<8x32xbf16>, vector<32x128xbf16>, vector<8x128xf32> -> vector<8x128xf32>
    %135 = arith.addf %133, %134 : vector<8x128xf32>
    %136 = arith.index_cast %129 : i32 to index
    %c0_52 = arith.constant 0 : index
    %c0_53 = arith.constant 0 : index
    %137 = vector.load %arg13[%136, %c0_52, %c0_53] : memref<8x8x128xbf16, #tpu.memory_space<vmem>>, vector<1x8x128xbf16>
    %138 = vector.shape_cast %137 : vector<1x8x128xbf16> to vector<8x128xbf16>
    %139 = arith.extf %138 : vector<8x128xbf16> to vector<8x128xf32>
    %cst_54 = arith.constant dense<0.000000e+00> : vector<8x128xf32>
    %140 = tpu.matmul %120, %20, %cst_54 {dimension_numbers = #tpu.dot_dimension_numbers<[1], [0], [0], [1], [0, 0, 1, 1], [], []>} : vector<8x32xbf16>, vector<32x128xbf16>, vector<8x128xf32> -> vector<8x128xf32>
    %141 = arith.addf %139, %140 : vector<8x128xf32>
    %142 = arith.negf %135 : vector<8x128xf32>
    %143 = math.exp %142 : vector<8x128xf32>
    %cst_55 = arith.constant 1.000000e+00 : f32
    %144 = vector.broadcast %cst_55 : f32 to vector<8x128xf32>
    %145 = arith.addf %144, %143 : vector<8x128xf32>
    %146 = arith.divf %144, %145 : vector<8x128xf32>
    %147 = vector.extract_strided_slice %146 {offsets = [0, 0], sizes = [8, 32], strides = [1, 1]} : vector<8x128xf32> to vector<8x32xf32>
    %148 = vector.extract_strided_slice %146 {offsets = [0, 32], sizes = [8, 32], strides = [1, 1]} : vector<8x128xf32> to vector<8x32xf32>
    %149 = vector.extract_strided_slice %146 {offsets = [0, 96], sizes = [8, 32], strides = [1, 1]} : vector<8x128xf32> to vector<8x32xf32>
    %150 = vector.extract_strided_slice %135 {offsets = [0, 64], sizes = [8, 32], strides = [1, 1]} : vector<8x128xf32> to vector<8x32xf32>
    %151 = math.tanh %150 : vector<8x32xf32>
    %152 = arith.mulf %148, %101 : vector<8x32xf32>
    %153 = arith.mulf %147, %151 : vector<8x32xf32>
    %154 = arith.addf %152, %153 : vector<8x32xf32>
    %155 = math.tanh %154 : vector<8x32xf32>
    %156 = arith.mulf %149, %155 : vector<8x32xf32>
    %157 = arith.truncf %156 : vector<8x32xf32> to vector<8x32xbf16>
    %158 = arith.negf %141 : vector<8x128xf32>
    %159 = math.exp %158 : vector<8x128xf32>
    %cst_56 = arith.constant 1.000000e+00 : f32
    %160 = vector.broadcast %cst_56 : f32 to vector<8x128xf32>
    %161 = arith.addf %160, %159 : vector<8x128xf32>
    %162 = arith.divf %160, %161 : vector<8x128xf32>
    %163 = vector.extract_strided_slice %162 {offsets = [0, 0], sizes = [8, 32], strides = [1, 1]} : vector<8x128xf32> to vector<8x32xf32>
    %164 = vector.extract_strided_slice %162 {offsets = [0, 32], sizes = [8, 32], strides = [1, 1]} : vector<8x128xf32> to vector<8x32xf32>
    %165 = vector.extract_strided_slice %162 {offsets = [0, 96], sizes = [8, 32], strides = [1, 1]} : vector<8x128xf32> to vector<8x32xf32>
    %166 = vector.extract_strided_slice %141 {offsets = [0, 64], sizes = [8, 32], strides = [1, 1]} : vector<8x128xf32> to vector<8x32xf32>
    %167 = math.tanh %166 : vector<8x32xf32>
    %168 = arith.mulf %164, %117 : vector<8x32xf32>
    %169 = arith.mulf %163, %167 : vector<8x32xf32>
    %170 = arith.addf %168, %169 : vector<8x32xf32>
    %171 = math.tanh %170 : vector<8x32xf32>
    %172 = arith.mulf %165, %171 : vector<8x32xf32>
    %173 = arith.truncf %172 : vector<8x32xf32> to vector<8x32xbf16>
    %174 = arith.index_cast %c2_i32 : i32 to index
    %c0_57 = arith.constant 0 : index
    %c0_58 = arith.constant 0 : index
    %175 = vector.load %arg14[%174, %c0_57, %c0_58] : memref<8x8x32xbf16, #tpu.memory_space<vmem>>, vector<1x8x32xbf16>
    %176 = vector.shape_cast %175 : vector<1x8x32xbf16> to vector<8x32xbf16>
    %177 = vector.shape_cast %157 : vector<8x32xbf16> to vector<1x8x32xbf16>
    tpu.vector_store %arg14[%174, %c0_57, %c0_58], %177 {strides = array<i32>} : memref<8x8x32xbf16, #tpu.memory_space<vmem>>, vector<1x8x32xbf16>,
    %178 = arith.index_cast %129 : i32 to index
    %c0_59 = arith.constant 0 : index
    %c0_60 = arith.constant 0 : index
    %179 = vector.load %arg15[%178, %c0_59, %c0_60] : memref<8x8x32xbf16, #tpu.memory_space<vmem>>, vector<1x8x32xbf16>
    %180 = vector.shape_cast %179 : vector<1x8x32xbf16> to vector<8x32xbf16>
    %181 = vector.shape_cast %173 : vector<8x32xbf16> to vector<1x8x32xbf16>
    tpu.vector_store %arg15[%178, %c0_59, %c0_60], %181 {strides = array<i32>} : memref<8x8x32xbf16, #tpu.memory_space<vmem>>, vector<1x8x32xbf16>,
    %c3_i32 = arith.constant 3 : i32
    %c7_i32_61 = arith.constant 7 : i32
    %182 = arith.subi %c7_i32_61, %c3_i32 : i32
    %183 = arith.index_cast %c3_i32 : i32 to index
    %c0_62 = arith.constant 0 : index
    %c0_63 = arith.constant 0 : index
    %184 = vector.load %arg12[%183, %c0_62, %c0_63] : memref<8x8x128xbf16, #tpu.memory_space<vmem>>, vector<1x8x128xbf16>
    %185 = vector.shape_cast %184 : vector<1x8x128xbf16> to vector<8x128xbf16>
    %186 = arith.extf %185 : vector<8x128xbf16> to vector<8x128xf32>
    %cst_64 = arith.constant dense<0.000000e+00> : vector<8x128xf32>
    %187 = tpu.matmul %157, %19, %cst_64 {dimension_numbers = #tpu.dot_dimension_numbers<[1], [0], [0], [1], [0, 0, 1, 1], [], []>} : vector<8x32xbf16>, vector<32x128xbf16>, vector<8x128xf32> -> vector<8x128xf32>
    %188 = arith.addf %186, %187 : vector<8x128xf32>
    %189 = arith.index_cast %182 : i32 to index
    %c0_65 = arith.constant 0 : index
    %c0_66 = arith.constant 0 : index
    %190 = vector.load %arg13[%189, %c0_65, %c0_66] : memref<8x8x128xbf16, #tpu.memory_space<vmem>>, vector<1x8x128xbf16>
    %191 = vector.shape_cast %190 : vector<1x8x128xbf16> to vector<8x128xbf16>
    %192 = arith.extf %191 : vector<8x128xbf16> to vector<8x128xf32>
    %cst_67 = arith.constant dense<0.000000e+00> : vector<8x128xf32>
    %193 = tpu.matmul %173, %20, %cst_67 {dimension_numbers = #tpu.dot_dimension_numbers<[1], [0], [0], [1], [0, 0, 1, 1], [], []>} : vector<8x32xbf16>, vector<32x128xbf16>, vector<8x128xf32> -> vector<8x128xf32>
    %194 = arith.addf %192, %193 : vector<8x128xf32>
    %195 = arith.negf %188 : vector<8x128xf32>
    %196 = math.exp %195 : vector<8x128xf32>
    %cst_68 = arith.constant 1.000000e+00 : f32
    %197 = vector.broadcast %cst_68 : f32 to vector<8x128xf32>
    %198 = arith.addf %197, %196 : vector<8x128xf32>
    %199 = arith.divf %197, %198 : vector<8x128xf32>
    %200 = vector.extract_strided_slice %199 {offsets = [0, 0], sizes = [8, 32], strides = [1, 1]} : vector<8x128xf32> to vector<8x32xf32>
    %201 = vector.extract_strided_slice %199 {offsets = [0, 32], sizes = [8, 32], strides = [1, 1]} : vector<8x128xf32> to vector<8x32xf32>
    %202 = vector.extract_strided_slice %199 {offsets = [0, 96], sizes = [8, 32], strides = [1, 1]} : vector<8x128xf32> to vector<8x32xf32>
    %203 = vector.extract_strided_slice %188 {offsets = [0, 64], sizes = [8, 32], strides = [1, 1]} : vector<8x128xf32> to vector<8x32xf32>
    %204 = math.tanh %203 : vector<8x32xf32>
    %205 = arith.mulf %201, %154 : vector<8x32xf32>
    %206 = arith.mulf %200, %204 : vector<8x32xf32>
    %207 = arith.addf %205, %206 : vector<8x32xf32>
    %208 = math.tanh %207 : vector<8x32xf32>
    %209 = arith.mulf %202, %208 : vector<8x32xf32>
    %210 = arith.truncf %209 : vector<8x32xf32> to vector<8x32xbf16>
    %211 = arith.negf %194 : vector<8x128xf32>
    %212 = math.exp %211 : vector<8x128xf32>
    %cst_69 = arith.constant 1.000000e+00 : f32
    %213 = vector.broadcast %cst_69 : f32 to vector<8x128xf32>
    %214 = arith.addf %213, %212 : vector<8x128xf32>
    %215 = arith.divf %213, %214 : vector<8x128xf32>
    %216 = vector.extract_strided_slice %215 {offsets = [0, 0], sizes = [8, 32], strides = [1, 1]} : vector<8x128xf32> to vector<8x32xf32>
    %217 = vector.extract_strided_slice %215 {offsets = [0, 32], sizes = [8, 32], strides = [1, 1]} : vector<8x128xf32> to vector<8x32xf32>
    %218 = vector.extract_strided_slice %215 {offsets = [0, 96], sizes = [8, 32], strides = [1, 1]} : vector<8x128xf32> to vector<8x32xf32>
    %219 = vector.extract_strided_slice %194 {offsets = [0, 64], sizes = [8, 32], strides = [1, 1]} : vector<8x128xf32> to vector<8x32xf32>
    %220 = math.tanh %219 : vector<8x32xf32>
    %221 = arith.mulf %217, %170 : vector<8x32xf32>
    %222 = arith.mulf %216, %220 : vector<8x32xf32>
    %223 = arith.addf %221, %222 : vector<8x32xf32>
    %224 = math.tanh %223 : vector<8x32xf32>
    %225 = arith.mulf %218, %224 : vector<8x32xf32>
    %226 = arith.truncf %225 : vector<8x32xf32> to vector<8x32xbf16>
    %227 = arith.index_cast %c3_i32 : i32 to index
    %c0_70 = arith.constant 0 : index
    %c0_71 = arith.constant 0 : index
    %228 = vector.load %arg14[%227, %c0_70, %c0_71] : memref<8x8x32xbf16, #tpu.memory_space<vmem>>, vector<1x8x32xbf16>
    %229 = vector.shape_cast %228 : vector<1x8x32xbf16> to vector<8x32xbf16>
    %230 = vector.shape_cast %210 : vector<8x32xbf16> to vector<1x8x32xbf16>
    tpu.vector_store %arg14[%227, %c0_70, %c0_71], %230 {strides = array<i32>} : memref<8x8x32xbf16, #tpu.memory_space<vmem>>, vector<1x8x32xbf16>,
    %231 = arith.index_cast %182 : i32 to index
    %c0_72 = arith.constant 0 : index
    %c0_73 = arith.constant 0 : index
    %232 = vector.load %arg15[%231, %c0_72, %c0_73] : memref<8x8x32xbf16, #tpu.memory_space<vmem>>, vector<1x8x32xbf16>
    %233 = vector.shape_cast %232 : vector<1x8x32xbf16> to vector<8x32xbf16>
    %234 = vector.shape_cast %226 : vector<8x32xbf16> to vector<1x8x32xbf16>
    tpu.vector_store %arg15[%231, %c0_72, %c0_73], %234 {strides = array<i32>} : memref<8x8x32xbf16, #tpu.memory_space<vmem>>, vector<1x8x32xbf16>,
    %c4_i32 = arith.constant 4 : i32
    %c7_i32_74 = arith.constant 7 : i32
    %235 = arith.subi %c7_i32_74, %c4_i32 : i32
    %236 = arith.index_cast %c4_i32 : i32 to index
    %c0_75 = arith.constant 0 : index
    %c0_76 = arith.constant 0 : index
    %237 = vector.load %arg12[%236, %c0_75, %c0_76] : memref<8x8x128xbf16, #tpu.memory_space<vmem>>, vector<1x8x128xbf16>
    %238 = vector.shape_cast %237 : vector<1x8x128xbf16> to vector<8x128xbf16>
    %239 = arith.extf %238 : vector<8x128xbf16> to vector<8x128xf32>
    %cst_77 = arith.constant dense<0.000000e+00> : vector<8x128xf32>
    %240 = tpu.matmul %210, %19, %cst_77 {dimension_numbers = #tpu.dot_dimension_numbers<[1], [0], [0], [1], [0, 0, 1, 1], [], []>} : vector<8x32xbf16>, vector<32x128xbf16>, vector<8x128xf32> -> vector<8x128xf32>
    %241 = arith.addf %239, %240 : vector<8x128xf32>
    %242 = arith.index_cast %235 : i32 to index
    %c0_78 = arith.constant 0 : index
    %c0_79 = arith.constant 0 : index
    %243 = vector.load %arg13[%242, %c0_78, %c0_79] : memref<8x8x128xbf16, #tpu.memory_space<vmem>>, vector<1x8x128xbf16>
    %244 = vector.shape_cast %243 : vector<1x8x128xbf16> to vector<8x128xbf16>
    %245 = arith.extf %244 : vector<8x128xbf16> to vector<8x128xf32>
    %cst_80 = arith.constant dense<0.000000e+00> : vector<8x128xf32>
    %246 = tpu.matmul %226, %20, %cst_80 {dimension_numbers = #tpu.dot_dimension_numbers<[1], [0], [0], [1], [0, 0, 1, 1], [], []>} : vector<8x32xbf16>, vector<32x128xbf16>, vector<8x128xf32> -> vector<8x128xf32>
    %247 = arith.addf %245, %246 : vector<8x128xf32>
    %248 = arith.negf %241 : vector<8x128xf32>
    %249 = math.exp %248 : vector<8x128xf32>
    %cst_81 = arith.constant 1.000000e+00 : f32
    %250 = vector.broadcast %cst_81 : f32 to vector<8x128xf32>
    %251 = arith.addf %250, %249 : vector<8x128xf32>
    %252 = arith.divf %250, %251 : vector<8x128xf32>
    %253 = vector.extract_strided_slice %252 {offsets = [0, 0], sizes = [8, 32], strides = [1, 1]} : vector<8x128xf32> to vector<8x32xf32>
    %254 = vector.extract_strided_slice %252 {offsets = [0, 32], sizes = [8, 32], strides = [1, 1]} : vector<8x128xf32> to vector<8x32xf32>
    %255 = vector.extract_strided_slice %252 {offsets = [0, 96], sizes = [8, 32], strides = [1, 1]} : vector<8x128xf32> to vector<8x32xf32>
    %256 = vector.extract_strided_slice %241 {offsets = [0, 64], sizes = [8, 32], strides = [1, 1]} : vector<8x128xf32> to vector<8x32xf32>
    %257 = math.tanh %256 : vector<8x32xf32>
    %258 = arith.mulf %254, %207 : vector<8x32xf32>
    %259 = arith.mulf %253, %257 : vector<8x32xf32>
    %260 = arith.addf %258, %259 : vector<8x32xf32>
    %261 = math.tanh %260 : vector<8x32xf32>
    %262 = arith.mulf %255, %261 : vector<8x32xf32>
    %263 = arith.truncf %262 : vector<8x32xf32> to vector<8x32xbf16>
    %264 = arith.negf %247 : vector<8x128xf32>
    %265 = math.exp %264 : vector<8x128xf32>
    %cst_82 = arith.constant 1.000000e+00 : f32
    %266 = vector.broadcast %cst_82 : f32 to vector<8x128xf32>
    %267 = arith.addf %266, %265 : vector<8x128xf32>
    %268 = arith.divf %266, %267 : vector<8x128xf32>
    %269 = vector.extract_strided_slice %268 {offsets = [0, 0], sizes = [8, 32], strides = [1, 1]} : vector<8x128xf32> to vector<8x32xf32>
    %270 = vector.extract_strided_slice %268 {offsets = [0, 32], sizes = [8, 32], strides = [1, 1]} : vector<8x128xf32> to vector<8x32xf32>
    %271 = vector.extract_strided_slice %268 {offsets = [0, 96], sizes = [8, 32], strides = [1, 1]} : vector<8x128xf32> to vector<8x32xf32>
    %272 = vector.extract_strided_slice %247 {offsets = [0, 64], sizes = [8, 32], strides = [1, 1]} : vector<8x128xf32> to vector<8x32xf32>
    %273 = math.tanh %272 : vector<8x32xf32>
    %274 = arith.mulf %270, %223 : vector<8x32xf32>
    %275 = arith.mulf %269, %273 : vector<8x32xf32>
    %276 = arith.addf %274, %275 : vector<8x32xf32>
    %277 = math.tanh %276 : vector<8x32xf32>
    %278 = arith.mulf %271, %277 : vector<8x32xf32>
    %279 = arith.truncf %278 : vector<8x32xf32> to vector<8x32xbf16>
    %280 = arith.index_cast %c4_i32 : i32 to index
    %c0_83 = arith.constant 0 : index
    %c0_84 = arith.constant 0 : index
    %281 = vector.load %arg14[%280, %c0_83, %c0_84] : memref<8x8x32xbf16, #tpu.memory_space<vmem>>, vector<1x8x32xbf16>
    %282 = vector.shape_cast %281 : vector<1x8x32xbf16> to vector<8x32xbf16>
    %283 = vector.shape_cast %263 : vector<8x32xbf16> to vector<1x8x32xbf16>
    tpu.vector_store %arg14[%280, %c0_83, %c0_84], %283 {strides = array<i32>} : memref<8x8x32xbf16, #tpu.memory_space<vmem>>, vector<1x8x32xbf16>,
    %284 = arith.index_cast %235 : i32 to index
    %c0_85 = arith.constant 0 : index
    %c0_86 = arith.constant 0 : index
    %285 = vector.load %arg15[%284, %c0_85, %c0_86] : memref<8x8x32xbf16, #tpu.memory_space<vmem>>, vector<1x8x32xbf16>
    %286 = vector.shape_cast %285 : vector<1x8x32xbf16> to vector<8x32xbf16>
    %287 = vector.shape_cast %279 : vector<8x32xbf16> to vector<1x8x32xbf16>
    tpu.vector_store %arg15[%284, %c0_85, %c0_86], %287 {strides = array<i32>} : memref<8x8x32xbf16, #tpu.memory_space<vmem>>, vector<1x8x32xbf16>,
    %c5_i32 = arith.constant 5 : i32
    %c7_i32_87 = arith.constant 7 : i32
    %288 = arith.subi %c7_i32_87, %c5_i32 : i32
    %289 = arith.index_cast %c5_i32 : i32 to index
    %c0_88 = arith.constant 0 : index
    %c0_89 = arith.constant 0 : index
    %290 = vector.load %arg12[%289, %c0_88, %c0_89] : memref<8x8x128xbf16, #tpu.memory_space<vmem>>, vector<1x8x128xbf16>
    %291 = vector.shape_cast %290 : vector<1x8x128xbf16> to vector<8x128xbf16>
    %292 = arith.extf %291 : vector<8x128xbf16> to vector<8x128xf32>
    %cst_90 = arith.constant dense<0.000000e+00> : vector<8x128xf32>
    %293 = tpu.matmul %263, %19, %cst_90 {dimension_numbers = #tpu.dot_dimension_numbers<[1], [0], [0], [1], [0, 0, 1, 1], [], []>} : vector<8x32xbf16>, vector<32x128xbf16>, vector<8x128xf32> -> vector<8x128xf32>
    %294 = arith.addf %292, %293 : vector<8x128xf32>
    %295 = arith.index_cast %288 : i32 to index
    %c0_91 = arith.constant 0 : index
    %c0_92 = arith.constant 0 : index
    %296 = vector.load %arg13[%295, %c0_91, %c0_92] : memref<8x8x128xbf16, #tpu.memory_space<vmem>>, vector<1x8x128xbf16>
    %297 = vector.shape_cast %296 : vector<1x8x128xbf16> to vector<8x128xbf16>
    %298 = arith.extf %297 : vector<8x128xbf16> to vector<8x128xf32>
    %cst_93 = arith.constant dense<0.000000e+00> : vector<8x128xf32>
    %299 = tpu.matmul %279, %20, %cst_93 {dimension_numbers = #tpu.dot_dimension_numbers<[1], [0], [0], [1], [0, 0, 1, 1], [], []>} : vector<8x32xbf16>, vector<32x128xbf16>, vector<8x128xf32> -> vector<8x128xf32>
    %300 = arith.addf %298, %299 : vector<8x128xf32>
    %301 = arith.negf %294 : vector<8x128xf32>
    %302 = math.exp %301 : vector<8x128xf32>
    %cst_94 = arith.constant 1.000000e+00 : f32
    %303 = vector.broadcast %cst_94 : f32 to vector<8x128xf32>
    %304 = arith.addf %303, %302 : vector<8x128xf32>
    %305 = arith.divf %303, %304 : vector<8x128xf32>
    %306 = vector.extract_strided_slice %305 {offsets = [0, 0], sizes = [8, 32], strides = [1, 1]} : vector<8x128xf32> to vector<8x32xf32>
    %307 = vector.extract_strided_slice %305 {offsets = [0, 32], sizes = [8, 32], strides = [1, 1]} : vector<8x128xf32> to vector<8x32xf32>
    %308 = vector.extract_strided_slice %305 {offsets = [0, 96], sizes = [8, 32], strides = [1, 1]} : vector<8x128xf32> to vector<8x32xf32>
    %309 = vector.extract_strided_slice %294 {offsets = [0, 64], sizes = [8, 32], strides = [1, 1]} : vector<8x128xf32> to vector<8x32xf32>
    %310 = math.tanh %309 : vector<8x32xf32>
    %311 = arith.mulf %307, %260 : vector<8x32xf32>
    %312 = arith.mulf %306, %310 : vector<8x32xf32>
    %313 = arith.addf %311, %312 : vector<8x32xf32>
    %314 = math.tanh %313 : vector<8x32xf32>
    %315 = arith.mulf %308, %314 : vector<8x32xf32>
    %316 = arith.truncf %315 : vector<8x32xf32> to vector<8x32xbf16>
    %317 = arith.negf %300 : vector<8x128xf32>
    %318 = math.exp %317 : vector<8x128xf32>
    %cst_95 = arith.constant 1.000000e+00 : f32
    %319 = vector.broadcast %cst_95 : f32 to vector<8x128xf32>
    %320 = arith.addf %319, %318 : vector<8x128xf32>
    %321 = arith.divf %319, %320 : vector<8x128xf32>
    %322 = vector.extract_strided_slice %321 {offsets = [0, 0], sizes = [8, 32], strides = [1, 1]} : vector<8x128xf32> to vector<8x32xf32>
    %323 = vector.extract_strided_slice %321 {offsets = [0, 32], sizes = [8, 32], strides = [1, 1]} : vector<8x128xf32> to vector<8x32xf32>
    %324 = vector.extract_strided_slice %321 {offsets = [0, 96], sizes = [8, 32], strides = [1, 1]} : vector<8x128xf32> to vector<8x32xf32>
    %325 = vector.extract_strided_slice %300 {offsets = [0, 64], sizes = [8, 32], strides = [1, 1]} : vector<8x128xf32> to vector<8x32xf32>
    %326 = math.tanh %325 : vector<8x32xf32>
    %327 = arith.mulf %323, %276 : vector<8x32xf32>
    %328 = arith.mulf %322, %326 : vector<8x32xf32>
    %329 = arith.addf %327, %328 : vector<8x32xf32>
    %330 = math.tanh %329 : vector<8x32xf32>
    %331 = arith.mulf %324, %330 : vector<8x32xf32>
    %332 = arith.truncf %331 : vector<8x32xf32> to vector<8x32xbf16>
    %333 = arith.index_cast %c5_i32 : i32 to index
    %c0_96 = arith.constant 0 : index
    %c0_97 = arith.constant 0 : index
    %334 = vector.load %arg14[%333, %c0_96, %c0_97] : memref<8x8x32xbf16, #tpu.memory_space<vmem>>, vector<1x8x32xbf16>
    %335 = vector.shape_cast %334 : vector<1x8x32xbf16> to vector<8x32xbf16>
    %336 = vector.shape_cast %316 : vector<8x32xbf16> to vector<1x8x32xbf16>
    tpu.vector_store %arg14[%333, %c0_96, %c0_97], %336 {strides = array<i32>} : memref<8x8x32xbf16, #tpu.memory_space<vmem>>, vector<1x8x32xbf16>,
    %337 = arith.index_cast %288 : i32 to index
    %c0_98 = arith.constant 0 : index
    %c0_99 = arith.constant 0 : index
    %338 = vector.load %arg15[%337, %c0_98, %c0_99] : memref<8x8x32xbf16, #tpu.memory_space<vmem>>, vector<1x8x32xbf16>
    %339 = vector.shape_cast %338 : vector<1x8x32xbf16> to vector<8x32xbf16>
    %340 = vector.shape_cast %332 : vector<8x32xbf16> to vector<1x8x32xbf16>
    tpu.vector_store %arg15[%337, %c0_98, %c0_99], %340 {strides = array<i32>} : memref<8x8x32xbf16, #tpu.memory_space<vmem>>, vector<1x8x32xbf16>,
    %c6_i32 = arith.constant 6 : i32
    %c7_i32_100 = arith.constant 7 : i32
    %341 = arith.subi %c7_i32_100, %c6_i32 : i32
    %342 = arith.index_cast %c6_i32 : i32 to index
    %c0_101 = arith.constant 0 : index
    %c0_102 = arith.constant 0 : index
    %343 = vector.load %arg12[%342, %c0_101, %c0_102] : memref<8x8x128xbf16, #tpu.memory_space<vmem>>, vector<1x8x128xbf16>
    %344 = vector.shape_cast %343 : vector<1x8x128xbf16> to vector<8x128xbf16>
    %345 = arith.extf %344 : vector<8x128xbf16> to vector<8x128xf32>
    %cst_103 = arith.constant dense<0.000000e+00> : vector<8x128xf32>
    %346 = tpu.matmul %316, %19, %cst_103 {dimension_numbers = #tpu.dot_dimension_numbers<[1], [0], [0], [1], [0, 0, 1, 1], [], []>} : vector<8x32xbf16>, vector<32x128xbf16>, vector<8x128xf32> -> vector<8x128xf32>
    %347 = arith.addf %345, %346 : vector<8x128xf32>
    %348 = arith.index_cast %341 : i32 to index
    %c0_104 = arith.constant 0 : index
    %c0_105 = arith.constant 0 : index
    %349 = vector.load %arg13[%348, %c0_104, %c0_105] : memref<8x8x128xbf16, #tpu.memory_space<vmem>>, vector<1x8x128xbf16>
    %350 = vector.shape_cast %349 : vector<1x8x128xbf16> to vector<8x128xbf16>
    %351 = arith.extf %350 : vector<8x128xbf16> to vector<8x128xf32>
    %cst_106 = arith.constant dense<0.000000e+00> : vector<8x128xf32>
    %352 = tpu.matmul %332, %20, %cst_106 {dimension_numbers = #tpu.dot_dimension_numbers<[1], [0], [0], [1], [0, 0, 1, 1], [], []>} : vector<8x32xbf16>, vector<32x128xbf16>, vector<8x128xf32> -> vector<8x128xf32>
    %353 = arith.addf %351, %352 : vector<8x128xf32>
    %354 = arith.negf %347 : vector<8x128xf32>
    %355 = math.exp %354 : vector<8x128xf32>
    %cst_107 = arith.constant 1.000000e+00 : f32
    %356 = vector.broadcast %cst_107 : f32 to vector<8x128xf32>
    %357 = arith.addf %356, %355 : vector<8x128xf32>
    %358 = arith.divf %356, %357 : vector<8x128xf32>
    %359 = vector.extract_strided_slice %358 {offsets = [0, 0], sizes = [8, 32], strides = [1, 1]} : vector<8x128xf32> to vector<8x32xf32>
    %360 = vector.extract_strided_slice %358 {offsets = [0, 32], sizes = [8, 32], strides = [1, 1]} : vector<8x128xf32> to vector<8x32xf32>
    %361 = vector.extract_strided_slice %358 {offsets = [0, 96], sizes = [8, 32], strides = [1, 1]} : vector<8x128xf32> to vector<8x32xf32>
    %362 = vector.extract_strided_slice %347 {offsets = [0, 64], sizes = [8, 32], strides = [1, 1]} : vector<8x128xf32> to vector<8x32xf32>
    %363 = math.tanh %362 : vector<8x32xf32>
    %364 = arith.mulf %360, %313 : vector<8x32xf32>
    %365 = arith.mulf %359, %363 : vector<8x32xf32>
    %366 = arith.addf %364, %365 : vector<8x32xf32>
    %367 = math.tanh %366 : vector<8x32xf32>
    %368 = arith.mulf %361, %367 : vector<8x32xf32>
    %369 = arith.truncf %368 : vector<8x32xf32> to vector<8x32xbf16>
    %370 = arith.negf %353 : vector<8x128xf32>
    %371 = math.exp %370 : vector<8x128xf32>
    %cst_108 = arith.constant 1.000000e+00 : f32
    %372 = vector.broadcast %cst_108 : f32 to vector<8x128xf32>
    %373 = arith.addf %372, %371 : vector<8x128xf32>
    %374 = arith.divf %372, %373 : vector<8x128xf32>
    %375 = vector.extract_strided_slice %374 {offsets = [0, 0], sizes = [8, 32], strides = [1, 1]} : vector<8x128xf32> to vector<8x32xf32>
    %376 = vector.extract_strided_slice %374 {offsets = [0, 32], sizes = [8, 32], strides = [1, 1]} : vector<8x128xf32> to vector<8x32xf32>
    %377 = vector.extract_strided_slice %374 {offsets = [0, 96], sizes = [8, 32], strides = [1, 1]} : vector<8x128xf32> to vector<8x32xf32>
    %378 = vector.extract_strided_slice %353 {offsets = [0, 64], sizes = [8, 32], strides = [1, 1]} : vector<8x128xf32> to vector<8x32xf32>
    %379 = math.tanh %378 : vector<8x32xf32>
    %380 = arith.mulf %376, %329 : vector<8x32xf32>
    %381 = arith.mulf %375, %379 : vector<8x32xf32>
    %382 = arith.addf %380, %381 : vector<8x32xf32>
    %383 = math.tanh %382 : vector<8x32xf32>
    %384 = arith.mulf %377, %383 : vector<8x32xf32>
    %385 = arith.truncf %384 : vector<8x32xf32> to vector<8x32xbf16>
    %386 = arith.index_cast %c6_i32 : i32 to index
    %c0_109 = arith.constant 0 : index
    %c0_110 = arith.constant 0 : index
    %387 = vector.load %arg14[%386, %c0_109, %c0_110] : memref<8x8x32xbf16, #tpu.memory_space<vmem>>, vector<1x8x32xbf16>
    %388 = vector.shape_cast %387 : vector<1x8x32xbf16> to vector<8x32xbf16>
    %389 = vector.shape_cast %369 : vector<8x32xbf16> to vector<1x8x32xbf16>
    tpu.vector_store %arg14[%386, %c0_109, %c0_110], %389 {strides = array<i32>} : memref<8x8x32xbf16, #tpu.memory_space<vmem>>, vector<1x8x32xbf16>,
    %390 = arith.index_cast %341 : i32 to index
    %c0_111 = arith.constant 0 : index
    %c0_112 = arith.constant 0 : index
    %391 = vector.load %arg15[%390, %c0_111, %c0_112] : memref<8x8x32xbf16, #tpu.memory_space<vmem>>, vector<1x8x32xbf16>
    %392 = vector.shape_cast %391 : vector<1x8x32xbf16> to vector<8x32xbf16>
    %393 = vector.shape_cast %385 : vector<8x32xbf16> to vector<1x8x32xbf16>
    tpu.vector_store %arg15[%390, %c0_111, %c0_112], %393 {strides = array<i32>} : memref<8x8x32xbf16, #tpu.memory_space<vmem>>, vector<1x8x32xbf16>,
    %c7_i32_113 = arith.constant 7 : i32
    %c7_i32_114 = arith.constant 7 : i32
    %394 = arith.subi %c7_i32_114, %c7_i32_113 : i32
    %395 = arith.index_cast %c7_i32_113 : i32 to index
    %c0_115 = arith.constant 0 : index
    %c0_116 = arith.constant 0 : index
    %396 = vector.load %arg12[%395, %c0_115, %c0_116] : memref<8x8x128xbf16, #tpu.memory_space<vmem>>, vector<1x8x128xbf16>
    %397 = vector.shape_cast %396 : vector<1x8x128xbf16> to vector<8x128xbf16>
    %398 = arith.extf %397 : vector<8x128xbf16> to vector<8x128xf32>
    %cst_117 = arith.constant dense<0.000000e+00> : vector<8x128xf32>
    %399 = tpu.matmul %369, %19, %cst_117 {dimension_numbers = #tpu.dot_dimension_numbers<[1], [0], [0], [1], [0, 0, 1, 1], [], []>} : vector<8x32xbf16>, vector<32x128xbf16>, vector<8x128xf32> -> vector<8x128xf32>
    %400 = arith.addf %398, %399 : vector<8x128xf32>
    %401 = arith.index_cast %394 : i32 to index
    %c0_118 = arith.constant 0 : index
    %c0_119 = arith.constant 0 : index
    %402 = vector.load %arg13[%401, %c0_118, %c0_119] : memref<8x8x128xbf16, #tpu.memory_space<vmem>>, vector<1x8x128xbf16>
    %403 = vector.shape_cast %402 : vector<1x8x128xbf16> to vector<8x128xbf16>
    %404 = arith.extf %403 : vector<8x128xbf16> to vector<8x128xf32>
    %cst_120 = arith.constant dense<0.000000e+00> : vector<8x128xf32>
    %405 = tpu.matmul %385, %20, %cst_120 {dimension_numbers = #tpu.dot_dimension_numbers<[1], [0], [0], [1], [0, 0, 1, 1], [], []>} : vector<8x32xbf16>, vector<32x128xbf16>, vector<8x128xf32> -> vector<8x128xf32>
    %406 = arith.addf %404, %405 : vector<8x128xf32>
    %407 = arith.negf %400 : vector<8x128xf32>
    %408 = math.exp %407 : vector<8x128xf32>
    %cst_121 = arith.constant 1.000000e+00 : f32
    %409 = vector.broadcast %cst_121 : f32 to vector<8x128xf32>
    %410 = arith.addf %409, %408 : vector<8x128xf32>
    %411 = arith.divf %409, %410 : vector<8x128xf32>
    %412 = vector.extract_strided_slice %411 {offsets = [0, 0], sizes = [8, 32], strides = [1, 1]} : vector<8x128xf32> to vector<8x32xf32>
    %413 = vector.extract_strided_slice %411 {offsets = [0, 32], sizes = [8, 32], strides = [1, 1]} : vector<8x128xf32> to vector<8x32xf32>
    %414 = vector.extract_strided_slice %411 {offsets = [0, 96], sizes = [8, 32], strides = [1, 1]} : vector<8x128xf32> to vector<8x32xf32>
    %415 = vector.extract_strided_slice %400 {offsets = [0, 64], sizes = [8, 32], strides = [1, 1]} : vector<8x128xf32> to vector<8x32xf32>
    %416 = math.tanh %415 : vector<8x32xf32>
    %417 = arith.mulf %413, %366 : vector<8x32xf32>
    %418 = arith.mulf %412, %416 : vector<8x32xf32>
    %419 = arith.addf %417, %418 : vector<8x32xf32>
    %420 = math.tanh %419 : vector<8x32xf32>
    %421 = arith.mulf %414, %420 : vector<8x32xf32>
    %422 = arith.truncf %421 : vector<8x32xf32> to vector<8x32xbf16>
    %423 = arith.negf %406 : vector<8x128xf32>
    %424 = math.exp %423 : vector<8x128xf32>
    %cst_122 = arith.constant 1.000000e+00 : f32
    %425 = vector.broadcast %cst_122 : f32 to vector<8x128xf32>
    %426 = arith.addf %425, %424 : vector<8x128xf32>
    %427 = arith.divf %425, %426 : vector<8x128xf32>
    %428 = vector.extract_strided_slice %427 {offsets = [0, 0], sizes = [8, 32], strides = [1, 1]} : vector<8x128xf32> to vector<8x32xf32>
    %429 = vector.extract_strided_slice %427 {offsets = [0, 32], sizes = [8, 32], strides = [1, 1]} : vector<8x128xf32> to vector<8x32xf32>
    %430 = vector.extract_strided_slice %427 {offsets = [0, 96], sizes = [8, 32], strides = [1, 1]} : vector<8x128xf32> to vector<8x32xf32>
    %431 = vector.extract_strided_slice %406 {offsets = [0, 64], sizes = [8, 32], strides = [1, 1]} : vector<8x128xf32> to vector<8x32xf32>
    %432 = math.tanh %431 : vector<8x32xf32>
    %433 = arith.mulf %429, %382 : vector<8x32xf32>
    %434 = arith.mulf %428, %432 : vector<8x32xf32>
    %435 = arith.addf %433, %434 : vector<8x32xf32>
    %436 = math.tanh %435 : vector<8x32xf32>
    %437 = arith.mulf %430, %436 : vector<8x32xf32>
    %438 = arith.truncf %437 : vector<8x32xf32> to vector<8x32xbf16>
    %439 = arith.index_cast %c7_i32_113 : i32 to index
    %c0_123 = arith.constant 0 : index
    %c0_124 = arith.constant 0 : index
    %440 = vector.load %arg14[%439, %c0_123, %c0_124] : memref<8x8x32xbf16, #tpu.memory_space<vmem>>, vector<1x8x32xbf16>
    %441 = vector.shape_cast %440 : vector<1x8x32xbf16> to vector<8x32xbf16>
    %442 = vector.shape_cast %422 : vector<8x32xbf16> to vector<1x8x32xbf16>
    tpu.vector_store %arg14[%439, %c0_123, %c0_124], %442 {strides = array<i32>} : memref<8x8x32xbf16, #tpu.memory_space<vmem>>, vector<1x8x32xbf16>,
    %443 = arith.index_cast %394 : i32 to index
    %c0_125 = arith.constant 0 : index
    %c0_126 = arith.constant 0 : index
    %444 = vector.load %arg15[%443, %c0_125, %c0_126] : memref<8x8x32xbf16, #tpu.memory_space<vmem>>, vector<1x8x32xbf16>
    %445 = vector.shape_cast %444 : vector<1x8x32xbf16> to vector<8x32xbf16>
    %446 = vector.shape_cast %438 : vector<8x32xbf16> to vector<1x8x32xbf16>
    tpu.vector_store %arg15[%443, %c0_125, %c0_126], %446 {strides = array<i32>} : memref<8x8x32xbf16, #tpu.memory_space<vmem>>, vector<1x8x32xbf16>,
    %c8_i32 = arith.constant 8 : i32
    %c0_127 = arith.constant 0 : index
    %c0_128 = arith.constant 0 : index
    %c0_129 = arith.constant 0 : index
    %447 = vector.load %arg14[%c0_127, %c0_128, %c0_129] : memref<8x8x32xbf16, #tpu.memory_space<vmem>>, vector<8x8x32xbf16>
    %448 = vector.shape_cast %447 : vector<8x8x32xbf16> to vector<64x32xbf16>
    %c0_130 = arith.constant 0 : index
    %c0_131 = arith.constant 0 : index
    %449 = vector.load %arg8[%c0_130, %c0_131] : memref<32x16xbf16, #tpu.memory_space<vmem>>, vector<32x16xbf16>
    %cst_132 = arith.constant dense<0.000000e+00> : vector<64x16xf32>
    %450 = tpu.matmul %448, %449, %cst_132 {dimension_numbers = #tpu.dot_dimension_numbers<[1], [0], [0], [1], [0, 0, 1, 1], [], []>} : vector<64x32xbf16>, vector<32x16xbf16>, vector<64x16xf32> -> vector<64x16xf32>
    %c0_133 = arith.constant 0 : index
    %c0_134 = arith.constant 0 : index
    %c0_135 = arith.constant 0 : index
    %451 = vector.load %arg15[%c0_133, %c0_134, %c0_135] : memref<8x8x32xbf16, #tpu.memory_space<vmem>>, vector<8x8x32xbf16>
    %452 = vector.shape_cast %451 : vector<8x8x32xbf16> to vector<64x32xbf16>
    %c0_136 = arith.constant 0 : index
    %c0_137 = arith.constant 0 : index
    %453 = vector.load %arg9[%c0_136, %c0_137] : memref<32x16xbf16, #tpu.memory_space<vmem>>, vector<32x16xbf16>
    %cst_138 = arith.constant dense<0.000000e+00> : vector<64x16xf32>
    %454 = tpu.matmul %452, %453, %cst_138 {dimension_numbers = #tpu.dot_dimension_numbers<[1], [0], [0], [1], [0, 0, 1, 1], [], []>} : vector<64x32xbf16>, vector<32x16xbf16>, vector<64x16xf32> -> vector<64x16xf32>
    %455 = arith.addf %450, %454 : vector<64x16xf32>
    %c0_139 = arith.constant 0 : index
    %c0_140 = arith.constant 0 : index
    %456 = vector.load %arg10[%c0_139, %c0_140] : memref<1x16xf32, #tpu.memory_space<vmem>>, vector<1x16xf32>
    %457 = vector.broadcast %456 : vector<1x16xf32> to vector<64x16xf32>
    %458 = arith.addf %455, %457 : vector<64x16xf32>
    %459 = vector.shape_cast %458 : vector<64x16xf32> to vector<8x8x16xf32>
    %c0_141 = arith.constant 0 : index
    %c0_142 = arith.constant 0 : index
    %c0_143 = arith.constant 0 : index
    %460 = vector.load %arg11[%c0_141, %c0_142, %c0_143] : memref<8x8x16xf32, #tpu.memory_space<vmem>>, vector<8x8x16xf32>
    tpu.vector_store %arg11[%c0_141, %c0_142, %c0_143], %459 {strides = array<i32>} : memref<8x8x16xf32, #tpu.memory_space<vmem>>, vector<8x8x16xf32>,
    return
  }
  func.func @transform_0(%arg0: i32) -> (i32, i32, i32) {
    %c0_i32 = arith.constant 0 : i32
    %c0_i32_0 = arith.constant 0 : i32
    %c0_i32_1 = arith.constant 0 : i32
    return %c0_i32, %arg0, %c0_i32_0 : i32, i32, i32
  }
  func.func @transform_1(%arg0: i32) -> (i32, i32) {
    %c0_i32 = arith.constant 0 : i32
    %c0_i32_0 = arith.constant 0 : i32
    %c0_i32_1 = arith.constant 0 : i32
    return %c0_i32, %c0_i32_0 : i32, i32
  }
  func.func @transform_2(%arg0: i32) -> (i32, i32) {
    %c0_i32 = arith.constant 0 : i32
    %c0_i32_0 = arith.constant 0 : i32
    %c0_i32_1 = arith.constant 0 : i32
    return %c0_i32, %c0_i32_0 : i32, i32
  }
  func.func @transform_3(%arg0: i32) -> (i32, i32) {
    %c0_i32 = arith.constant 0 : i32
    %c0_i32_0 = arith.constant 0 : i32
    %c0_i32_1 = arith.constant 0 : i32
    return %c0_i32, %c0_i32_0 : i32, i32
  }
  func.func @transform_4(%arg0: i32) -> (i32, i32) {
    %c0_i32 = arith.constant 0 : i32
    %c0_i32_0 = arith.constant 0 : i32
    %c0_i32_1 = arith.constant 0 : i32
    return %c0_i32, %c0_i32_0 : i32, i32
  }
  func.func @transform_5(%arg0: i32) -> (i32, i32) {
    %c0_i32 = arith.constant 0 : i32
    %c0_i32_0 = arith.constant 0 : i32
    %c0_i32_1 = arith.constant 0 : i32
    return %c0_i32, %c0_i32_0 : i32, i32
  }
  func.func @transform_6(%arg0: i32) -> (i32, i32) {
    %c0_i32 = arith.constant 0 : i32
    %c0_i32_0 = arith.constant 0 : i32
    %c0_i32_1 = arith.constant 0 : i32
    return %c0_i32, %c0_i32_0 : i32, i32
  }
  func.func @transform_7(%arg0: i32) -> (i32, i32) {
    %c0_i32 = arith.constant 0 : i32
    %c0_i32_0 = arith.constant 0 : i32
    %c0_i32_1 = arith.constant 0 : i32
    return %c0_i32, %c0_i32_0 : i32, i32
  }
  func.func @transform_8(%arg0: i32) -> (i32, i32) {
    %c0_i32 = arith.constant 0 : i32
    %c0_i32_0 = arith.constant 0 : i32
    %c0_i32_1 = arith.constant 0 : i32
    return %c0_i32, %c0_i32_0 : i32, i32
  }
  func.func @transform_9(%arg0: i32) -> (i32, i32) {
    %c0_i32 = arith.constant 0 : i32
    %c0_i32_0 = arith.constant 0 : i32
    %c0_i32_1 = arith.constant 0 : i32
    return %c0_i32, %c0_i32_0 : i32, i32
  }
  func.func @transform_10(%arg0: i32) -> (i32, i32, i32) {
    %c0_i32 = arith.constant 0 : i32
    %c0_i32_0 = arith.constant 0 : i32
    %c0_i32_1 = arith.constant 0 : i32
    return %c0_i32, %arg0, %c0_i32_0 : i32, i32, i32
  }
}

module attributes {stable_mosaic.version = 11 : i64} {
  func.func @bilstm_kernel(%arg0: i32, %arg1: memref<8x8x32xf32, #tpu.memory_space<vmem>>, %arg2: memref<32x128xbf16, #tpu.memory_space<vmem>>, %arg3: memref<32x128xbf16, #tpu.memory_space<vmem>>, %arg4: memref<1x128xf32, #tpu.memory_space<vmem>>, %arg5: memref<1x128xf32, #tpu.memory_space<vmem>>, %arg6: memref<32x128xbf16, #tpu.memory_space<vmem>>, %arg7: memref<32x128xbf16, #tpu.memory_space<vmem>>, %arg8: memref<32x16xbf16, #tpu.memory_space<vmem>>, %arg9: memref<32x16xbf16, #tpu.memory_space<vmem>>, %arg10: memref<1x16xf32, #tpu.memory_space<vmem>>, %arg11: memref<8x8x16xf32, #tpu.memory_space<vmem>>, %arg12: memref<8x8x128xbf16, #tpu.memory_space<vmem>>, %arg13: memref<8x8x128xbf16, #tpu.memory_space<vmem>>, %arg14: memref<8x8x32xbf16, #tpu.memory_space<vmem>>, %arg15: memref<8x8x32xbf16, #tpu.memory_space<vmem>>) attributes {dimension_semantics = [#tpu.dimension_semantics<parallel>], iteration_bounds = array<i64: 1>, scalar_prefetch = 0 : i64, scratch_operands = 4 : i64, tpu.core_type = #tpu.core_type<tc>, window_params = [{transform_indices = @transform_0, window_bounds = array<i64: 8, 8, 32>}, {pipeline_mode = #tpu.pipeline_mode<synchronous>, transform_indices = @transform_1, window_bounds = array<i64: 32, 128>}, {pipeline_mode = #tpu.pipeline_mode<synchronous>, transform_indices = @transform_2, window_bounds = array<i64: 32, 128>}, {pipeline_mode = #tpu.pipeline_mode<synchronous>, transform_indices = @transform_3, window_bounds = array<i64: 1, 128>}, {pipeline_mode = #tpu.pipeline_mode<synchronous>, transform_indices = @transform_4, window_bounds = array<i64: 1, 128>}, {pipeline_mode = #tpu.pipeline_mode<synchronous>, transform_indices = @transform_5, window_bounds = array<i64: 32, 128>}, {pipeline_mode = #tpu.pipeline_mode<synchronous>, transform_indices = @transform_6, window_bounds = array<i64: 32, 128>}, {pipeline_mode = #tpu.pipeline_mode<synchronous>, transform_indices = @transform_7, window_bounds = array<i64: 32, 16>}, {pipeline_mode = #tpu.pipeline_mode<synchronous>, transform_indices = @transform_8, window_bounds = array<i64: 32, 16>}, {pipeline_mode = #tpu.pipeline_mode<synchronous>, transform_indices = @transform_9, window_bounds = array<i64: 1, 16>}, {transform_indices = @transform_10, window_bounds = array<i64: 8, 8, 16>}]} {
    %c0 = arith.constant 0 : index
    %c0_0 = arith.constant 0 : index
    %c0_1 = arith.constant 0 : index
    %0 = vector.load %arg1[%c0, %c0_0, %c0_1] : memref<8x8x32xf32, #tpu.memory_space<vmem>>, vector<8x8x32xf32>
    %1 = vector.shape_cast %0 : vector<8x8x32xf32> to vector<64x32xf32>
    %2 = arith.truncf %1 : vector<64x32xf32> to vector<64x32xbf16>
    %c0_2 = arith.constant 0 : index
    %c0_3 = arith.constant 0 : index
    %3 = vector.load %arg2[%c0_2, %c0_3] : memref<32x128xbf16, #tpu.memory_space<vmem>>, vector<32x128xbf16>
    %cst = arith.constant dense<0.000000e+00> : vector<64x128xf32>
    %4 = tpu.matmul %2, %3, %cst {dimension_numbers = #tpu.dot_dimension_numbers<[1], [0], [0], [1], [0, 0, 1, 1], [], []>} : vector<64x32xbf16>, vector<32x128xbf16>, vector<64x128xf32> -> vector<64x128xf32>
    %c0_4 = arith.constant 0 : index
    %c0_5 = arith.constant 0 : index
    %5 = vector.load %arg4[%c0_4, %c0_5] : memref<1x128xf32, #tpu.memory_space<vmem>>, vector<1x128xf32>
    %6 = vector.broadcast %5 : vector<1x128xf32> to vector<64x128xf32>
    %7 = arith.addf %4, %6 : vector<64x128xf32>
    %8 = vector.shape_cast %7 : vector<64x128xf32> to vector<8x8x128xf32>
    %9 = arith.truncf %8 : vector<8x8x128xf32> to vector<8x8x128xbf16>
    %c0_6 = arith.constant 0 : index
    %c0_7 = arith.constant 0 : index
    %c0_8 = arith.constant 0 : index
    %10 = vector.load %arg12[%c0_6, %c0_7, %c0_8] : memref<8x8x128xbf16, #tpu.memory_space<vmem>>, vector<8x8x128xbf16>
    tpu.vector_store %arg12[%c0_6, %c0_7, %c0_8], %9 {strides = array<i32>} : memref<8x8x128xbf16, #tpu.memory_space<vmem>>, vector<8x8x128xbf16>,
    %c0_9 = arith.constant 0 : index
    %c0_10 = arith.constant 0 : index
    %11 = vector.load %arg3[%c0_9, %c0_10] : memref<32x128xbf16, #tpu.memory_space<vmem>>, vector<32x128xbf16>
    %cst_11 = arith.constant dense<0.000000e+00> : vector<64x128xf32>
    %12 = tpu.matmul %2, %11, %cst_11 {dimension_numbers = #tpu.dot_dimension_numbers<[1], [0], [0], [1], [0, 0, 1, 1], [], []>} : vector<64x32xbf16>, vector<32x128xbf16>, vector<64x128xf32> -> vector<64x128xf32>
    %c0_12 = arith.constant 0 : index
    %c0_13 = arith.constant 0 : index
    %13 = vector.load %arg5[%c0_12, %c0_13] : memref<1x128xf32, #tpu.memory_space<vmem>>, vector<1x128xf32>
    %14 = vector.broadcast %13 : vector<1x128xf32> to vector<64x128xf32>
    %15 = arith.addf %12, %14 : vector<64x128xf32>
    %16 = vector.shape_cast %15 : vector<64x128xf32> to vector<8x8x128xf32>
    %17 = arith.truncf %16 : vector<8x8x128xf32> to vector<8x8x128xbf16>
    %c0_14 = arith.constant 0 : index
    %c0_15 = arith.constant 0 : index
    %c0_16 = arith.constant 0 : index
    %18 = vector.load %arg13[%c0_14, %c0_15, %c0_16] : memref<8x8x128xbf16, #tpu.memory_space<vmem>>, vector<8x8x128xbf16>
    tpu.vector_store %arg13[%c0_14, %c0_15, %c0_16], %17 {strides = array<i32>} : memref<8x8x128xbf16, #tpu.memory_space<vmem>>, vector<8x8x128xbf16>,
    %c0_17 = arith.constant 0 : index
    %c0_18 = arith.constant 0 : index
    %19 = vector.load %arg6[%c0_17, %c0_18] : memref<32x128xbf16, #tpu.memory_space<vmem>>, vector<32x128xbf16>
    %c0_19 = arith.constant 0 : index
    %c0_20 = arith.constant 0 : index
    %20 = vector.load %arg7[%c0_19, %c0_20] : memref<32x128xbf16, #tpu.memory_space<vmem>>, vector<32x128xbf16>
    %cst_21 = arith.constant 0.000000e+00 : bf16
    %21 = vector.broadcast %cst_21 : bf16 to vector<8x32xbf16>
    %cst_22 = arith.constant 0.000000e+00 : f32
    %22 = vector.broadcast %cst_22 : f32 to vector<8x32xf32>
    %c0_i32 = arith.constant 0 : i32
    %c7_i32 = arith.constant 7 : i32
    %23 = arith.subi %c7_i32, %c0_i32 : i32
    %24 = arith.index_cast %c0_i32 : i32 to index
    %c0_23 = arith.constant 0 : index
    %c0_24 = arith.constant 0 : index
    %25 = vector.load %arg12[%24, %c0_23, %c0_24] : memref<8x8x128xbf16, #tpu.memory_space<vmem>>, vector<1x8x128xbf16>
    %26 = vector.shape_cast %25 : vector<1x8x128xbf16> to vector<8x128xbf16>
    %27 = arith.extf %26 : vector<8x128xbf16> to vector<8x128xf32>
    %cst_25 = arith.constant dense<0.000000e+00> : vector<8x128xf32>
    %28 = tpu.matmul %21, %19, %cst_25 {dimension_numbers = #tpu.dot_dimension_numbers<[1], [0], [0], [1], [0, 0, 1, 1], [], []>} : vector<8x32xbf16>, vector<32x128xbf16>, vector<8x128xf32> -> vector<8x128xf32>
    %29 = arith.addf %27, %28 : vector<8x128xf32>
    %30 = arith.index_cast %23 : i32 to index
    %c0_26 = arith.constant 0 : index
    %c0_27 = arith.constant 0 : index
    %31 = vector.load %arg13[%30, %c0_26, %c0_27] : memref<8x8x128xbf16, #tpu.memory_space<vmem>>, vector<1x8x128xbf16>
    %32 = vector.shape_cast %31 : vector<1x8x128xbf16> to vector<8x128xbf16>
    %33 = arith.extf %32 : vector<8x128xbf16> to vector<8x128xf32>
    %cst_28 = arith.constant dense<0.000000e+00> : vector<8x128xf32>
    %34 = tpu.matmul %21, %20, %cst_28 {dimension_numbers = #tpu.dot_dimension_numbers<[1], [0], [0], [1], [0, 0, 1, 1], [], []>} : vector<8x32xbf16>, vector<32x128xbf16>, vector<8x128xf32> -> vector<8x128xf32>
    %35 = arith.addf %33, %34 : vector<8x128xf32>
    %36 = arith.negf %29 : vector<8x128xf32>
    %37 = math.exp %36 : vector<8x128xf32>
    %cst_29 = arith.constant 1.000000e+00 : f32
    %38 = vector.broadcast %cst_29 : f32 to vector<8x128xf32>
    %39 = arith.addf %38, %37 : vector<8x128xf32>
    %40 = arith.divf %38, %39 : vector<8x128xf32>
    %41 = vector.extract_strided_slice %40 {offsets = [0, 0], sizes = [8, 32], strides = [1, 1]} : vector<8x128xf32> to vector<8x32xf32>
    %42 = vector.extract_strided_slice %40 {offsets = [0, 32], sizes = [8, 32], strides = [1, 1]} : vector<8x128xf32> to vector<8x32xf32>
    %43 = vector.extract_strided_slice %40 {offsets = [0, 96], sizes = [8, 32], strides = [1, 1]} : vector<8x128xf32> to vector<8x32xf32>
    %44 = vector.extract_strided_slice %29 {offsets = [0, 64], sizes = [8, 32], strides = [1, 1]} : vector<8x128xf32> to vector<8x32xf32>
    %45 = math.tanh %44 : vector<8x32xf32>
    %46 = arith.mulf %42, %22 : vector<8x32xf32>
    %47 = arith.mulf %41, %45 : vector<8x32xf32>
    %48 = arith.addf %46, %47 : vector<8x32xf32>
    %49 = math.tanh %48 : vector<8x32xf32>
    %50 = arith.mulf %43, %49 : vector<8x32xf32>
    %51 = arith.truncf %50 : vector<8x32xf32> to vector<8x32xbf16>
    %52 = arith.negf %35 : vector<8x128xf32>
    %53 = math.exp %52 : vector<8x128xf32>
    %cst_30 = arith.constant 1.000000e+00 : f32
    %54 = vector.broadcast %cst_30 : f32 to vector<8x128xf32>
    %55 = arith.addf %54, %53 : vector<8x128xf32>
    %56 = arith.divf %54, %55 : vector<8x128xf32>
    %57 = vector.extract_strided_slice %56 {offsets = [0, 0], sizes = [8, 32], strides = [1, 1]} : vector<8x128xf32> to vector<8x32xf32>
    %58 = vector.extract_strided_slice %56 {offsets = [0, 32], sizes = [8, 32], strides = [1, 1]} : vector<8x128xf32> to vector<8x32xf32>
    %59 = vector.extract_strided_slice %56 {offsets = [0, 96], sizes = [8, 32], strides = [1, 1]} : vector<8x128xf32> to vector<8x32xf32>
    %60 = vector.extract_strided_slice %35 {offsets = [0, 64], sizes = [8, 32], strides = [1, 1]} : vector<8x128xf32> to vector<8x32xf32>
    %61 = math.tanh %60 : vector<8x32xf32>
    %62 = arith.mulf %58, %22 : vector<8x32xf32>
    %63 = arith.mulf %57, %61 : vector<8x32xf32>
    %64 = arith.addf %62, %63 : vector<8x32xf32>
    %65 = math.tanh %64 : vector<8x32xf32>
    %66 = arith.mulf %59, %65 : vector<8x32xf32>
    %67 = arith.truncf %66 : vector<8x32xf32> to vector<8x32xbf16>
    %68 = arith.index_cast %c0_i32 : i32 to index
    %c0_31 = arith.constant 0 : index
    %c0_32 = arith.constant 0 : index
    %69 = vector.load %arg14[%68, %c0_31, %c0_32] : memref<8x8x32xbf16, #tpu.memory_space<vmem>>, vector<1x8x32xbf16>
    %70 = vector.shape_cast %69 : vector<1x8x32xbf16> to vector<8x32xbf16>
    %71 = vector.shape_cast %51 : vector<8x32xbf16> to vector<1x8x32xbf16>
    tpu.vector_store %arg14[%68, %c0_31, %c0_32], %71 {strides = array<i32>} : memref<8x8x32xbf16, #tpu.memory_space<vmem>>, vector<1x8x32xbf16>,
    %72 = arith.index_cast %23 : i32 to index
    %c0_33 = arith.constant 0 : index
    %c0_34 = arith.constant 0 : index
    %73 = vector.load %arg15[%72, %c0_33, %c0_34] : memref<8x8x32xbf16, #tpu.memory_space<vmem>>, vector<1x8x32xbf16>
    %74 = vector.shape_cast %73 : vector<1x8x32xbf16> to vector<8x32xbf16>
    %75 = vector.shape_cast %67 : vector<8x32xbf16> to vector<1x8x32xbf16>
    tpu.vector_store %arg15[%72, %c0_33, %c0_34], %75 {strides = array<i32>} : memref<8x8x32xbf16, #tpu.memory_space<vmem>>, vector<1x8x32xbf16>,
    %c1_i32 = arith.constant 1 : i32
    %c7_i32_35 = arith.constant 7 : i32
    %76 = arith.subi %c7_i32_35, %c1_i32 : i32
    %77 = arith.index_cast %c1_i32 : i32 to index
    %c0_36 = arith.constant 0 : index
    %c0_37 = arith.constant 0 : index
    %78 = vector.load %arg12[%77, %c0_36, %c0_37] : memref<8x8x128xbf16, #tpu.memory_space<vmem>>, vector<1x8x128xbf16>
    %79 = vector.shape_cast %78 : vector<1x8x128xbf16> to vector<8x128xbf16>
    %80 = arith.extf %79 : vector<8x128xbf16> to vector<8x128xf32>
    %cst_38 = arith.constant dense<0.000000e+00> : vector<8x128xf32>
    %81 = tpu.matmul %51, %19, %cst_38 {dimension_numbers = #tpu.dot_dimension_numbers<[1], [0], [0], [1], [0, 0, 1, 1], [], []>} : vector<8x32xbf16>, vector<32x128xbf16>, vector<8x128xf32> -> vector<8x128xf32>
    %82 = arith.addf %80, %81 : vector<8x128xf32>
    %83 = arith.index_cast %76 : i32 to index
    %c0_39 = arith.constant 0 : index
    %c0_40 = arith.constant 0 : index
    %84 = vector.load %arg13[%83, %c0_39, %c0_40] : memref<8x8x128xbf16, #tpu.memory_space<vmem>>, vector<1x8x128xbf16>
    %85 = vector.shape_cast %84 : vector<1x8x128xbf16> to vector<8x128xbf16>
    %86 = arith.extf %85 : vector<8x128xbf16> to vector<8x128xf32>
    %cst_41 = arith.constant dense<0.000000e+00> : vector<8x128xf32>
    %87 = tpu.matmul %67, %20, %cst_41 {dimension_numbers = #tpu.dot_dimension_numbers<[1], [0], [0], [1], [0, 0, 1, 1], [], []>} : vector<8x32xbf16>, vector<32x128xbf16>, vector<8x128xf32> -> vector<8x128xf32>
    %88 = arith.addf %86, %87 : vector<8x128xf32>
    %89 = arith.negf %82 : vector<8x128xf32>
    %90 = math.exp %89 : vector<8x128xf32>
    %cst_42 = arith.constant 1.000000e+00 : f32
    %91 = vector.broadcast %cst_42 : f32 to vector<8x128xf32>
    %92 = arith.addf %91, %90 : vector<8x128xf32>
    %93 = arith.divf %91, %92 : vector<8x128xf32>
    %94 = vector.extract_strided_slice %93 {offsets = [0, 0], sizes = [8, 32], strides = [1, 1]} : vector<8x128xf32> to vector<8x32xf32>
    %95 = vector.extract_strided_slice %93 {offsets = [0, 32], sizes = [8, 32], strides = [1, 1]} : vector<8x128xf32> to vector<8x32xf32>
    %96 = vector.extract_strided_slice %93 {offsets = [0, 96], sizes = [8, 32], strides = [1, 1]} : vector<8x128xf32> to vector<8x32xf32>
    %97 = vector.extract_strided_slice %82 {offsets = [0, 64], sizes = [8, 32], strides = [1, 1]} : vector<8x128xf32> to vector<8x32xf32>
    %98 = math.tanh %97 : vector<8x32xf32>
    %99 = arith.mulf %95, %48 : vector<8x32xf32>
    %100 = arith.mulf %94, %98 : vector<8x32xf32>
    %101 = arith.addf %99, %100 : vector<8x32xf32>
    %102 = math.tanh %101 : vector<8x32xf32>
    %103 = arith.mulf %96, %102 : vector<8x32xf32>
    %104 = arith.truncf %103 : vector<8x32xf32> to vector<8x32xbf16>
    %105 = arith.negf %88 : vector<8x128xf32>
    %106 = math.exp %105 : vector<8x128xf32>
    %cst_43 = arith.constant 1.000000e+00 : f32
    %107 = vector.broadcast %cst_43 : f32 to vector<8x128xf32>
    %108 = arith.addf %107, %106 : vector<8x128xf32>
    %109 = arith.divf %107, %108 : vector<8x128xf32>
    %110 = vector.extract_strided_slice %109 {offsets = [0, 0], sizes = [8, 32], strides = [1, 1]} : vector<8x128xf32> to vector<8x32xf32>
    %111 = vector.extract_strided_slice %109 {offsets = [0, 32], sizes = [8, 32], strides = [1, 1]} : vector<8x128xf32> to vector<8x32xf32>
    %112 = vector.extract_strided_slice %109 {offsets = [0, 96], sizes = [8, 32], strides = [1, 1]} : vector<8x128xf32> to vector<8x32xf32>
    %113 = vector.extract_strided_slice %88 {offsets = [0, 64], sizes = [8, 32], strides = [1, 1]} : vector<8x128xf32> to vector<8x32xf32>
    %114 = math.tanh %113 : vector<8x32xf32>
    %115 = arith.mulf %111, %64 : vector<8x32xf32>
    %116 = arith.mulf %110, %114 : vector<8x32xf32>
    %117 = arith.addf %115, %116 : vector<8x32xf32>
    %118 = math.tanh %117 : vector<8x32xf32>
    %119 = arith.mulf %112, %118 : vector<8x32xf32>
    %120 = arith.truncf %119 : vector<8x32xf32> to vector<8x32xbf16>
    %121 = arith.index_cast %c1_i32 : i32 to index
    %c0_44 = arith.constant 0 : index
    %c0_45 = arith.constant 0 : index
    %122 = vector.load %arg14[%121, %c0_44, %c0_45] : memref<8x8x32xbf16, #tpu.memory_space<vmem>>, vector<1x8x32xbf16>
    %123 = vector.shape_cast %122 : vector<1x8x32xbf16> to vector<8x32xbf16>
    %124 = vector.shape_cast %104 : vector<8x32xbf16> to vector<1x8x32xbf16>
    tpu.vector_store %arg14[%121, %c0_44, %c0_45], %124 {strides = array<i32>} : memref<8x8x32xbf16, #tpu.memory_space<vmem>>, vector<1x8x32xbf16>,
    %125 = arith.index_cast %76 : i32 to index
    %c0_46 = arith.constant 0 : index
    %c0_47 = arith.constant 0 : index
    %126 = vector.load %arg15[%125, %c0_46, %c0_47] : memref<8x8x32xbf16, #tpu.memory_space<vmem>>, vector<1x8x32xbf16>
    %127 = vector.shape_cast %126 : vector<1x8x32xbf16> to vector<8x32xbf16>
    %128 = vector.shape_cast %120 : vector<8x32xbf16> to vector<1x8x32xbf16>
    tpu.vector_store %arg15[%125, %c0_46, %c0_47], %128 {strides = array<i32>} : memref<8x8x32xbf16, #tpu.memory_space<vmem>>, vector<1x8x32xbf16>,
    %c2_i32 = arith.constant 2 : i32
    %c7_i32_48 = arith.constant 7 : i32
    %129 = arith.subi %c7_i32_48, %c2_i32 : i32
    %130 = arith.index_cast %c2_i32 : i32 to index
    %c0_49 = arith.constant 0 : index
    %c0_50 = arith.constant 0 : index
    %131 = vector.load %arg12[%130, %c0_49, %c0_50] : memref<8x8x128xbf16, #tpu.memory_space<vmem>>, vector<1x8x128xbf16>
    %132 = vector.shape_cast %131 : vector<1x8x128xbf16> to vector<8x128xbf16>
    %133 = arith.extf %132 : vector<8x128xbf16> to vector<8x128xf32>
    %cst_51 = arith.constant dense<0.000000e+00> : vector<8x128xf32>
    %134 = tpu.matmul %104, %19, %cst_51 {dimension_numbers = #tpu.dot_dimension_numbers<[1], [0], [0], [1], [0, 0, 1, 1], [], []>} : vector<8x32xbf16>, vector<32x128xbf16>, vector<8x128xf32> -> vector<8x128xf32>
    %135 = arith.addf %133, %134 : vector<8x128xf32>
    %136 = arith.index_cast %129 : i32 to index
    %c0_52 = arith.constant 0 : index
    %c0_53 = arith.constant 0 : index
    %137 = vector.load %arg13[%136, %c0_52, %c0_53] : memref<8x8x128xbf16, #tpu.memory_space<vmem>>, vector<1x8x128xbf16>
    %138 = vector.shape_cast %137 : vector<1x8x128xbf16> to vector<8x128xbf16>
    %139 = arith.extf %138 : vector<8x128xbf16> to vector<8x128xf32>
    %cst_54 = arith.constant dense<0.000000e+00> : vector<8x128xf32>
    %140 = tpu.matmul %120, %20, %cst_54 {dimension_numbers = #tpu.dot_dimension_numbers<[1], [0], [0], [1], [0, 0, 1, 1], [], []>} : vector<8x32xbf16>, vector<32x128xbf16>, vector<8x128xf32> -> vector<8x128xf32>
    %141 = arith.addf %139, %140 : vector<8x128xf32>
    %142 = arith.negf %135 : vector<8x128xf32>
    %143 = math.exp %142 : vector<8x128xf32>
    %cst_55 = arith.constant 1.000000e+00 : f32
    %144 = vector.broadcast %cst_55 : f32 to vector<8x128xf32>
    %145 = arith.addf %144, %143 : vector<8x128xf32>
    %146 = arith.divf %144, %145 : vector<8x128xf32>
    %147 = vector.extract_strided_slice %146 {offsets = [0, 0], sizes = [8, 32], strides = [1, 1]} : vector<8x128xf32> to vector<8x32xf32>
    %148 = vector.extract_strided_slice %146 {offsets = [0, 32], sizes = [8, 32], strides = [1, 1]} : vector<8x128xf32> to vector<8x32xf32>
    %149 = vector.extract_strided_slice %146 {offsets = [0, 96], sizes = [8, 32], strides = [1, 1]} : vector<8x128xf32> to vector<8x32xf32>
    %150 = vector.extract_strided_slice %135 {offsets = [0, 64], sizes = [8, 32], strides = [1, 1]} : vector<8x128xf32> to vector<8x32xf32>
    %151 = math.tanh %150 : vector<8x32xf32>
    %152 = arith.mulf %148, %101 : vector<8x32xf32>
    %153 = arith.mulf %147, %151 : vector<8x32xf32>
    %154 = arith.addf %152, %153 : vector<8x32xf32>
    %155 = math.tanh %154 : vector<8x32xf32>
    %156 = arith.mulf %149, %155 : vector<8x32xf32>
    %157 = arith.truncf %156 : vector<8x32xf32> to vector<8x32xbf16>
    %158 = arith.negf %141 : vector<8x128xf32>
    %159 = math.exp %158 : vector<8x128xf32>
    %cst_56 = arith.constant 1.000000e+00 : f32
    %160 = vector.broadcast %cst_56 : f32 to vector<8x128xf32>
    %161 = arith.addf %160, %159 : vector<8x128xf32>
    %162 = arith.divf %160, %161 : vector<8x128xf32>
    %163 = vector.extract_strided_slice %162 {offsets = [0, 0], sizes = [8, 32], strides = [1, 1]} : vector<8x128xf32> to vector<8x32xf32>
    %164 = vector.extract_strided_slice %162 {offsets = [0, 32], sizes = [8, 32], strides = [1, 1]} : vector<8x128xf32> to vector<8x32xf32>
    %165 = vector.extract_strided_slice %162 {offsets = [0, 96], sizes = [8, 32], strides = [1, 1]} : vector<8x128xf32> to vector<8x32xf32>
    %166 = vector.extract_strided_slice %141 {offsets = [0, 64], sizes = [8, 32], strides = [1, 1]} : vector<8x128xf32> to vector<8x32xf32>
    %167 = math.tanh %166 : vector<8x32xf32>
    %168 = arith.mulf %164, %117 : vector<8x32xf32>
    %169 = arith.mulf %163, %167 : vector<8x32xf32>
    %170 = arith.addf %168, %169 : vector<8x32xf32>
    %171 = math.tanh %170 : vector<8x32xf32>
    %172 = arith.mulf %165, %171 : vector<8x32xf32>
    %173 = arith.truncf %172 : vector<8x32xf32> to vector<8x32xbf16>
    %174 = arith.index_cast %c2_i32 : i32 to index
    %c0_57 = arith.constant 0 : index
    %c0_58 = arith.constant 0 : index
    %175 = vector.load %arg14[%174, %c0_57, %c0_58] : memref<8x8x32xbf16, #tpu.memory_space<vmem>>, vector<1x8x32xbf16>
    %176 = vector.shape_cast %175 : vector<1x8x32xbf16> to vector<8x32xbf16>
    %177 = vector.shape_cast %157 : vector<8x32xbf16> to vector<1x8x32xbf16>
    tpu.vector_store %arg14[%174, %c0_57, %c0_58], %177 {strides = array<i32>} : memref<8x8x32xbf16, #tpu.memory_space<vmem>>, vector<1x8x32xbf16>,
    %178 = arith.index_cast %129 : i32 to index
    %c0_59 = arith.constant 0 : index
    %c0_60 = arith.constant 0 : index
    %179 = vector.load %arg15[%178, %c0_59, %c0_60] : memref<8x8x32xbf16, #tpu.memory_space<vmem>>, vector<1x8x32xbf16>
    %180 = vector.shape_cast %179 : vector<1x8x32xbf16> to vector<8x32xbf16>
    %181 = vector.shape_cast %173 : vector<8x32xbf16> to vector<1x8x32xbf16>
    tpu.vector_store %arg15[%178, %c0_59, %c0_60], %181 {strides = array<i32>} : memref<8x8x32xbf16, #tpu.memory_space<vmem>>, vector<1x8x32xbf16>,
    %c3_i32 = arith.constant 3 : i32
    %c7_i32_61 = arith.constant 7 : i32
    %182 = arith.subi %c7_i32_61, %c3_i32 : i32
    %183 = arith.index_cast %c3_i32 : i32 to index
    %c0_62 = arith.constant 0 : index
    %c0_63 = arith.constant 0 : index
    %184 = vector.load %arg12[%183, %c0_62, %c0_63] : memref<8x8x128xbf16, #tpu.memory_space<vmem>>, vector<1x8x128xbf16>
    %185 = vector.shape_cast %184 : vector<1x8x128xbf16> to vector<8x128xbf16>
    %186 = arith.extf %185 : vector<8x128xbf16> to vector<8x128xf32>
    %cst_64 = arith.constant dense<0.000000e+00> : vector<8x128xf32>
    %187 = tpu.matmul %157, %19, %cst_64 {dimension_numbers = #tpu.dot_dimension_numbers<[1], [0], [0], [1], [0, 0, 1, 1], [], []>} : vector<8x32xbf16>, vector<32x128xbf16>, vector<8x128xf32> -> vector<8x128xf32>
    %188 = arith.addf %186, %187 : vector<8x128xf32>
    %189 = arith.index_cast %182 : i32 to index
    %c0_65 = arith.constant 0 : index
    %c0_66 = arith.constant 0 : index
    %190 = vector.load %arg13[%189, %c0_65, %c0_66] : memref<8x8x128xbf16, #tpu.memory_space<vmem>>, vector<1x8x128xbf16>
    %191 = vector.shape_cast %190 : vector<1x8x128xbf16> to vector<8x128xbf16>
    %192 = arith.extf %191 : vector<8x128xbf16> to vector<8x128xf32>
    %cst_67 = arith.constant dense<0.000000e+00> : vector<8x128xf32>
    %193 = tpu.matmul %173, %20, %cst_67 {dimension_numbers = #tpu.dot_dimension_numbers<[1], [0], [0], [1], [0, 0, 1, 1], [], []>} : vector<8x32xbf16>, vector<32x128xbf16>, vector<8x128xf32> -> vector<8x128xf32>
    %194 = arith.addf %192, %193 : vector<8x128xf32>
    %195 = arith.negf %188 : vector<8x128xf32>
    %196 = math.exp %195 : vector<8x128xf32>
    %cst_68 = arith.constant 1.000000e+00 : f32
    %197 = vector.broadcast %cst_68 : f32 to vector<8x128xf32>
    %198 = arith.addf %197, %196 : vector<8x128xf32>
    %199 = arith.divf %197, %198 : vector<8x128xf32>
    %200 = vector.extract_strided_slice %199 {offsets = [0, 0], sizes = [8, 32], strides = [1, 1]} : vector<8x128xf32> to vector<8x32xf32>
    %201 = vector.extract_strided_slice %199 {offsets = [0, 32], sizes = [8, 32], strides = [1, 1]} : vector<8x128xf32> to vector<8x32xf32>
    %202 = vector.extract_strided_slice %199 {offsets = [0, 96], sizes = [8, 32], strides = [1, 1]} : vector<8x128xf32> to vector<8x32xf32>
    %203 = vector.extract_strided_slice %188 {offsets = [0, 64], sizes = [8, 32], strides = [1, 1]} : vector<8x128xf32> to vector<8x32xf32>
    %204 = math.tanh %203 : vector<8x32xf32>
    %205 = arith.mulf %201, %154 : vector<8x32xf32>
    %206 = arith.mulf %200, %204 : vector<8x32xf32>
    %207 = arith.addf %205, %206 : vector<8x32xf32>
    %208 = math.tanh %207 : vector<8x32xf32>
    %209 = arith.mulf %202, %208 : vector<8x32xf32>
    %210 = arith.truncf %209 : vector<8x32xf32> to vector<8x32xbf16>
    %211 = arith.negf %194 : vector<8x128xf32>
    %212 = math.exp %211 : vector<8x128xf32>
    %cst_69 = arith.constant 1.000000e+00 : f32
    %213 = vector.broadcast %cst_69 : f32 to vector<8x128xf32>
    %214 = arith.addf %213, %212 : vector<8x128xf32>
    %215 = arith.divf %213, %214 : vector<8x128xf32>
    %216 = vector.extract_strided_slice %215 {offsets = [0, 0], sizes = [8, 32], strides = [1, 1]} : vector<8x128xf32> to vector<8x32xf32>
    %217 = vector.extract_strided_slice %215 {offsets = [0, 32], sizes = [8, 32], strides = [1, 1]} : vector<8x128xf32> to vector<8x32xf32>
    %218 = vector.extract_strided_slice %215 {offsets = [0, 96], sizes = [8, 32], strides = [1, 1]} : vector<8x128xf32> to vector<8x32xf32>
    %219 = vector.extract_strided_slice %194 {offsets = [0, 64], sizes = [8, 32], strides = [1, 1]} : vector<8x128xf32> to vector<8x32xf32>
    %220 = math.tanh %219 : vector<8x32xf32>
    %221 = arith.mulf %217, %170 : vector<8x32xf32>
    %222 = arith.mulf %216, %220 : vector<8x32xf32>
    %223 = arith.addf %221, %222 : vector<8x32xf32>
    %224 = math.tanh %223 : vector<8x32xf32>
    %225 = arith.mulf %218, %224 : vector<8x32xf32>
    %226 = arith.truncf %225 : vector<8x32xf32> to vector<8x32xbf16>
    %227 = arith.index_cast %c3_i32 : i32 to index
    %c0_70 = arith.constant 0 : index
    %c0_71 = arith.constant 0 : index
    %228 = vector.load %arg14[%227, %c0_70, %c0_71] : memref<8x8x32xbf16, #tpu.memory_space<vmem>>, vector<1x8x32xbf16>
    %229 = vector.shape_cast %228 : vector<1x8x32xbf16> to vector<8x32xbf16>
    %230 = vector.shape_cast %210 : vector<8x32xbf16> to vector<1x8x32xbf16>
    tpu.vector_store %arg14[%227, %c0_70, %c0_71], %230 {strides = array<i32>} : memref<8x8x32xbf16, #tpu.memory_space<vmem>>, vector<1x8x32xbf16>,
    %231 = arith.index_cast %182 : i32 to index
    %c0_72 = arith.constant 0 : index
    %c0_73 = arith.constant 0 : index
    %232 = vector.load %arg15[%231, %c0_72, %c0_73] : memref<8x8x32xbf16, #tpu.memory_space<vmem>>, vector<1x8x32xbf16>
    %233 = vector.shape_cast %232 : vector<1x8x32xbf16> to vector<8x32xbf16>
    %234 = vector.shape_cast %226 : vector<8x32xbf16> to vector<1x8x32xbf16>
    tpu.vector_store %arg15[%231, %c0_72, %c0_73], %234 {strides = array<i32>} : memref<8x8x32xbf16, #tpu.memory_space<vmem>>, vector<1x8x32xbf16>,
    %c4_i32 = arith.constant 4 : i32
    %c7_i32_74 = arith.constant 7 : i32
    %235 = arith.subi %c7_i32_74, %c4_i32 : i32
    %236 = arith.index_cast %c4_i32 : i32 to index
    %c0_75 = arith.constant 0 : index
    %c0_76 = arith.constant 0 : index
    %237 = vector.load %arg12[%236, %c0_75, %c0_76] : memref<8x8x128xbf16, #tpu.memory_space<vmem>>, vector<1x8x128xbf16>
    %238 = vector.shape_cast %237 : vector<1x8x128xbf16> to vector<8x128xbf16>
    %239 = arith.extf %238 : vector<8x128xbf16> to vector<8x128xf32>
    %cst_77 = arith.constant dense<0.000000e+00> : vector<8x128xf32>
    %240 = tpu.matmul %210, %19, %cst_77 {dimension_numbers = #tpu.dot_dimension_numbers<[1], [0], [0], [1], [0, 0, 1, 1], [], []>} : vector<8x32xbf16>, vector<32x128xbf16>, vector<8x128xf32> -> vector<8x128xf32>
    %241 = arith.addf %239, %240 : vector<8x128xf32>
    %242 = arith.index_cast %235 : i32 to index
    %c0_78 = arith.constant 0 : index
    %c0_79 = arith.constant 0 : index
    %243 = vector.load %arg13[%242, %c0_78, %c0_79] : memref<8x8x128xbf16, #tpu.memory_space<vmem>>, vector<1x8x128xbf16>
    %244 = vector.shape_cast %243 : vector<1x8x128xbf16> to vector<8x128xbf16>
    %245 = arith.extf %244 : vector<8x128xbf16> to vector<8x128xf32>
    %cst_80 = arith.constant dense<0.000000e+00> : vector<8x128xf32>
    %246 = tpu.matmul %226, %20, %cst_80 {dimension_numbers = #tpu.dot_dimension_numbers<[1], [0], [0], [1], [0, 0, 1, 1], [], []>} : vector<8x32xbf16>, vector<32x128xbf16>, vector<8x128xf32> -> vector<8x128xf32>
    %247 = arith.addf %245, %246 : vector<8x128xf32>
    %248 = arith.negf %241 : vector<8x128xf32>
    %249 = math.exp %248 : vector<8x128xf32>
    %cst_81 = arith.constant 1.000000e+00 : f32
    %250 = vector.broadcast %cst_81 : f32 to vector<8x128xf32>
    %251 = arith.addf %250, %249 : vector<8x128xf32>
    %252 = arith.divf %250, %251 : vector<8x128xf32>
    %253 = vector.extract_strided_slice %252 {offsets = [0, 0], sizes = [8, 32], strides = [1, 1]} : vector<8x128xf32> to vector<8x32xf32>
    %254 = vector.extract_strided_slice %252 {offsets = [0, 32], sizes = [8, 32], strides = [1, 1]} : vector<8x128xf32> to vector<8x32xf32>
    %255 = vector.extract_strided_slice %252 {offsets = [0, 96], sizes = [8, 32], strides = [1, 1]} : vector<8x128xf32> to vector<8x32xf32>
    %256 = vector.extract_strided_slice %241 {offsets = [0, 64], sizes = [8, 32], strides = [1, 1]} : vector<8x128xf32> to vector<8x32xf32>
    %257 = math.tanh %256 : vector<8x32xf32>
    %258 = arith.mulf %254, %207 : vector<8x32xf32>
    %259 = arith.mulf %253, %257 : vector<8x32xf32>
    %260 = arith.addf %258, %259 : vector<8x32xf32>
    %261 = math.tanh %260 : vector<8x32xf32>
    %262 = arith.mulf %255, %261 : vector<8x32xf32>
    %263 = arith.truncf %262 : vector<8x32xf32> to vector<8x32xbf16>
    %264 = arith.negf %247 : vector<8x128xf32>
    %265 = math.exp %264 : vector<8x128xf32>
    %cst_82 = arith.constant 1.000000e+00 : f32
    %266 = vector.broadcast %cst_82 : f32 to vector<8x128xf32>
    %267 = arith.addf %266, %265 : vector<8x128xf32>
    %268 = arith.divf %266, %267 : vector<8x128xf32>
    %269 = vector.extract_strided_slice %268 {offsets = [0, 0], sizes = [8, 32], strides = [1, 1]} : vector<8x128xf32> to vector<8x32xf32>
    %270 = vector.extract_strided_slice %268 {offsets = [0, 32], sizes = [8, 32], strides = [1, 1]} : vector<8x128xf32> to vector<8x32xf32>
    %271 = vector.extract_strided_slice %268 {offsets = [0, 96], sizes = [8, 32], strides = [1, 1]} : vector<8x128xf32> to vector<8x32xf32>
    %272 = vector.extract_strided_slice %247 {offsets = [0, 64], sizes = [8, 32], strides = [1, 1]} : vector<8x128xf32> to vector<8x32xf32>
    %273 = math.tanh %272 : vector<8x32xf32>
    %274 = arith.mulf %270, %223 : vector<8x32xf32>
    %275 = arith.mulf %269, %273 : vector<8x32xf32>
    %276 = arith.addf %274, %275 : vector<8x32xf32>
    %277 = math.tanh %276 : vector<8x32xf32>
    %278 = arith.mulf %271, %277 : vector<8x32xf32>
    %279 = arith.truncf %278 : vector<8x32xf32> to vector<8x32xbf16>
    %280 = arith.index_cast %c4_i32 : i32 to index
    %c0_83 = arith.constant 0 : index
    %c0_84 = arith.constant 0 : index
    %281 = vector.load %arg14[%280, %c0_83, %c0_84] : memref<8x8x32xbf16, #tpu.memory_space<vmem>>, vector<1x8x32xbf16>
    %282 = vector.shape_cast %281 : vector<1x8x32xbf16> to vector<8x32xbf16>
    %283 = vector.shape_cast %263 : vector<8x32xbf16> to vector<1x8x32xbf16>
    tpu.vector_store %arg14[%280, %c0_83, %c0_84], %283 {strides = array<i32>} : memref<8x8x32xbf16, #tpu.memory_space<vmem>>, vector<1x8x32xbf16>,
    %284 = arith.index_cast %235 : i32 to index
    %c0_85 = arith.constant 0 : index
    %c0_86 = arith.constant 0 : index
    %285 = vector.load %arg15[%284, %c0_85, %c0_86] : memref<8x8x32xbf16, #tpu.memory_space<vmem>>, vector<1x8x32xbf16>
    %286 = vector.shape_cast %285 : vector<1x8x32xbf16> to vector<8x32xbf16>
    %287 = vector.shape_cast %279 : vector<8x32xbf16> to vector<1x8x32xbf16>
    tpu.vector_store %arg15[%284, %c0_85, %c0_86], %287 {strides = array<i32>} : memref<8x8x32xbf16, #tpu.memory_space<vmem>>, vector<1x8x32xbf16>,
    %c5_i32 = arith.constant 5 : i32
    %c7_i32_87 = arith.constant 7 : i32
    %288 = arith.subi %c7_i32_87, %c5_i32 : i32
    %289 = arith.index_cast %c5_i32 : i32 to index
    %c0_88 = arith.constant 0 : index
    %c0_89 = arith.constant 0 : index
    %290 = vector.load %arg12[%289, %c0_88, %c0_89] : memref<8x8x128xbf16, #tpu.memory_space<vmem>>, vector<1x8x128xbf16>
    %291 = vector.shape_cast %290 : vector<1x8x128xbf16> to vector<8x128xbf16>
    %292 = arith.extf %291 : vector<8x128xbf16> to vector<8x128xf32>
    %cst_90 = arith.constant dense<0.000000e+00> : vector<8x128xf32>
    %293 = tpu.matmul %263, %19, %cst_90 {dimension_numbers = #tpu.dot_dimension_numbers<[1], [0], [0], [1], [0, 0, 1, 1], [], []>} : vector<8x32xbf16>, vector<32x128xbf16>, vector<8x128xf32> -> vector<8x128xf32>
    %294 = arith.addf %292, %293 : vector<8x128xf32>
    %295 = arith.index_cast %288 : i32 to index
    %c0_91 = arith.constant 0 : index
    %c0_92 = arith.constant 0 : index
    %296 = vector.load %arg13[%295, %c0_91, %c0_92] : memref<8x8x128xbf16, #tpu.memory_space<vmem>>, vector<1x8x128xbf16>
    %297 = vector.shape_cast %296 : vector<1x8x128xbf16> to vector<8x128xbf16>
    %298 = arith.extf %297 : vector<8x128xbf16> to vector<8x128xf32>
    %cst_93 = arith.constant dense<0.000000e+00> : vector<8x128xf32>
    %299 = tpu.matmul %279, %20, %cst_93 {dimension_numbers = #tpu.dot_dimension_numbers<[1], [0], [0], [1], [0, 0, 1, 1], [], []>} : vector<8x32xbf16>, vector<32x128xbf16>, vector<8x128xf32> -> vector<8x128xf32>
    %300 = arith.addf %298, %299 : vector<8x128xf32>
    %301 = arith.negf %294 : vector<8x128xf32>
    %302 = math.exp %301 : vector<8x128xf32>
    %cst_94 = arith.constant 1.000000e+00 : f32
    %303 = vector.broadcast %cst_94 : f32 to vector<8x128xf32>
    %304 = arith.addf %303, %302 : vector<8x128xf32>
    %305 = arith.divf %303, %304 : vector<8x128xf32>
    %306 = vector.extract_strided_slice %305 {offsets = [0, 0], sizes = [8, 32], strides = [1, 1]} : vector<8x128xf32> to vector<8x32xf32>
    %307 = vector.extract_strided_slice %305 {offsets = [0, 32], sizes = [8, 32], strides = [1, 1]} : vector<8x128xf32> to vector<8x32xf32>
    %308 = vector.extract_strided_slice %305 {offsets = [0, 96], sizes = [8, 32], strides = [1, 1]} : vector<8x128xf32> to vector<8x32xf32>
    %309 = vector.extract_strided_slice %294 {offsets = [0, 64], sizes = [8, 32], strides = [1, 1]} : vector<8x128xf32> to vector<8x32xf32>
    %310 = math.tanh %309 : vector<8x32xf32>
    %311 = arith.mulf %307, %260 : vector<8x32xf32>
    %312 = arith.mulf %306, %310 : vector<8x32xf32>
    %313 = arith.addf %311, %312 : vector<8x32xf32>
    %314 = math.tanh %313 : vector<8x32xf32>
    %315 = arith.mulf %308, %314 : vector<8x32xf32>
    %316 = arith.truncf %315 : vector<8x32xf32> to vector<8x32xbf16>
    %317 = arith.negf %300 : vector<8x128xf32>
    %318 = math.exp %317 : vector<8x128xf32>
    %cst_95 = arith.constant 1.000000e+00 : f32
    %319 = vector.broadcast %cst_95 : f32 to vector<8x128xf32>
    %320 = arith.addf %319, %318 : vector<8x128xf32>
    %321 = arith.divf %319, %320 : vector<8x128xf32>
    %322 = vector.extract_strided_slice %321 {offsets = [0, 0], sizes = [8, 32], strides = [1, 1]} : vector<8x128xf32> to vector<8x32xf32>
    %323 = vector.extract_strided_slice %321 {offsets = [0, 32], sizes = [8, 32], strides = [1, 1]} : vector<8x128xf32> to vector<8x32xf32>
    %324 = vector.extract_strided_slice %321 {offsets = [0, 96], sizes = [8, 32], strides = [1, 1]} : vector<8x128xf32> to vector<8x32xf32>
    %325 = vector.extract_strided_slice %300 {offsets = [0, 64], sizes = [8, 32], strides = [1, 1]} : vector<8x128xf32> to vector<8x32xf32>
    %326 = math.tanh %325 : vector<8x32xf32>
    %327 = arith.mulf %323, %276 : vector<8x32xf32>
    %328 = arith.mulf %322, %326 : vector<8x32xf32>
    %329 = arith.addf %327, %328 : vector<8x32xf32>
    %330 = math.tanh %329 : vector<8x32xf32>
    %331 = arith.mulf %324, %330 : vector<8x32xf32>
    %332 = arith.truncf %331 : vector<8x32xf32> to vector<8x32xbf16>
    %333 = arith.index_cast %c5_i32 : i32 to index
    %c0_96 = arith.constant 0 : index
    %c0_97 = arith.constant 0 : index
    %334 = vector.load %arg14[%333, %c0_96, %c0_97] : memref<8x8x32xbf16, #tpu.memory_space<vmem>>, vector<1x8x32xbf16>
    %335 = vector.shape_cast %334 : vector<1x8x32xbf16> to vector<8x32xbf16>
    %336 = vector.shape_cast %316 : vector<8x32xbf16> to vector<1x8x32xbf16>
    tpu.vector_store %arg14[%333, %c0_96, %c0_97], %336 {strides = array<i32>} : memref<8x8x32xbf16, #tpu.memory_space<vmem>>, vector<1x8x32xbf16>,
    %337 = arith.index_cast %288 : i32 to index
    %c0_98 = arith.constant 0 : index
    %c0_99 = arith.constant 0 : index
    %338 = vector.load %arg15[%337, %c0_98, %c0_99] : memref<8x8x32xbf16, #tpu.memory_space<vmem>>, vector<1x8x32xbf16>
    %339 = vector.shape_cast %338 : vector<1x8x32xbf16> to vector<8x32xbf16>
    %340 = vector.shape_cast %332 : vector<8x32xbf16> to vector<1x8x32xbf16>
    tpu.vector_store %arg15[%337, %c0_98, %c0_99], %340 {strides = array<i32>} : memref<8x8x32xbf16, #tpu.memory_space<vmem>>, vector<1x8x32xbf16>,
    %c6_i32 = arith.constant 6 : i32
    %c7_i32_100 = arith.constant 7 : i32
    %341 = arith.subi %c7_i32_100, %c6_i32 : i32
    %342 = arith.index_cast %c6_i32 : i32 to index
    %c0_101 = arith.constant 0 : index
    %c0_102 = arith.constant 0 : index
    %343 = vector.load %arg12[%342, %c0_101, %c0_102] : memref<8x8x128xbf16, #tpu.memory_space<vmem>>, vector<1x8x128xbf16>
    %344 = vector.shape_cast %343 : vector<1x8x128xbf16> to vector<8x128xbf16>
    %345 = arith.extf %344 : vector<8x128xbf16> to vector<8x128xf32>
    %cst_103 = arith.constant dense<0.000000e+00> : vector<8x128xf32>
    %346 = tpu.matmul %316, %19, %cst_103 {dimension_numbers = #tpu.dot_dimension_numbers<[1], [0], [0], [1], [0, 0, 1, 1], [], []>} : vector<8x32xbf16>, vector<32x128xbf16>, vector<8x128xf32> -> vector<8x128xf32>
    %347 = arith.addf %345, %346 : vector<8x128xf32>
    %348 = arith.index_cast %341 : i32 to index
    %c0_104 = arith.constant 0 : index
    %c0_105 = arith.constant 0 : index
    %349 = vector.load %arg13[%348, %c0_104, %c0_105] : memref<8x8x128xbf16, #tpu.memory_space<vmem>>, vector<1x8x128xbf16>
    %350 = vector.shape_cast %349 : vector<1x8x128xbf16> to vector<8x128xbf16>
    %351 = arith.extf %350 : vector<8x128xbf16> to vector<8x128xf32>
    %cst_106 = arith.constant dense<0.000000e+00> : vector<8x128xf32>
    %352 = tpu.matmul %332, %20, %cst_106 {dimension_numbers = #tpu.dot_dimension_numbers<[1], [0], [0], [1], [0, 0, 1, 1], [], []>} : vector<8x32xbf16>, vector<32x128xbf16>, vector<8x128xf32> -> vector<8x128xf32>
    %353 = arith.addf %351, %352 : vector<8x128xf32>
    %354 = arith.negf %347 : vector<8x128xf32>
    %355 = math.exp %354 : vector<8x128xf32>
    %cst_107 = arith.constant 1.000000e+00 : f32
    %356 = vector.broadcast %cst_107 : f32 to vector<8x128xf32>
    %357 = arith.addf %356, %355 : vector<8x128xf32>
    %358 = arith.divf %356, %357 : vector<8x128xf32>
    %359 = vector.extract_strided_slice %358 {offsets = [0, 0], sizes = [8, 32], strides = [1, 1]} : vector<8x128xf32> to vector<8x32xf32>
    %360 = vector.extract_strided_slice %358 {offsets = [0, 32], sizes = [8, 32], strides = [1, 1]} : vector<8x128xf32> to vector<8x32xf32>
    %361 = vector.extract_strided_slice %358 {offsets = [0, 96], sizes = [8, 32], strides = [1, 1]} : vector<8x128xf32> to vector<8x32xf32>
    %362 = vector.extract_strided_slice %347 {offsets = [0, 64], sizes = [8, 32], strides = [1, 1]} : vector<8x128xf32> to vector<8x32xf32>
    %363 = math.tanh %362 : vector<8x32xf32>
    %364 = arith.mulf %360, %313 : vector<8x32xf32>
    %365 = arith.mulf %359, %363 : vector<8x32xf32>
    %366 = arith.addf %364, %365 : vector<8x32xf32>
    %367 = math.tanh %366 : vector<8x32xf32>
    %368 = arith.mulf %361, %367 : vector<8x32xf32>
    %369 = arith.truncf %368 : vector<8x32xf32> to vector<8x32xbf16>
    %370 = arith.negf %353 : vector<8x128xf32>
    %371 = math.exp %370 : vector<8x128xf32>
    %cst_108 = arith.constant 1.000000e+00 : f32
    %372 = vector.broadcast %cst_108 : f32 to vector<8x128xf32>
    %373 = arith.addf %372, %371 : vector<8x128xf32>
    %374 = arith.divf %372, %373 : vector<8x128xf32>
    %375 = vector.extract_strided_slice %374 {offsets = [0, 0], sizes = [8, 32], strides = [1, 1]} : vector<8x128xf32> to vector<8x32xf32>
    %376 = vector.extract_strided_slice %374 {offsets = [0, 32], sizes = [8, 32], strides = [1, 1]} : vector<8x128xf32> to vector<8x32xf32>
    %377 = vector.extract_strided_slice %374 {offsets = [0, 96], sizes = [8, 32], strides = [1, 1]} : vector<8x128xf32> to vector<8x32xf32>
    %378 = vector.extract_strided_slice %353 {offsets = [0, 64], sizes = [8, 32], strides = [1, 1]} : vector<8x128xf32> to vector<8x32xf32>
    %379 = math.tanh %378 : vector<8x32xf32>
    %380 = arith.mulf %376, %329 : vector<8x32xf32>
    %381 = arith.mulf %375, %379 : vector<8x32xf32>
    %382 = arith.addf %380, %381 : vector<8x32xf32>
    %383 = math.tanh %382 : vector<8x32xf32>
    %384 = arith.mulf %377, %383 : vector<8x32xf32>
    %385 = arith.truncf %384 : vector<8x32xf32> to vector<8x32xbf16>
    %386 = arith.index_cast %c6_i32 : i32 to index
    %c0_109 = arith.constant 0 : index
    %c0_110 = arith.constant 0 : index
    %387 = vector.load %arg14[%386, %c0_109, %c0_110] : memref<8x8x32xbf16, #tpu.memory_space<vmem>>, vector<1x8x32xbf16>
    %388 = vector.shape_cast %387 : vector<1x8x32xbf16> to vector<8x32xbf16>
    %389 = vector.shape_cast %369 : vector<8x32xbf16> to vector<1x8x32xbf16>
    tpu.vector_store %arg14[%386, %c0_109, %c0_110], %389 {strides = array<i32>} : memref<8x8x32xbf16, #tpu.memory_space<vmem>>, vector<1x8x32xbf16>,
    %390 = arith.index_cast %341 : i32 to index
    %c0_111 = arith.constant 0 : index
    %c0_112 = arith.constant 0 : index
    %391 = vector.load %arg15[%390, %c0_111, %c0_112] : memref<8x8x32xbf16, #tpu.memory_space<vmem>>, vector<1x8x32xbf16>
    %392 = vector.shape_cast %391 : vector<1x8x32xbf16> to vector<8x32xbf16>
    %393 = vector.shape_cast %385 : vector<8x32xbf16> to vector<1x8x32xbf16>
    tpu.vector_store %arg15[%390, %c0_111, %c0_112], %393 {strides = array<i32>} : memref<8x8x32xbf16, #tpu.memory_space<vmem>>, vector<1x8x32xbf16>,
    %c7_i32_113 = arith.constant 7 : i32
    %c7_i32_114 = arith.constant 7 : i32
    %394 = arith.subi %c7_i32_114, %c7_i32_113 : i32
    %395 = arith.index_cast %c7_i32_113 : i32 to index
    %c0_115 = arith.constant 0 : index
    %c0_116 = arith.constant 0 : index
    %396 = vector.load %arg12[%395, %c0_115, %c0_116] : memref<8x8x128xbf16, #tpu.memory_space<vmem>>, vector<1x8x128xbf16>
    %397 = vector.shape_cast %396 : vector<1x8x128xbf16> to vector<8x128xbf16>
    %398 = arith.extf %397 : vector<8x128xbf16> to vector<8x128xf32>
    %cst_117 = arith.constant dense<0.000000e+00> : vector<8x128xf32>
    %399 = tpu.matmul %369, %19, %cst_117 {dimension_numbers = #tpu.dot_dimension_numbers<[1], [0], [0], [1], [0, 0, 1, 1], [], []>} : vector<8x32xbf16>, vector<32x128xbf16>, vector<8x128xf32> -> vector<8x128xf32>
    %400 = arith.addf %398, %399 : vector<8x128xf32>
    %401 = arith.index_cast %394 : i32 to index
    %c0_118 = arith.constant 0 : index
    %c0_119 = arith.constant 0 : index
    %402 = vector.load %arg13[%401, %c0_118, %c0_119] : memref<8x8x128xbf16, #tpu.memory_space<vmem>>, vector<1x8x128xbf16>
    %403 = vector.shape_cast %402 : vector<1x8x128xbf16> to vector<8x128xbf16>
    %404 = arith.extf %403 : vector<8x128xbf16> to vector<8x128xf32>
    %cst_120 = arith.constant dense<0.000000e+00> : vector<8x128xf32>
    %405 = tpu.matmul %385, %20, %cst_120 {dimension_numbers = #tpu.dot_dimension_numbers<[1], [0], [0], [1], [0, 0, 1, 1], [], []>} : vector<8x32xbf16>, vector<32x128xbf16>, vector<8x128xf32> -> vector<8x128xf32>
    %406 = arith.addf %404, %405 : vector<8x128xf32>
    %407 = arith.negf %400 : vector<8x128xf32>
    %408 = math.exp %407 : vector<8x128xf32>
    %cst_121 = arith.constant 1.000000e+00 : f32
    %409 = vector.broadcast %cst_121 : f32 to vector<8x128xf32>
    %410 = arith.addf %409, %408 : vector<8x128xf32>
    %411 = arith.divf %409, %410 : vector<8x128xf32>
    %412 = vector.extract_strided_slice %411 {offsets = [0, 0], sizes = [8, 32], strides = [1, 1]} : vector<8x128xf32> to vector<8x32xf32>
    %413 = vector.extract_strided_slice %411 {offsets = [0, 32], sizes = [8, 32], strides = [1, 1]} : vector<8x128xf32> to vector<8x32xf32>
    %414 = vector.extract_strided_slice %411 {offsets = [0, 96], sizes = [8, 32], strides = [1, 1]} : vector<8x128xf32> to vector<8x32xf32>
    %415 = vector.extract_strided_slice %400 {offsets = [0, 64], sizes = [8, 32], strides = [1, 1]} : vector<8x128xf32> to vector<8x32xf32>
    %416 = math.tanh %415 : vector<8x32xf32>
    %417 = arith.mulf %413, %366 : vector<8x32xf32>
    %418 = arith.mulf %412, %416 : vector<8x32xf32>
    %419 = arith.addf %417, %418 : vector<8x32xf32>
    %420 = math.tanh %419 : vector<8x32xf32>
    %421 = arith.mulf %414, %420 : vector<8x32xf32>
    %422 = arith.truncf %421 : vector<8x32xf32> to vector<8x32xbf16>
    %423 = arith.negf %406 : vector<8x128xf32>
    %424 = math.exp %423 : vector<8x128xf32>
    %cst_122 = arith.constant 1.000000e+00 : f32
    %425 = vector.broadcast %cst_122 : f32 to vector<8x128xf32>
    %426 = arith.addf %425, %424 : vector<8x128xf32>
    %427 = arith.divf %425, %426 : vector<8x128xf32>
    %428 = vector.extract_strided_slice %427 {offsets = [0, 0], sizes = [8, 32], strides = [1, 1]} : vector<8x128xf32> to vector<8x32xf32>
    %429 = vector.extract_strided_slice %427 {offsets = [0, 32], sizes = [8, 32], strides = [1, 1]} : vector<8x128xf32> to vector<8x32xf32>
    %430 = vector.extract_strided_slice %427 {offsets = [0, 96], sizes = [8, 32], strides = [1, 1]} : vector<8x128xf32> to vector<8x32xf32>
    %431 = vector.extract_strided_slice %406 {offsets = [0, 64], sizes = [8, 32], strides = [1, 1]} : vector<8x128xf32> to vector<8x32xf32>
    %432 = math.tanh %431 : vector<8x32xf32>
    %433 = arith.mulf %429, %382 : vector<8x32xf32>
    %434 = arith.mulf %428, %432 : vector<8x32xf32>
    %435 = arith.addf %433, %434 : vector<8x32xf32>
    %436 = math.tanh %435 : vector<8x32xf32>
    %437 = arith.mulf %430, %436 : vector<8x32xf32>
    %438 = arith.truncf %437 : vector<8x32xf32> to vector<8x32xbf16>
    %439 = arith.index_cast %c7_i32_113 : i32 to index
    %c0_123 = arith.constant 0 : index
    %c0_124 = arith.constant 0 : index
    %440 = vector.load %arg14[%439, %c0_123, %c0_124] : memref<8x8x32xbf16, #tpu.memory_space<vmem>>, vector<1x8x32xbf16>
    %441 = vector.shape_cast %440 : vector<1x8x32xbf16> to vector<8x32xbf16>
    %442 = vector.shape_cast %422 : vector<8x32xbf16> to vector<1x8x32xbf16>
    tpu.vector_store %arg14[%439, %c0_123, %c0_124], %442 {strides = array<i32>} : memref<8x8x32xbf16, #tpu.memory_space<vmem>>, vector<1x8x32xbf16>,
    %443 = arith.index_cast %394 : i32 to index
    %c0_125 = arith.constant 0 : index
    %c0_126 = arith.constant 0 : index
    %444 = vector.load %arg15[%443, %c0_125, %c0_126] : memref<8x8x32xbf16, #tpu.memory_space<vmem>>, vector<1x8x32xbf16>
    %445 = vector.shape_cast %444 : vector<1x8x32xbf16> to vector<8x32xbf16>
    %446 = vector.shape_cast %438 : vector<8x32xbf16> to vector<1x8x32xbf16>
    tpu.vector_store %arg15[%443, %c0_125, %c0_126], %446 {strides = array<i32>} : memref<8x8x32xbf16, #tpu.memory_space<vmem>>, vector<1x8x32xbf16>,
    %c8_i32 = arith.constant 8 : i32
    %c0_127 = arith.constant 0 : index
    %c0_128 = arith.constant 0 : index
    %c0_129 = arith.constant 0 : index
    %447 = vector.load %arg14[%c0_127, %c0_128, %c0_129] : memref<8x8x32xbf16, #tpu.memory_space<vmem>>, vector<8x8x32xbf16>
    %448 = vector.shape_cast %447 : vector<8x8x32xbf16> to vector<64x32xbf16>
    %c0_130 = arith.constant 0 : index
    %c0_131 = arith.constant 0 : index
    %449 = vector.load %arg8[%c0_130, %c0_131] : memref<32x16xbf16, #tpu.memory_space<vmem>>, vector<32x16xbf16>
    %cst_132 = arith.constant dense<0.000000e+00> : vector<64x16xf32>
    %450 = tpu.matmul %448, %449, %cst_132 {dimension_numbers = #tpu.dot_dimension_numbers<[1], [0], [0], [1], [0, 0, 1, 1], [], []>} : vector<64x32xbf16>, vector<32x16xbf16>, vector<64x16xf32> -> vector<64x16xf32>
    %c0_133 = arith.constant 0 : index
    %c0_134 = arith.constant 0 : index
    %c0_135 = arith.constant 0 : index
    %451 = vector.load %arg15[%c0_133, %c0_134, %c0_135] : memref<8x8x32xbf16, #tpu.memory_space<vmem>>, vector<8x8x32xbf16>
    %452 = vector.shape_cast %451 : vector<8x8x32xbf16> to vector<64x32xbf16>
    %c0_136 = arith.constant 0 : index
    %c0_137 = arith.constant 0 : index
    %453 = vector.load %arg9[%c0_136, %c0_137] : memref<32x16xbf16, #tpu.memory_space<vmem>>, vector<32x16xbf16>
    %cst_138 = arith.constant dense<0.000000e+00> : vector<64x16xf32>
    %454 = tpu.matmul %452, %453, %cst_138 {dimension_numbers = #tpu.dot_dimension_numbers<[1], [0], [0], [1], [0, 0, 1, 1], [], []>} : vector<64x32xbf16>, vector<32x16xbf16>, vector<64x16xf32> -> vector<64x16xf32>
    %455 = arith.addf %450, %454 : vector<64x16xf32>
    %c0_139 = arith.constant 0 : index
    %c0_140 = arith.constant 0 : index
    %456 = vector.load %arg10[%c0_139, %c0_140] : memref<1x16xf32, #tpu.memory_space<vmem>>, vector<1x16xf32>
    %457 = vector.broadcast %456 : vector<1x16xf32> to vector<64x16xf32>
    %458 = arith.addf %455, %457 : vector<64x16xf32>
    %459 = vector.shape_cast %458 : vector<64x16xf32> to vector<8x8x16xf32>
    %c0_141 = arith.constant 0 : index
    %c0_142 = arith.constant 0 : index
    %c0_143 = arith.constant 0 : index
    %460 = vector.load %arg11[%c0_141, %c0_142, %c0_143] : memref<8x8x16xf32, #tpu.memory_space<vmem>>, vector<8x8x16xf32>
    tpu.vector_store %arg11[%c0_141, %c0_142, %c0_143], %459 {strides = array<i32>} : memref<8x8x16xf32, #tpu.memory_space<vmem>>, vector<8x8x16xf32>,
    return
  }
  func.func @transform_0(%arg0: i32) -> (i32, i32, i32) {
    %c0_i32 = arith.constant 0 : i32
    %c0_i32_0 = arith.constant 0 : i32
    %c0_i32_1 = arith.constant 0 : i32
    return %c0_i32, %arg0, %c0_i32_0 : i32, i32, i32
  }
  func.func @transform_1(%arg0: i32) -> (i32, i32) {
    %c0_i32 = arith.constant 0 : i32
    %c0_i32_0 = arith.constant 0 : i32
    %c0_i32_1 = arith.constant 0 : i32
    return %c0_i32, %c0_i32_0 : i32, i32
  }
  func.func @transform_2(%arg0: i32) -> (i32, i32) {
    %c0_i32 = arith.constant 0 : i32
    %c0_i32_0 = arith.constant 0 : i32
    %c0_i32_1 = arith.constant 0 : i32
    return %c0_i32, %c0_i32_0 : i32, i32
  }
  func.func @transform_3(%arg0: i32) -> (i32, i32) {
    %c0_i32 = arith.constant 0 : i32
    %c0_i32_0 = arith.constant 0 : i32
    %c0_i32_1 = arith.constant 0 : i32
    return %c0_i32, %c0_i32_0 : i32, i32
  }
  func.func @transform_4(%arg0: i32) -> (i32, i32) {
    %c0_i32 = arith.constant 0 : i32
    %c0_i32_0 = arith.constant 0 : i32
    %c0_i32_1 = arith.constant 0 : i32
    return %c0_i32, %c0_i32_0 : i32, i32
  }
  func.func @transform_5(%arg0: i32) -> (i32, i32) {
    %c0_i32 = arith.constant 0 : i32
    %c0_i32_0 = arith.constant 0 : i32
    %c0_i32_1 = arith.constant 0 : i32
    return %c0_i32, %c0_i32_0 : i32, i32
  }
  func.func @transform_6(%arg0: i32) -> (i32, i32) {
    %c0_i32 = arith.constant 0 : i32
    %c0_i32_0 = arith.constant 0 : i32
    %c0_i32_1 = arith.constant 0 : i32
    return %c0_i32, %c0_i32_0 : i32, i32
  }
  func.func @transform_7(%arg0: i32) -> (i32, i32) {
    %c0_i32 = arith.constant 0 : i32
    %c0_i32_0 = arith.constant 0 : i32
    %c0_i32_1 = arith.constant 0 : i32
    return %c0_i32, %c0_i32_0 : i32, i32
  }
  func.func @transform_8(%arg0: i32) -> (i32, i32) {
    %c0_i32 = arith.constant 0 : i32
    %c0_i32_0 = arith.constant 0 : i32
    %c0_i32_1 = arith.constant 0 : i32
    return %c0_i32, %c0_i32_0 : i32, i32
  }
  func.func @transform_9(%arg0: i32) -> (i32, i32) {
    %c0_i32 = arith.constant 0 : i32
    %c0_i32_0 = arith.constant 0 : i32
    %c0_i32_1 = arith.constant 0 : i32
    return %c0_i32, %c0_i32_0 : i32, i32
  }
  func.func @transform_10(%arg0: i32) -> (i32, i32, i32) {
    %c0_i32 = arith.constant 0 : i32
    %c0_i32_0 = arith.constant 0 : i32
    %c0_i32_1 = arith.constant 0 : i32
    return %c0_i32, %arg0, %c0_i32_0 : i32, i32, i32
  }
}

</mosaic_0001>

<llo_original>
// kernel: tpu_custom_call.1
$region0: #{tpu_custom_call.1}
  #allocation0 [shape = 'u32[]', space=smem, size = 0x4, offset = 0x4, fixed_abs, tag = 'smem constant byte address 0x4 - core index']
  #allocation1 [shape = 'u32[72,128]{1,0:T(1,128)}', space=vmem, size = 0x9000, scoped, tag = 'internal scratch']
  #allocation2 [shape = 'bf16[8,8,128]{2,1,0:T(8,128)(2,1)}', space=vmem, size = 0x4000, scoped, tag = 'scratch operand']
  #allocation3 [shape = 'bf16[8,8,128]{2,1,0:T(8,128)(2,1)}', space=vmem, size = 0x4000, scoped, tag = 'scratch operand']
  #allocation4 [shape = 'bf16[8,8,32]{2,1,0:T(8,128)(2,1)}', space=vmem, size = 0x4000, scoped, tag = 'scratch operand']
  #allocation5 [shape = 'bf16[8,8,32]{2,1,0:T(8,128)(2,1)}', space=vmem, size = 0x4000, scoped, tag = 'scratch operand']
  %s0 = inlined_call_operand.hbm [shape: f32[8,8,32], index: 0, kind: input, shape index: {}]
  %s1 = inlined_call_operand.vmem [shape: bf16[32,128], index: 1, kind: input, shape index: {}]
  %s2 = inlined_call_operand.vmem [shape: bf16[32,128], index: 2, kind: input, shape index: {}]
  %s3 = inlined_call_operand.vmem [shape: f32[1,128], index: 3, kind: input, shape index: {}]
  %s4 = inlined_call_operand.vmem [shape: f32[1,128], index: 4, kind: input, shape index: {}]
  %s5 = inlined_call_operand.vmem [shape: bf16[32,128], index: 5, kind: input, shape index: {}]
  %s6 = inlined_call_operand.hbm [shape: bf16[32,128], index: 6, kind: input, shape index: {}]
  %s7 = inlined_call_operand.vmem [shape: bf16[32,16], index: 7, kind: input, shape index: {}]
  %s8 = inlined_call_operand.vmem [shape: bf16[32,16], index: 8, kind: input, shape index: {}]
  %s9 = inlined_call_operand.vmem [shape: f32[1,16], index: 9, kind: input, shape index: {}]
  %s10 = inlined_call_operand.hbm [shape: f32[8,8,16], index: 10, kind: output, shape index: {}]
  %s11 = sld [smem:[#allocation0]]
  $region58: #{tpu_custom_call.1} parent=0
    _
  %s13 = ssub.s32 1, %s11
  %s14 = scalar_select 0, %s13, %s11
  $region1: #{tpu_custom_call.1} parent=0
    #allocation6 [shape = 'u8[32768]{0}', space=vmem, size = 0x8000, scoped, tag = 'input window, operand 0, single buffered']
    #allocation7 [shape = 's32[1]{0}', space=sflag, size = 0x4, scoped, tag = 'scoped memory for tpu_custom_call.1']
    #allocation8 [shape = 's32[1]{0}', space=sflag, size = 0x4, scoped, tag = 'scoped memory for tpu_custom_call.1']
    #allocation9 [shape = 'u8[8192]{0}', space=vmem, size = 0x2000, scoped, tag = 'input window, operand 6, single buffered']
    #allocation10 [shape = 's32[1]{0}', space=sflag, size = 0x4, scoped, tag = 'scoped memory for tpu_custom_call.1']
    #allocation11 [shape = 'u8[32768]{0}', space=vmem, size = 0x8000, scoped, tag = 'output window, operand 0, single buffered']
    %15 = vsyncpa [#allocation7], 0
    %16 = vsyncpa [#allocation10], 0
    %17 = vsyncpa [#allocation8], 0
    // Predicated region
    $region2: #{tpu_custom_call.1} parent=1 // pred_check
      _
    $region3: #{tpu_custom_call.1} parent=1 // pred_check_branch
      %19 = sbr.rel (0) target = $region5
    $region4: #{tpu_custom_call.1} parent=1 // pred_region
      %21 = vsyncadd [#allocation7], 0
      %s22 = sshll.u32 %s0, 4
      %s23 = int_to_ptr.hbm [resolvable:$true] %s22
      %s24 = sshll.u32 [#allocation6], 4
      %s25 = int_to_ptr.vmem [resolvable:$true] %s24
      %30 = dma.hbm_to_vmem [thread:$0]  %s23, 1024, %s25, [#allocation7], 128, 128, 8
    $region5: #{tpu_custom_call.1} parent=1 // pred_fallthru
      _
    // Predicated region
    $region6: #{tpu_custom_call.1} parent=1 // pred_check
      _
    $region7: #{tpu_custom_call.1} parent=1 // pred_check_branch
      %32 = sbr.rel (0) target = $region9
    $region8: #{tpu_custom_call.1} parent=1 // pred_region
      _
    $region9: #{tpu_custom_call.1} parent=1 // pred_fallthru
      _
    // Predicated region
    $region10: #{tpu_custom_call.1} parent=1 // pred_check
      _
    $region11: #{tpu_custom_call.1} parent=1 // pred_check_branch
      %34 = sbr.rel (0) target = $region13
    $region12: #{tpu_custom_call.1} parent=1 // pred_region
      _
    $region13: #{tpu_custom_call.1} parent=1 // pred_fallthru
      _
    // Predicated region
    $region14: #{tpu_custom_call.1} parent=1 // pred_check
      _
    $region15: #{tpu_custom_call.1} parent=1 // pred_check_branch
      %36 = sbr.rel (0) target = $region17
    $region16: #{tpu_custom_call.1} parent=1 // pred_region
      _
    $region17: #{tpu_custom_call.1} parent=1 // pred_fallthru
      _
    // Predicated region
    $region18: #{tpu_custom_call.1} parent=1 // pred_check
      _
    $region19: #{tpu_custom_call.1} parent=1 // pred_check_branch
      %38 = sbr.rel (0) target = $region21
    $region20: #{tpu_custom_call.1} parent=1 // pred_region
      _
    $region21: #{tpu_custom_call.1} parent=1 // pred_fallthru
      _
    // Predicated region
    $region22: #{tpu_custom_call.1} parent=1 // pred_check
      _
    $region23: #{tpu_custom_call.1} parent=1 // pred_check_branch
      %40 = sbr.rel (0) target = $region25
    $region24: #{tpu_custom_call.1} parent=1 // pred_region
      _
    $region25: #{tpu_custom_call.1} parent=1 // pred_fallthru
      _
    // Predicated region
    $region26: #{tpu_custom_call.1} parent=1 // pred_check
      _
    $region27: #{tpu_custom_call.1} parent=1 // pred_check_branch
      %42 = sbr.rel (0) target = $region29
    $region28: #{tpu_custom_call.1} parent=1 // pred_region
      %44 = vsyncadd [#allocation10], 0
      %s45 = sshll.u32 %s6, 4
      %s46 = int_to_ptr.hbm [resolvable:$true] %s45
      %s47 = sshll.u32 [#allocation9], 4
      %s48 = int_to_ptr.vmem [resolvable:$true] %s47
      %53 = dma.hbm_to_vmem [thread:$0]  %s46, 256, %s48, [#allocation10], 64, 64, 4
    $region29: #{tpu_custom_call.1} parent=1 // pred_fallthru
      _
    // Predicated region
    $region30: #{tpu_custom_call.1} parent=1 // pred_check
      _
    $region31: #{tpu_custom_call.1} parent=1 // pred_check_branch
      %55 = sbr.rel (0) target = $region33
    $region32: #{tpu_custom_call.1} parent=1 // pred_region
      _
    $region33: #{tpu_custom_call.1} parent=1 // pred_fallthru
      _
    // Predicated region
    $region34: #{tpu_custom_call.1} parent=1 // pred_check
      _
    $region35: #{tpu_custom_call.1} parent=1 // pred_check_branch
      %57 = sbr.rel (0) target = $region37
    $region36: #{tpu_custom_call.1} parent=1 // pred_region
      _
    $region37: #{tpu_custom_call.1} parent=1 // pred_fallthru
      _
    // Predicated region
    $region38: #{tpu_custom_call.1} parent=1 // pred_check
      _
    $region39: #{tpu_custom_call.1} parent=1 // pred_check_branch
      %59 = sbr.rel (0) target = $region41
    $region40: #{tpu_custom_call.1} parent=1 // pred_region
      _
    $region41: #{tpu_custom_call.1} parent=1 // pred_fallthru
      _
    // Predicated region
    $region42: #{tpu_custom_call.1} parent=1 // pred_check
      _
    $region43: #{tpu_custom_call.1} parent=1 // pred_check_branch
      %61 = sbr.rel (0) target = $region45
    $region44: #{tpu_custom_call.1} parent=1 // pred_region
      %63 = dma.done [#allocation7], 1024
    $region45: #{tpu_custom_call.1} parent=1 // pred_fallthru
      _
    // Predicated region
    $region46: #{tpu_custom_call.1} parent=1 // pred_check
      _
    $region47: #{tpu_custom_call.1} parent=1 // pred_check_branch
      %65 = sbr.rel (0) target = $region49
    $region48: #{tpu_custom_call.1} parent=1 // pred_region
      %67 = dma.done [#allocation10], 256
    $region49: #{tpu_custom_call.1} parent=1 // pred_fallthru
      _
    %v69 = vld [vmem:[#allocation6] sm:$0xff]
    %v70 = vld [vmem:[#allocation6 + $0x8] sm:$0xff]
    %v71 = vld [vmem:[#allocation6 + $0x10] sm:$0xff]
    %v72 = vld [vmem:[#allocation6 + $0x18] sm:$0xff]
    %v73 = vld [vmem:[#allocation6 + $0x20] sm:$0xff]
    %v74 = vld [vmem:[#allocation6 + $0x28] sm:$0xff]
    %v75 = vld [vmem:[#allocation6 + $0x30] sm:$0xff]
    %v76 = vld [vmem:[#allocation6 + $0x38] sm:$0xff]
    %v77 = vpack.c.bf16 %v70, %v69
    %v78 = vpack.c.bf16 %v72, %v71
    %v79 = vpack.c.bf16 %v74, %v73
    %v80 = vpack.c.bf16 %v76, %v75
    %v81 = vld [vmem:[%s1] sm:$0xf]
    %v82 = vld [vmem:[%s1 + $0x4] sm:$0xf]
    %v83 = vld [vmem:[%s1 + $0x8] sm:$0xf]
    %v84 = vld [vmem:[%s1 + $0xc] sm:$0xf]
    %v85 = vld [vmem:[%s3] sm:$0x1]
    %v87 = vperm.slane %v85, 0
    %v93 = vunpack.c.l.b16 %v81
    %v94 = vunpack.c.l.b16 %v82
    %v95 = vunpack.c.l.b16 %v83
    %v96 = vunpack.c.l.b16 %v84
    %v97 = vpack.c.b16 %v94, %v93
    %v98 = vpack.c.b16 %v96, %v95
    %vm101 = vcmask 261120
    %v103 = vsel %vm101, %v77, 0
    %v106 = vsel %vm101, %v78, 0
    %v109 = vsel %vm101, %v79, 0
    %v112 = vsel %vm101, %v80, 0
    %114 = vmatpush.bf16.msra.mxu0 0
    %115 = vmatpush.bf16.msra.mxu0 0
    %116 = vmatpush.bf16.msra.mxu0 0
    %117 = vmatpush.bf16.msra.mxu0 0
    %118 = vmatpush.bf16.msra.mxu0 0
    %119 = vmatpush.bf16.msra.mxu0 0
    %120 = vmatpush.bf16.msra.mxu0 %v98
    %121 = vmatpush.bf16.msra.mxu0 %v97
    %122 = vmatmul.bf16.gmra.mxu0 %v103
    %v123 = vpop.f32.mrf.mxu0
    %v124 = vadd.f32 %v87, %v123
    %v125 = vpop.f32.mrf.mxu0
    %v126 = vadd.f32 %v87, %v125
    %127 = vmatmul.bf16.gmra.mxu0 %v106
    %v128 = vpop.f32.mrf.mxu0
    %v129 = vadd.f32 %v87, %v128
    %v130 = vpop.f32.mrf.mxu0
    %v131 = vadd.f32 %v87, %v130
    %132 = vmatmul.bf16.gmra.mxu0 %v109
    %v133 = vpop.f32.mrf.mxu0
    %v134 = vadd.f32 %v87, %v133
    %v135 = vpop.f32.mrf.mxu0
    %v136 = vadd.f32 %v87, %v135
    %137 = vmatmul.bf16.gmra.mxu0 %v112
    %v138 = vpop.f32.mrf.mxu0
    %v139 = vadd.f32 %v87, %v138
    %v140 = vpop.f32.mrf.mxu0
    %v141 = vadd.f32 %v87, %v140
    %142 = vdwg.mxu0
    %v143 = vpack.c.bf16 %v124, %v124
    %v144 = vpack.c.bf16 %v126, %v126
    %v145 = vpack.c.bf16 %v129, %v129
    %v146 = vpack.c.bf16 %v131, %v131
    %v147 = vpack.c.bf16 %v134, %v134
    %v148 = vpack.c.bf16 %v136, %v136
    %v149 = vpack.c.bf16 %v139, %v139
    %v150 = vpack.c.bf16 %v141, %v141
    %151 = vst [vmem:[#allocation2] sm:$0xf] %v143
    %152 = vst [vmem:[#allocation2 + $0x4] sm:$0xf] %v144
    %153 = vst [vmem:[#allocation2 + $0x8] sm:$0xf] %v145
    %154 = vst [vmem:[#allocation2 + $0xc] sm:$0xf] %v146
    %155 = vst [vmem:[#allocation2 + $0x10] sm:$0xf] %v147
    %156 = vst [vmem:[#allocation2 + $0x14] sm:$0xf] %v148
    %157 = vst [vmem:[#allocation2 + $0x18] sm:$0xf] %v149
    %158 = vst [vmem:[#allocation2 + $0x1c] sm:$0xf] %v150
    %v159 = vld [vmem:[%s2] sm:$0xf]
    %v160 = vld [vmem:[%s2 + $0x4] sm:$0xf]
    %v161 = vld [vmem:[%s2 + $0x8] sm:$0xf]
    %v162 = vld [vmem:[%s2 + $0xc] sm:$0xf]
    %v163 = vld [vmem:[%s4] sm:$0x1]
    %v165 = vperm.slane %v163, 0
    %v171 = vunpack.c.l.b16 %v159
    %v172 = vunpack.c.l.b16 %v160
    %v173 = vunpack.c.l.b16 %v161
    %v174 = vunpack.c.l.b16 %v162
    %v175 = vpack.c.b16 %v172, %v171
    %v176 = vpack.c.b16 %v174, %v173
    %179 = vmatpush.bf16.msra.mxu0 0
    %180 = vmatpush.bf16.msra.mxu0 0
    %181 = vmatpush.bf16.msra.mxu0 0
    %182 = vmatpush.bf16.msra.mxu0 0
    %183 = vmatpush.bf16.msra.mxu0 0
    %184 = vmatpush.bf16.msra.mxu0 0
    %185 = vmatpush.bf16.msra.mxu0 %v176
    %186 = vmatpush.bf16.msra.mxu0 %v175
    %187 = vmatmul.bf16.gmra.mxu0 %v103
    %v188 = vpop.f32.mrf.mxu0
    %v189 = vadd.f32 %v165, %v188
    %v190 = vpop.f32.mrf.mxu0
    %v191 = vadd.f32 %v165, %v190
    %192 = vmatmul.bf16.gmra.mxu0 %v106
    %v193 = vpop.f32.mrf.mxu0
    %v194 = vadd.f32 %v165, %v193
    %v195 = vpop.f32.mrf.mxu0
    %v196 = vadd.f32 %v165, %v195
    %197 = vmatmul.bf16.gmra.mxu0 %v109
    %v198 = vpop.f32.mrf.mxu0
    %v199 = vadd.f32 %v165, %v198
    %v200 = vpop.f32.mrf.mxu0
    %v201 = vadd.f32 %v165, %v200
    %202 = vmatmul.bf16.gmra.mxu0 %v112
    %v203 = vpop.f32.mrf.mxu0
    %v204 = vadd.f32 %v165, %v203
    %v205 = vpop.f32.mrf.mxu0
    %v206 = vadd.f32 %v165, %v205
    %207 = vdwg.mxu0
    %v208 = vpack.c.bf16 %v189, %v189
    %v209 = vpack.c.bf16 %v191, %v191
    %v210 = vpack.c.bf16 %v194, %v194
    %v211 = vpack.c.bf16 %v196, %v196
    %v212 = vpack.c.bf16 %v199, %v199
    %v213 = vpack.c.bf16 %v201, %v201
    %v214 = vpack.c.bf16 %v204, %v204
    %v215 = vpack.c.bf16 %v206, %v206
    %216 = vst [vmem:[#allocation3] sm:$0xf] %v208
    %217 = vst [vmem:[#allocation3 + $0x4] sm:$0xf] %v209
    %218 = vst [vmem:[#allocation3 + $0x8] sm:$0xf] %v210
    %219 = vst [vmem:[#allocation3 + $0xc] sm:$0xf] %v211
    %220 = vst [vmem:[#allocation3 + $0x10] sm:$0xf] %v212
    %221 = vst [vmem:[#allocation3 + $0x14] sm:$0xf] %v213
    %222 = vst [vmem:[#allocation3 + $0x18] sm:$0xf] %v214
    %223 = vst [vmem:[#allocation3 + $0x1c] sm:$0xf] %v215
    %v224 = vld [vmem:[%s5] sm:$0xf]
    %v225 = vld [vmem:[%s5 + $0x4] sm:$0xf]
    %v226 = vld [vmem:[%s5 + $0x8] sm:$0xf]
    %v227 = vld [vmem:[%s5 + $0xc] sm:$0xf]
    %v228 = vld [vmem:[#allocation9] sm:$0xf]
    %v229 = vld [vmem:[#allocation9 + $0x4] sm:$0xf]
    %v230 = vld [vmem:[#allocation9 + $0x8] sm:$0xf]
    %v231 = vld [vmem:[#allocation9 + $0xc] sm:$0xf]
    %v232 = vld [vmem:[#allocation2] sm:$0xf]
    %v233 = vunpack.c.l.bf16 %v232
    %v238 = vunpack.c.l.b16 %v224
    %v239 = vunpack.c.l.b16 %v225
    %v240 = vunpack.c.l.b16 %v226
    %v241 = vunpack.c.l.b16 %v227
    %v242 = vpack.c.b16 %v239, %v238
    %v243 = vpack.c.b16 %v241, %v240
    %v247 = vsel %vm101, 0, 0
    %249 = vmatpush.bf16.msra.mxu0 0
    %250 = vmatpush.bf16.msra.mxu0 0
    %251 = vmatpush.bf16.msra.mxu0 0
    %252 = vmatpush.bf16.msra.mxu0 0
    %253 = vmatpush.bf16.msra.mxu0 0
    %254 = vmatpush.bf16.msra.mxu0 0
    %255 = vmatpush.bf16.msra.mxu0 %v243
    %256 = vmatpush.bf16.msra.mxu0 %v242
    %257 = vmatmul.bf16.gmra.mxu0 %v247
    %v258 = vpop.f32.mrf.mxu0
    %v259 = vadd.f32 0.0, %v258
    %v260 = vpop.f32.mrf.mxu0
    %261 = vdwg.mxu0
    %v262 = vadd.f32 %v233, %v259
    %s263 = scalar_lea.vmem [#allocation3], 28
    %v264 = vld [vmem:[%s263] sm:$0xf]
    %v265 = vunpack.c.l.bf16 %v264
    %v270 = vunpack.c.l.b16 %v228
    %v271 = vunpack.c.l.b16 %v229
    %v272 = vunpack.c.l.b16 %v230
    %v273 = vunpack.c.l.b16 %v231
    %v274 = vpack.c.b16 %v271, %v270
    %v275 = vpack.c.b16 %v273, %v272
    %278 = vmatpush.bf16.msra.mxu0 0
    %279 = vmatpush.bf16.msra.mxu0 0
    %280 = vmatpush.bf16.msra.mxu0 0
    %281 = vmatpush.bf16.msra.mxu0 0
    %282 = vmatpush.bf16.msra.mxu0 0
    %283 = vmatpush.bf16.msra.mxu0 0
    %284 = vmatpush.bf16.msra.mxu0 %v275
    %285 = vmatpush.bf16.msra.mxu0 %v274
    %286 = vmatmul.bf16.gmra.mxu0 %v247
    %v287 = vpop.f32.mrf.mxu0
    %v288 = vadd.f32 0.0, %v287
    %v289 = vpop.f32.mrf.mxu0
    %290 = vdwg.mxu0
    %v291 = vadd.f32 %v265, %v288
    %v292 = vxor.u32 %v262, 2147483648
    %v293 = vmul.f32 %v292, 1.442695
    %v294 = vpow.pop %v293
    %v295 = vadd.f32 %v294, 1.0
    %v296 = vrcp.pop %v295
    %v297 = vmul.f32 %v295, %v296
    %v298 = vsub.f32 1.0, %v297
    %v299 = vmul.f32 %v296, %v298
    %v300 = vadd.f32 %v296, %v299
    %vm301 = vweird.f32 %v295
    %vm302 = vweird.f32 %v296
    %vm303 = vmor %vm301, %vm302
    %v304 = vsel %vm303, %v296, %v300
    %v305 = vand.u32 2147483647, %v295
    %vm306 = vcmp.eq.f32.partialorder %v305, 8.507059e+37
    %v307 = vand.u32 %v295, 2147483648
    %v308 = vor.u32 1.1754944e-38, %v307
    %v309 = vsel %vm306, %v308, %v304
    %v310 = vmul.f32 1.0, %v309
    %v311 = vtanh.pop %v262
    %v312 = vmul.f32 %v310, 0.0
    %314 = vrot.lane.b32.xlu0 %v311, 64
    %v315 = vpop.permute.xlu0 %314
    %v317 = vmul.f32 %v310, %v315
    %319 = vrot.lane.b32.xlu0 %v317, 32
    %v320 = vpop.permute.xlu0 %319
    %v322 = vadd.f32 %v312, %v320
    %v323 = vtanh.pop %v322
    %325 = vrot.lane.b32.xlu0 %v323, 64
    %v326 = vpop.permute.xlu0 %325
    %v328 = vmul.f32 %v310, %v326
    %v329 = vpack.c.bf16 %v328, %v328
    %v330 = vxor.u32 %v291, 2147483648
    %v331 = vmul.f32 %v330, 1.442695
    %v332 = vpow.pop %v331
    %v333 = vadd.f32 %v332, 1.0
    %v334 = vrcp.pop %v333
    %v335 = vmul.f32 %v333, %v334
    %v336 = vsub.f32 1.0, %v335
    %v337 = vmul.f32 %v334, %v336
    %v338 = vadd.f32 %v334, %v337
    %vm339 = vweird.f32 %v333
    %vm340 = vweird.f32 %v334
    %vm341 = vmor %vm339, %vm340
    %v342 = vsel %vm341, %v334, %v338
    %v343 = vand.u32 2147483647, %v333
    %vm344 = vcmp.eq.f32.partialorder %v343, 8.507059e+37
    %v345 = vand.u32 %v333, 2147483648
    %v346 = vor.u32 1.1754944e-38, %v345
    %v347 = vsel %vm344, %v346, %v342
    %v348 = vmul.f32 1.0, %v347
    %v349 = vtanh.pop %v291
    %v350 = vmul.f32 %v348, 0.0
    %352 = vrot.lane.b32.xlu0 %v349, 64
    %v353 = vpop.permute.xlu0 %352
    %v355 = vmul.f32 %v348, %v353
    %357 = vrot.lane.b32.xlu0 %v355, 32
    %v358 = vpop.permute.xlu0 %357
    %v360 = vadd.f32 %v350, %v358
    %v361 = vtanh.pop %v360
    %363 = vrot.lane.b32.xlu0 %v361, 64
    %v364 = vpop.permute.xlu0 %363
    %v366 = vmul.f32 %v348, %v364
    %v367 = vpack.c.bf16 %v366, %v366
    %369 = vrot.lane.b32.xlu0 %v329, 32
    %v370 = vpop.permute.xlu0 %369
    %vm372 = vcmask 257024
    %373 = vst.msk [vmem:[#allocation4] sm:$0xf] %vm372, %v370
    %375 = vrot.lane.b32.xlu0 %v367, 32
    %v376 = vpop.permute.xlu0 %375
    %s378 = scalar_lea.vmem [#allocation5], 28
    %379 = vst.msk [vmem:[%s378] sm:$0xf] %vm372, %v376
    %s380 = scalar_lea.vmem [#allocation2], 4
    %v381 = vld [vmem:[%s380] sm:$0xf]
    %v382 = vunpack.c.l.bf16 %v381
    %v383 = vunpack.c.l.b16 %v329
    %v384 = vpack.c.b16 %v383, %v383
    %385 = vrot.lane.b32.xlu0 %v384, 32
    %v386 = vpop.permute.xlu0 %385
    %v388 = vsel %vm101, %v386, 0
    %390 = vmatpush.bf16.msra.mxu0 0
    %391 = vmatpush.bf16.msra.mxu0 0
    %392 = vmatpush.bf16.msra.mxu0 0
    %393 = vmatpush.bf16.msra.mxu0 0
    %394 = vmatpush.bf16.msra.mxu0 0
    %395 = vmatpush.bf16.msra.mxu0 0
    %396 = vmatpush.bf16.msra.mxu0 %v243
    %397 = vmatpush.bf16.msra.mxu0 %v242
    %398 = vmatmul.bf16.gmra.mxu0 %v388
    %v399 = vpop.f32.mrf.mxu0
    %v400 = vadd.f32 0.0, %v399
    %v401 = vpop.f32.mrf.mxu0
    %402 = vdwg.mxu0
    %v403 = vadd.f32 %v382, %v400
    %s404 = scalar_lea.vmem [#allocation3], 24
    %v405 = vld [vmem:[%s404] sm:$0xf]
    %v406 = vunpack.c.l.bf16 %v405
    %v407 = vunpack.c.l.b16 %v367
    %v408 = vpack.c.b16 %v407, %v407
    %409 = vrot.lane.b32.xlu0 %v408, 32
    %v410 = vpop.permute.xlu0 %409
    %v412 = vsel %vm101, %v410, 0
    %414 = vmatpush.bf16.msra.mxu0 0
    %415 = vmatpush.bf16.msra.mxu0 0
    %416 = vmatpush.bf16.msra.mxu0 0
    %417 = vmatpush.bf16.msra.mxu0 0
    %418 = vmatpush.bf16.msra.mxu0 0
    %419 = vmatpush.bf16.msra.mxu0 0
    %420 = vmatpush.bf16.msra.mxu0 %v275
    %421 = vmatpush.bf16.msra.mxu0 %v274
    %422 = vmatmul.bf16.gmra.mxu0 %v412
    %v423 = vpop.f32.mrf.mxu0
    %v424 = vadd.f32 0.0, %v423
    %v425 = vpop.f32.mrf.mxu0
    %426 = vdwg.mxu0
    %v427 = vadd.f32 %v406, %v424
    %v428 = vxor.u32 %v403, 2147483648
    %v429 = vmul.f32 %v428, 1.442695
    %v430 = vpow.pop %v429
    %v431 = vadd.f32 %v430, 1.0
    %v432 = vrcp.pop %v431
    %v433 = vmul.f32 %v431, %v432
    %v434 = vsub.f32 1.0, %v433
    %v435 = vmul.f32 %v432, %v434
    %v436 = vadd.f32 %v432, %v435
    %vm437 = vweird.f32 %v431
    %vm438 = vweird.f32 %v432
    %vm439 = vmor %vm437, %vm438
    %v440 = vsel %vm439, %v432, %v436
    %v441 = vand.u32 2147483647, %v431
    %vm442 = vcmp.eq.f32.partialorder %v441, 8.507059e+37
    %v443 = vand.u32 %v431, 2147483648
    %v444 = vor.u32 1.1754944e-38, %v443
    %v445 = vsel %vm442, %v444, %v440
    %v446 = vmul.f32 1.0, %v445
    %v447 = vtanh.pop %v403
    %v448 = vmul.f32 %v446, %v322
    %450 = vrot.lane.b32.xlu0 %v447, 64
    %v451 = vpop.permute.xlu0 %450
    %v453 = vmul.f32 %v446, %v451
    %455 = vrot.lane.b32.xlu0 %v453, 32
    %v456 = vpop.permute.xlu0 %455
    %v458 = vadd.f32 %v448, %v456
    %v459 = vtanh.pop %v458
    %461 = vrot.lane.b32.xlu0 %v459, 64
    %v462 = vpop.permute.xlu0 %461
    %v464 = vmul.f32 %v446, %v462
    %v465 = vpack.c.bf16 %v464, %v464
    %v466 = vxor.u32 %v427, 2147483648
    %v467 = vmul.f32 %v466, 1.442695
    %v468 = vpow.pop %v467
    %v469 = vadd.f32 %v468, 1.0
    %v470 = vrcp.pop %v469
    %v471 = vmul.f32 %v469, %v470
    %v472 = vsub.f32 1.0, %v471
    %v473 = vmul.f32 %v470, %v472
    %v474 = vadd.f32 %v470, %v473
    %vm475 = vweird.f32 %v469
    %vm476 = vweird.f32 %v470
    %vm477 = vmor %vm475, %vm476
    %v478 = vsel %vm477, %v470, %v474
    %v479 = vand.u32 2147483647, %v469
    %vm480 = vcmp.eq.f32.partialorder %v479, 8.507059e+37
    %v481 = vand.u32 %v469, 2147483648
    %v482 = vor.u32 1.1754944e-38, %v481
    %v483 = vsel %vm480, %v482, %v478
    %v484 = vmul.f32 1.0, %v483
    %v485 = vtanh.pop %v427
    %v486 = vmul.f32 %v484, %v360
    %488 = vrot.lane.b32.xlu0 %v485, 64
    %v489 = vpop.permute.xlu0 %488
    %v491 = vmul.f32 %v484, %v489
    %493 = vrot.lane.b32.xlu0 %v491, 32
    %v494 = vpop.permute.xlu0 %493
    %v496 = vadd.f32 %v486, %v494
    %v497 = vtanh.pop %v496
    %499 = vrot.lane.b32.xlu0 %v497, 64
    %v500 = vpop.permute.xlu0 %499
    %v502 = vmul.f32 %v484, %v500
    %v503 = vpack.c.bf16 %v502, %v502
    %505 = vrot.lane.b32.xlu0 %v465, 32
    %v506 = vpop.permute.xlu0 %505
    %s508 = scalar_lea.vmem [#allocation4], 4
    %509 = vst.msk [vmem:[%s508] sm:$0xf] %vm372, %v506
    %511 = vrot.lane.b32.xlu0 %v503, 32
    %v512 = vpop.permute.xlu0 %511
    %s514 = scalar_lea.vmem [#allocation5], 24
    %515 = vst.msk [vmem:[%s514] sm:$0xf] %vm372, %v512
    %s516 = scalar_lea.vmem [#allocation2], 8
    %v517 = vld [vmem:[%s516] sm:$0xf]
    %v518 = vunpack.c.l.bf16 %v517
    %v519 = vunpack.c.l.b16 %v465
    %v520 = vpack.c.b16 %v519, %v519
    %521 = vrot.lane.b32.xlu0 %v520, 32
    %v522 = vpop.permute.xlu0 %521
    %v524 = vsel %vm101, %v522, 0
    %526 = vmatpush.bf16.msra.mxu0 0
    %527 = vmatpush.bf16.msra.mxu0 0
    %528 = vmatpush.bf16.msra.mxu0 0
    %529 = vmatpush.bf16.msra.mxu0 0
    %530 = vmatpush.bf16.msra.mxu0 0
    %531 = vmatpush.bf16.msra.mxu0 0
    %532 = vmatpush.bf16.msra.mxu0 %v243
    %533 = vmatpush.bf16.msra.mxu0 %v242
    %534 = vmatmul.bf16.gmra.mxu0 %v524
    %v535 = vpop.f32.mrf.mxu0
    %v536 = vadd.f32 0.0, %v535
    %v537 = vpop.f32.mrf.mxu0
    %538 = vdwg.mxu0
    %v539 = vadd.f32 %v518, %v536
    %s540 = scalar_lea.vmem [#allocation3], 20
    %v541 = vld [vmem:[%s540] sm:$0xf]
    %v542 = vunpack.c.l.bf16 %v541
    %v543 = vunpack.c.l.b16 %v503
    %v544 = vpack.c.b16 %v543, %v543
    %545 = vrot.lane.b32.xlu0 %v544, 32
    %v546 = vpop.permute.xlu0 %545
    %v548 = vsel %vm101, %v546, 0
    %550 = vmatpush.bf16.msra.mxu0 0
    %551 = vmatpush.bf16.msra.mxu0 0
    %552 = vmatpush.bf16.msra.mxu0 0
    %553 = vmatpush.bf16.msra.mxu0 0
    %554 = vmatpush.bf16.msra.mxu0 0
    %555 = vmatpush.bf16.msra.mxu0 0
    %556 = vmatpush.bf16.msra.mxu0 %v275
    %557 = vmatpush.bf16.msra.mxu0 %v274
    %558 = vmatmul.bf16.gmra.mxu0 %v548
    %v559 = vpop.f32.mrf.mxu0
    %v560 = vadd.f32 0.0, %v559
    %v561 = vpop.f32.mrf.mxu0
    %562 = vdwg.mxu0
    %v563 = vadd.f32 %v542, %v560
    %v564 = vxor.u32 %v539, 2147483648
    %v565 = vmul.f32 %v564, 1.442695
    %v566 = vpow.pop %v565
    %v567 = vadd.f32 %v566, 1.0
    %v568 = vrcp.pop %v567
    %v569 = vmul.f32 %v567, %v568
    %v570 = vsub.f32 1.0, %v569
    %v571 = vmul.f32 %v568, %v570
    %v572 = vadd.f32 %v568, %v571
    %vm573 = vweird.f32 %v567
    %vm574 = vweird.f32 %v568
    %vm575 = vmor %vm573, %vm574
    %v576 = vsel %vm575, %v568, %v572
    %v577 = vand.u32 2147483647, %v567
    %vm578 = vcmp.eq.f32.partialorder %v577, 8.507059e+37
    %v579 = vand.u32 %v567, 2147483648
    %v580 = vor.u32 1.1754944e-38, %v579
    %v581 = vsel %vm578, %v580, %v576
    %v582 = vmul.f32 1.0, %v581
    %v583 = vtanh.pop %v539
    %v584 = vmul.f32 %v582, %v458
    %586 = vrot.lane.b32.xlu0 %v583, 64
    %v587 = vpop.permute.xlu0 %586
    %v589 = vmul.f32 %v582, %v587
    %591 = vrot.lane.b32.xlu0 %v589, 32
    %v592 = vpop.permute.xlu0 %591
    %v594 = vadd.f32 %v584, %v592
    %v595 = vtanh.pop %v594
    %597 = vrot.lane.b32.xlu0 %v595, 64
    %v598 = vpop.permute.xlu0 %597
    %v600 = vmul.f32 %v582, %v598
    %v601 = vpack.c.bf16 %v600, %v600
    %v602 = vxor.u32 %v563, 2147483648
    %v603 = vmul.f32 %v602, 1.442695
    %v604 = vpow.pop %v603
    %v605 = vadd.f32 %v604, 1.0
    %v606 = vrcp.pop %v605
    %v607 = vmul.f32 %v605, %v606
    %v608 = vsub.f32 1.0, %v607
    %v609 = vmul.f32 %v606, %v608
    %v610 = vadd.f32 %v606, %v609
    %vm611 = vweird.f32 %v605
    %vm612 = vweird.f32 %v606
    %vm613 = vmor %vm611, %vm612
    %v614 = vsel %vm613, %v606, %v610
    %v615 = vand.u32 2147483647, %v605
    %vm616 = vcmp.eq.f32.partialorder %v615, 8.507059e+37
    %v617 = vand.u32 %v605, 2147483648
    %v618 = vor.u32 1.1754944e-38, %v617
    %v619 = vsel %vm616, %v618, %v614
    %v620 = vmul.f32 1.0, %v619
    %v621 = vtanh.pop %v563
    %v622 = vmul.f32 %v620, %v496
    %624 = vrot.lane.b32.xlu0 %v621, 64
    %v625 = vpop.permute.xlu0 %624
    %v627 = vmul.f32 %v620, %v625
    %629 = vrot.lane.b32.xlu0 %v627, 32
    %v630 = vpop.permute.xlu0 %629
    %v632 = vadd.f32 %v622, %v630
    %v633 = vtanh.pop %v632
    %635 = vrot.lane.b32.xlu0 %v633, 64
    %v636 = vpop.permute.xlu0 %635
    %v638 = vmul.f32 %v620, %v636
    %v639 = vpack.c.bf16 %v638, %v638
    %641 = vrot.lane.b32.xlu0 %v601, 32
    %v642 = vpop.permute.xlu0 %641
    %s644 = scalar_lea.vmem [#allocation4], 8
    %645 = vst.msk [vmem:[%s644] sm:$0xf] %vm372, %v642
    %647 = vrot.lane.b32.xlu0 %v639, 32
    %v648 = vpop.permute.xlu0 %647
    %s650 = scalar_lea.vmem [#allocation5], 20
    %651 = vst.msk [vmem:[%s650] sm:$0xf] %vm372, %v648
    %s652 = scalar_lea.vmem [#allocation2], 12
    %v653 = vld [vmem:[%s652] sm:$0xf]
    %v654 = vunpack.c.l.bf16 %v653
    %v655 = vunpack.c.l.b16 %v601
    %v656 = vpack.c.b16 %v655, %v655
    %657 = vrot.lane.b32.xlu0 %v656, 32
    %v658 = vpop.permute.xlu0 %657
    %v660 = vsel %vm101, %v658, 0
    %662 = vmatpush.bf16.msra.mxu0 0
    %663 = vmatpush.bf16.msra.mxu0 0
    %664 = vmatpush.bf16.msra.mxu0 0
    %665 = vmatpush.bf16.msra.mxu0 0
    %666 = vmatpush.bf16.msra.mxu0 0
    %667 = vmatpush.bf16.msra.mxu0 0
    %668 = vmatpush.bf16.msra.mxu0 %v243
    %669 = vmatpush.bf16.msra.mxu0 %v242
    %670 = vmatmul.bf16.gmra.mxu0 %v660
    %v671 = vpop.f32.mrf.mxu0
    %v672 = vadd.f32 0.0, %v671
    %v673 = vpop.f32.mrf.mxu0
    %674 = vdwg.mxu0
    %v675 = vadd.f32 %v654, %v672
    %s676 = scalar_lea.vmem [#allocation3], 16
    %v677 = vld [vmem:[%s676] sm:$0xf]
    %v678 = vunpack.c.l.bf16 %v677
    %v679 = vunpack.c.l.b16 %v639
    %v680 = vpack.c.b16 %v679, %v679
    %681 = vrot.lane.b32.xlu0 %v680, 32
    %v682 = vpop.permute.xlu0 %681
    %v684 = vsel %vm101, %v682, 0
    %686 = vmatpush.bf16.msra.mxu0 0
    %687 = vmatpush.bf16.msra.mxu0 0
    %688 = vmatpush.bf16.msra.mxu0 0
    %689 = vmatpush.bf16.msra.mxu0 0
    %690 = vmatpush.bf16.msra.mxu0 0
    %691 = vmatpush.bf16.msra.mxu0 0
    %692 = vmatpush.bf16.msra.mxu0 %v275
    %693 = vmatpush.bf16.msra.mxu0 %v274
    %694 = vmatmul.bf16.gmra.mxu0 %v684
    %v695 = vpop.f32.mrf.mxu0
    %v696 = vadd.f32 0.0, %v695
    %v697 = vpop.f32.mrf.mxu0
    %698 = vdwg.mxu0
    %v699 = vadd.f32 %v678, %v696
    %v700 = vxor.u32 %v675, 2147483648
    %v701 = vmul.f32 %v700, 1.442695
    %v702 = vpow.pop %v701
    %v703 = vadd.f32 %v702, 1.0
    %v704 = vrcp.pop %v703
    %v705 = vmul.f32 %v703, %v704
    %v706 = vsub.f32 1.0, %v705
    %v707 = vmul.f32 %v704, %v706
    %v708 = vadd.f32 %v704, %v707
    %vm709 = vweird.f32 %v703
    %vm710 = vweird.f32 %v704
    %vm711 = vmor %vm709, %vm710
    %v712 = vsel %vm711, %v704, %v708
    %v713 = vand.u32 2147483647, %v703
    %vm714 = vcmp.eq.f32.partialorder %v713, 8.507059e+37
    %v715 = vand.u32 %v703, 2147483648
    %v716 = vor.u32 1.1754944e-38, %v715
    %v717 = vsel %vm714, %v716, %v712
    %v718 = vmul.f32 1.0, %v717
    %v719 = vtanh.pop %v675
    %v720 = vmul.f32 %v718, %v594
    %722 = vrot.lane.b32.xlu0 %v719, 64
    %v723 = vpop.permute.xlu0 %722
    %v725 = vmul.f32 %v718, %v723
    %727 = vrot.lane.b32.xlu0 %v725, 32
    %v728 = vpop.permute.xlu0 %727
    %v730 = vadd.f32 %v720, %v728
    %v731 = vtanh.pop %v730
    %733 = vrot.lane.b32.xlu0 %v731, 64
    %v734 = vpop.permute.xlu0 %733
    %v736 = vmul.f32 %v718, %v734
    %v737 = vpack.c.bf16 %v736, %v736
    %v738 = vxor.u32 %v699, 2147483648
    %v739 = vmul.f32 %v738, 1.442695
    %v740 = vpow.pop %v739
    %v741 = vadd.f32 %v740, 1.0
    %v742 = vrcp.pop %v741
    %v743 = vmul.f32 %v741, %v742
    %v744 = vsub.f32 1.0, %v743
    %v745 = vmul.f32 %v742, %v744
    %v746 = vadd.f32 %v742, %v745
    %vm747 = vweird.f32 %v741
    %vm748 = vweird.f32 %v742
    %vm749 = vmor %vm747, %vm748
    %v750 = vsel %vm749, %v742, %v746
    %v751 = vand.u32 2147483647, %v741
    %vm752 = vcmp.eq.f32.partialorder %v751, 8.507059e+37
    %v753 = vand.u32 %v741, 2147483648
    %v754 = vor.u32 1.1754944e-38, %v753
    %v755 = vsel %vm752, %v754, %v750
    %v756 = vmul.f32 1.0, %v755
    %v757 = vtanh.pop %v699
    %v758 = vmul.f32 %v756, %v632
    %760 = vrot.lane.b32.xlu0 %v757, 64
    %v761 = vpop.permute.xlu0 %760
    %v763 = vmul.f32 %v756, %v761
    %765 = vrot.lane.b32.xlu0 %v763, 32
    %v766 = vpop.permute.xlu0 %765
    %v768 = vadd.f32 %v758, %v766
    %v769 = vtanh.pop %v768
    %771 = vrot.lane.b32.xlu0 %v769, 64
    %v772 = vpop.permute.xlu0 %771
    %v774 = vmul.f32 %v756, %v772
    %v775 = vpack.c.bf16 %v774, %v774
    %777 = vrot.lane.b32.xlu0 %v737, 32
    %v778 = vpop.permute.xlu0 %777
    %s780 = scalar_lea.vmem [#allocation4], 12
    %781 = vst.msk [vmem:[%s780] sm:$0xf] %vm372, %v778
    %783 = vrot.lane.b32.xlu0 %v775, 32
    %v784 = vpop.permute.xlu0 %783
    %s786 = scalar_lea.vmem [#allocation5], 16
    %787 = vst.msk [vmem:[%s786] sm:$0xf] %vm372, %v784
    %s788 = scalar_lea.vmem [#allocation2], 16
    %v789 = vld [vmem:[%s788] sm:$0xf]
    %v790 = vunpack.c.l.bf16 %v789
    %v791 = vunpack.c.l.b16 %v737
    %v792 = vpack.c.b16 %v791, %v791
    %793 = vrot.lane.b32.xlu0 %v792, 32
    %v794 = vpop.permute.xlu0 %793
    %v796 = vsel %vm101, %v794, 0
    %798 = vmatpush.bf16.msra.mxu0 0
    %799 = vmatpush.bf16.msra.mxu0 0
    %800 = vmatpush.bf16.msra.mxu0 0
    %801 = vmatpush.bf16.msra.mxu0 0
    %802 = vmatpush.bf16.msra.mxu0 0
    %803 = vmatpush.bf16.msra.mxu0 0
    %804 = vmatpush.bf16.msra.mxu0 %v243
    %805 = vmatpush.bf16.msra.mxu0 %v242
    %806 = vmatmul.bf16.gmra.mxu0 %v796
    %v807 = vpop.f32.mrf.mxu0
    %v808 = vadd.f32 0.0, %v807
    %v809 = vpop.f32.mrf.mxu0
    %810 = vdwg.mxu0
    %v811 = vadd.f32 %v790, %v808
    %s812 = scalar_lea.vmem [#allocation3], 12
    %v813 = vld [vmem:[%s812] sm:$0xf]
    %v814 = vunpack.c.l.bf16 %v813
    %v815 = vunpack.c.l.b16 %v775
    %v816 = vpack.c.b16 %v815, %v815
    %817 = vrot.lane.b32.xlu0 %v816, 32
    %v818 = vpop.permute.xlu0 %817
    %v820 = vsel %vm101, %v818, 0
    %822 = vmatpush.bf16.msra.mxu0 0
    %823 = vmatpush.bf16.msra.mxu0 0
    %824 = vmatpush.bf16.msra.mxu0 0
    %825 = vmatpush.bf16.msra.mxu0 0
    %826 = vmatpush.bf16.msra.mxu0 0
    %827 = vmatpush.bf16.msra.mxu0 0
    %828 = vmatpush.bf16.msra.mxu0 %v275
    %829 = vmatpush.bf16.msra.mxu0 %v274
    %830 = vmatmul.bf16.gmra.mxu0 %v820
    %v831 = vpop.f32.mrf.mxu0
    %v832 = vadd.f32 0.0, %v831
    %v833 = vpop.f32.mrf.mxu0
    %834 = vdwg.mxu0
    %v835 = vadd.f32 %v814, %v832
    %v836 = vxor.u32 %v811, 2147483648
    %v837 = vmul.f32 %v836, 1.442695
    %v838 = vpow.pop %v837
    %v839 = vadd.f32 %v838, 1.0
    %v840 = vrcp.pop %v839
    %v841 = vmul.f32 %v839, %v840
    %v842 = vsub.f32 1.0, %v841
    %v843 = vmul.f32 %v840, %v842
    %v844 = vadd.f32 %v840, %v843
    %vm845 = vweird.f32 %v839
    %vm846 = vweird.f32 %v840
    %vm847 = vmor %vm845, %vm846
    %v848 = vsel %vm847, %v840, %v844
    %v849 = vand.u32 2147483647, %v839
    %vm850 = vcmp.eq.f32.partialorder %v849, 8.507059e+37
    %v851 = vand.u32 %v839, 2147483648
    %v852 = vor.u32 1.1754944e-38, %v851
    %v853 = vsel %vm850, %v852, %v848
    %v854 = vmul.f32 1.0, %v853
    %v855 = vtanh.pop %v811
    %v856 = vmul.f32 %v854, %v730
    %858 = vrot.lane.b32.xlu0 %v855, 64
    %v859 = vpop.permute.xlu0 %858
    %v861 = vmul.f32 %v854, %v859
    %863 = vrot.lane.b32.xlu0 %v861, 32
    %v864 = vpop.permute.xlu0 %863
    %v866 = vadd.f32 %v856, %v864
    %v867 = vtanh.pop %v866
    %869 = vrot.lane.b32.xlu0 %v867, 64
    %v870 = vpop.permute.xlu0 %869
    %v872 = vmul.f32 %v854, %v870
    %v873 = vpack.c.bf16 %v872, %v872
    %v874 = vxor.u32 %v835, 2147483648
    %v875 = vmul.f32 %v874, 1.442695
    %v876 = vpow.pop %v875
    %v877 = vadd.f32 %v876, 1.0
    %v878 = vrcp.pop %v877
    %v879 = vmul.f32 %v877, %v878
    %v880 = vsub.f32 1.0, %v879
    %v881 = vmul.f32 %v878, %v880
    %v882 = vadd.f32 %v878, %v881
    %vm883 = vweird.f32 %v877
    %vm884 = vweird.f32 %v878
    %vm885 = vmor %vm883, %vm884
    %v886 = vsel %vm885, %v878, %v882
    %v887 = vand.u32 2147483647, %v877
    %vm888 = vcmp.eq.f32.partialorder %v887, 8.507059e+37
    %v889 = vand.u32 %v877, 2147483648
    %v890 = vor.u32 1.1754944e-38, %v889
    %v891 = vsel %vm888, %v890, %v886
    %v892 = vmul.f32 1.0, %v891
    %v893 = vtanh.pop %v835
    %v894 = vmul.f32 %v892, %v768
    %896 = vrot.lane.b32.xlu0 %v893, 64
    %v897 = vpop.permute.xlu0 %896
    %v899 = vmul.f32 %v892, %v897
    %901 = vrot.lane.b32.xlu0 %v899, 32
    %v902 = vpop.permute.xlu0 %901
    %v904 = vadd.f32 %v894, %v902
    %v905 = vtanh.pop %v904
    %907 = vrot.lane.b32.xlu0 %v905, 64
    %v908 = vpop.permute.xlu0 %907
    %v910 = vmul.f32 %v892, %v908
    %v911 = vpack.c.bf16 %v910, %v910
    %913 = vrot.lane.b32.xlu0 %v873, 32
    %v914 = vpop.permute.xlu0 %913
    %s916 = scalar_lea.vmem [#allocation4], 16
    %917 = vst.msk [vmem:[%s916] sm:$0xf] %vm372, %v914
    %919 = vrot.lane.b32.xlu0 %v911, 32
    %v920 = vpop.permute.xlu0 %919
    %s922 = scalar_lea.vmem [#allocation5], 12
    %923 = vst.msk [vmem:[%s922] sm:$0xf] %vm372, %v920
    %s924 = scalar_lea.vmem [#allocation2], 20
    %v925 = vld [vmem:[%s924] sm:$0xf]
    %v926 = vunpack.c.l.bf16 %v925
    %v927 = vunpack.c.l.b16 %v873
    %v928 = vpack.c.b16 %v927, %v927
    %929 = vrot.lane.b32.xlu0 %v928, 32
    %v930 = vpop.permute.xlu0 %929
    %v932 = vsel %vm101, %v930, 0
    %934 = vmatpush.bf16.msra.mxu0 0
    %935 = vmatpush.bf16.msra.mxu0 0
    %936 = vmatpush.bf16.msra.mxu0 0
    %937 = vmatpush.bf16.msra.mxu0 0
    %938 = vmatpush.bf16.msra.mxu0 0
    %939 = vmatpush.bf16.msra.mxu0 0
    %940 = vmatpush.bf16.msra.mxu0 %v243
    %941 = vmatpush.bf16.msra.mxu0 %v242
    %942 = vmatmul.bf16.gmra.mxu0 %v932
    %v943 = vpop.f32.mrf.mxu0
    %v944 = vadd.f32 0.0, %v943
    %v945 = vpop.f32.mrf.mxu0
    %946 = vdwg.mxu0
    %v947 = vadd.f32 %v926, %v944
    %s948 = scalar_lea.vmem [#allocation3], 8
    %v949 = vld [vmem:[%s948] sm:$0xf]
    %v950 = vunpack.c.l.bf16 %v949
    %v951 = vunpack.c.l.b16 %v911
    %v952 = vpack.c.b16 %v951, %v951
    %953 = vrot.lane.b32.xlu0 %v952, 32
    %v954 = vpop.permute.xlu0 %953
    %v956 = vsel %vm101, %v954, 0
    %958 = vmatpush.bf16.msra.mxu0 0
    %959 = vmatpush.bf16.msra.mxu0 0
    %960 = vmatpush.bf16.msra.mxu0 0
    %961 = vmatpush.bf16.msra.mxu0 0
    %962 = vmatpush.bf16.msra.mxu0 0
    %963 = vmatpush.bf16.msra.mxu0 0
    %964 = vmatpush.bf16.msra.mxu0 %v275
    %965 = vmatpush.bf16.msra.mxu0 %v274
    %966 = vmatmul.bf16.gmra.mxu0 %v956
    %v967 = vpop.f32.mrf.mxu0
    %v968 = vadd.f32 0.0, %v967
    %v969 = vpop.f32.mrf.mxu0
    %970 = vdwg.mxu0
    %v971 = vadd.f32 %v950, %v968
    %v972 = vxor.u32 %v947, 2147483648
    %v973 = vmul.f32 %v972, 1.442695
    %v974 = vpow.pop %v973
    %v975 = vadd.f32 %v974, 1.0
    %v976 = vrcp.pop %v975
    %v977 = vmul.f32 %v975, %v976
    %v978 = vsub.f32 1.0, %v977
    %v979 = vmul.f32 %v976, %v978
    %v980 = vadd.f32 %v976, %v979
    %vm981 = vweird.f32 %v975
    %vm982 = vweird.f32 %v976
    %vm983 = vmor %vm981, %vm982
    %v984 = vsel %vm983, %v976, %v980
    %v985 = vand.u32 2147483647, %v975
    %vm986 = vcmp.eq.f32.partialorder %v985, 8.507059e+37
    %v987 = vand.u32 %v975, 2147483648
    %v988 = vor.u32 1.1754944e-38, %v987
    %v989 = vsel %vm986, %v988, %v984
    %v990 = vmul.f32 1.0, %v989
    %v991 = vtanh.pop %v947
    %v992 = vmul.f32 %v990, %v866
    %994 = vrot.lane.b32.xlu0 %v991, 64
    %v995 = vpop.permute.xlu0 %994
    %v997 = vmul.f32 %v990, %v995
    %999 = vrot.lane.b32.xlu0 %v997, 32
    %v1000 = vpop.permute.xlu0 %999
    %v1002 = vadd.f32 %v992, %v1000
    %v1003 = vtanh.pop %v1002
    %1005 = vrot.lane.b32.xlu0 %v1003, 64
    %v1006 = vpop.permute.xlu0 %1005
    %v1008 = vmul.f32 %v990, %v1006
    %v1009 = vpack.c.bf16 %v1008, %v1008
    %v1010 = vxor.u32 %v971, 2147483648
    %v1011 = vmul.f32 %v1010, 1.442695
    %v1012 = vpow.pop %v1011
    %v1013 = vadd.f32 %v1012, 1.0
    %v1014 = vrcp.pop %v1013
    %v1015 = vmul.f32 %v1013, %v1014
    %v1016 = vsub.f32 1.0, %v1015
    %v1017 = vmul.f32 %v1014, %v1016
    %v1018 = vadd.f32 %v1014, %v1017
    %vm1019 = vweird.f32 %v1013
    %vm1020 = vweird.f32 %v1014
    %vm1021 = vmor %vm1019, %vm1020
    %v1022 = vsel %vm1021, %v1014, %v1018
    %v1023 = vand.u32 2147483647, %v1013
    %vm1024 = vcmp.eq.f32.partialorder %v1023, 8.507059e+37
    %v1025 = vand.u32 %v1013, 2147483648
    %v1026 = vor.u32 1.1754944e-38, %v1025
    %v1027 = vsel %vm1024, %v1026, %v1022
    %v1028 = vmul.f32 1.0, %v1027
    %v1029 = vtanh.pop %v971
    %v1030 = vmul.f32 %v1028, %v904
    %1032 = vrot.lane.b32.xlu0 %v1029, 64
    %v1033 = vpop.permute.xlu0 %1032
    %v1035 = vmul.f32 %v1028, %v1033
    %1037 = vrot.lane.b32.xlu0 %v1035, 32
    %v1038 = vpop.permute.xlu0 %1037
    %v1040 = vadd.f32 %v1030, %v1038
    %v1041 = vtanh.pop %v1040
    %1043 = vrot.lane.b32.xlu0 %v1041, 64
    %v1044 = vpop.permute.xlu0 %1043
    %v1046 = vmul.f32 %v1028, %v1044
    %v1047 = vpack.c.bf16 %v1046, %v1046
    %1049 = vrot.lane.b32.xlu0 %v1009, 32
    %v1050 = vpop.permute.xlu0 %1049
    %s1052 = scalar_lea.vmem [#allocation4], 20
    %1053 = vst.msk [vmem:[%s1052] sm:$0xf] %vm372, %v1050
    %1055 = vrot.lane.b32.xlu0 %v1047, 32
    %v1056 = vpop.permute.xlu0 %1055
    %s1058 = scalar_lea.vmem [#allocation5], 8
    %1059 = vst.msk [vmem:[%s1058] sm:$0xf] %vm372, %v1056
    %s1060 = scalar_lea.vmem [#allocation2], 24
    %v1061 = vld [vmem:[%s1060] sm:$0xf]
    %v1062 = vunpack.c.l.bf16 %v1061
    %v1063 = vunpack.c.l.b16 %v1009
    %v1064 = vpack.c.b16 %v1063, %v1063
    %1065 = vrot.lane.b32.xlu0 %v1064, 32
    %v1066 = vpop.permute.xlu0 %1065
    %v1068 = vsel %vm101, %v1066, 0
    %1070 = vmatpush.bf16.msra.mxu0 0
    %1071 = vmatpush.bf16.msra.mxu0 0
    %1072 = vmatpush.bf16.msra.mxu0 0
    %1073 = vmatpush.bf16.msra.mxu0 0
    %1074 = vmatpush.bf16.msra.mxu0 0
    %1075 = vmatpush.bf16.msra.mxu0 0
    %1076 = vmatpush.bf16.msra.mxu0 %v243
    %1077 = vmatpush.bf16.msra.mxu0 %v242
    %1078 = vmatmul.bf16.gmra.mxu0 %v1068
    %v1079 = vpop.f32.mrf.mxu0
    %v1080 = vadd.f32 0.0, %v1079
    %v1081 = vpop.f32.mrf.mxu0
    %1082 = vdwg.mxu0
    %v1083 = vadd.f32 %v1062, %v1080
    %s1084 = scalar_lea.vmem [#allocation3], 4
    %v1085 = vld [vmem:[%s1084] sm:$0xf]
    %v1086 = vunpack.c.l.bf16 %v1085
    %v1087 = vunpack.c.l.b16 %v1047
    %v1088 = vpack.c.b16 %v1087, %v1087
    %1089 = vrot.lane.b32.xlu0 %v1088, 32
    %v1090 = vpop.permute.xlu0 %1089
    %v1092 = vsel %vm101, %v1090, 0
    %1094 = vmatpush.bf16.msra.mxu0 0
    %1095 = vmatpush.bf16.msra.mxu0 0
    %1096 = vmatpush.bf16.msra.mxu0 0
    %1097 = vmatpush.bf16.msra.mxu0 0
    %1098 = vmatpush.bf16.msra.mxu0 0
    %1099 = vmatpush.bf16.msra.mxu0 0
    %1100 = vmatpush.bf16.msra.mxu0 %v275
    %1101 = vmatpush.bf16.msra.mxu0 %v274
    %1102 = vmatmul.bf16.gmra.mxu0 %v1092
    %v1103 = vpop.f32.mrf.mxu0
    %v1104 = vadd.f32 0.0, %v1103
    %v1105 = vpop.f32.mrf.mxu0
    %1106 = vdwg.mxu0
    %v1107 = vadd.f32 %v1086, %v1104
    %v1108 = vxor.u32 %v1083, 2147483648
    %v1109 = vmul.f32 %v1108, 1.442695
    %v1110 = vpow.pop %v1109
    %v1111 = vadd.f32 %v1110, 1.0
    %v1112 = vrcp.pop %v1111
    %v1113 = vmul.f32 %v1111, %v1112
    %v1114 = vsub.f32 1.0, %v1113
    %v1115 = vmul.f32 %v1112, %v1114
    %v1116 = vadd.f32 %v1112, %v1115
    %vm1117 = vweird.f32 %v1111
    %vm1118 = vweird.f32 %v1112
    %vm1119 = vmor %vm1117, %vm1118
    %v1120 = vsel %vm1119, %v1112, %v1116
    %v1121 = vand.u32 2147483647, %v1111
    %vm1122 = vcmp.eq.f32.partialorder %v1121, 8.507059e+37
    %v1123 = vand.u32 %v1111, 2147483648
    %v1124 = vor.u32 1.1754944e-38, %v1123
    %v1125 = vsel %vm1122, %v1124, %v1120
    %v1126 = vmul.f32 1.0, %v1125
    %v1127 = vtanh.pop %v1083
    %v1128 = vmul.f32 %v1126, %v1002
    %1130 = vrot.lane.b32.xlu0 %v1127, 64
    %v1131 = vpop.permute.xlu0 %1130
    %v1133 = vmul.f32 %v1126, %v1131
    %1135 = vrot.lane.b32.xlu0 %v1133, 32
    %v1136 = vpop.permute.xlu0 %1135
    %v1138 = vadd.f32 %v1128, %v1136
    %v1139 = vtanh.pop %v1138
    %1141 = vrot.lane.b32.xlu0 %v1139, 64
    %v1142 = vpop.permute.xlu0 %1141
    %v1144 = vmul.f32 %v1126, %v1142
    %v1145 = vpack.c.bf16 %v1144, %v1144
    %v1146 = vxor.u32 %v1107, 2147483648
    %v1147 = vmul.f32 %v1146, 1.442695
    %v1148 = vpow.pop %v1147
    %v1149 = vadd.f32 %v1148, 1.0
    %v1150 = vrcp.pop %v1149
    %v1151 = vmul.f32 %v1149, %v1150
    %v1152 = vsub.f32 1.0, %v1151
    %v1153 = vmul.f32 %v1150, %v1152
    %v1154 = vadd.f32 %v1150, %v1153
    %vm1155 = vweird.f32 %v1149
    %vm1156 = vweird.f32 %v1150
    %vm1157 = vmor %vm1155, %vm1156
    %v1158 = vsel %vm1157, %v1150, %v1154
    %v1159 = vand.u32 2147483647, %v1149
    %vm1160 = vcmp.eq.f32.partialorder %v1159, 8.507059e+37
    %v1161 = vand.u32 %v1149, 2147483648
    %v1162 = vor.u32 1.1754944e-38, %v1161
    %v1163 = vsel %vm1160, %v1162, %v1158
    %v1164 = vmul.f32 1.0, %v1163
    %v1165 = vtanh.pop %v1107
    %v1166 = vmul.f32 %v1164, %v1040
    %1168 = vrot.lane.b32.xlu0 %v1165, 64
    %v1169 = vpop.permute.xlu0 %1168
    %v1171 = vmul.f32 %v1164, %v1169
    %1173 = vrot.lane.b32.xlu0 %v1171, 32
    %v1174 = vpop.permute.xlu0 %1173
    %v1176 = vadd.f32 %v1166, %v1174
    %v1177 = vtanh.pop %v1176
    %1179 = vrot.lane.b32.xlu0 %v1177, 64
    %v1180 = vpop.permute.xlu0 %1179
    %v1182 = vmul.f32 %v1164, %v1180
    %v1183 = vpack.c.bf16 %v1182, %v1182
    %1185 = vrot.lane.b32.xlu0 %v1145, 32
    %v1186 = vpop.permute.xlu0 %1185
    %s1188 = scalar_lea.vmem [#allocation4], 24
    %1189 = vst.msk [vmem:[%s1188] sm:$0xf] %vm372, %v1186
    %1191 = vrot.lane.b32.xlu0 %v1183, 32
    %v1192 = vpop.permute.xlu0 %1191
    %s1194 = scalar_lea.vmem [#allocation5], 4
    %1195 = vst.msk [vmem:[%s1194] sm:$0xf] %vm372, %v1192
    %s1196 = scalar_lea.vmem [#allocation2], 28
    %v1197 = vld [vmem:[%s1196] sm:$0xf]
    %v1198 = vunpack.c.l.bf16 %v1197
    %v1199 = vunpack.c.l.b16 %v1145
    %v1200 = vpack.c.b16 %v1199, %v1199
    %1201 = vrot.lane.b32.xlu0 %v1200, 32
    %v1202 = vpop.permute.xlu0 %1201
    %v1204 = vsel %vm101, %v1202, 0
    %1206 = vmatpush.bf16.msra.mxu0 0
    %1207 = vmatpush.bf16.msra.mxu0 0
    %1208 = vmatpush.bf16.msra.mxu0 0
    %1209 = vmatpush.bf16.msra.mxu0 0
    %1210 = vmatpush.bf16.msra.mxu0 0
    %1211 = vmatpush.bf16.msra.mxu0 0
    %1212 = vmatpush.bf16.msra.mxu0 %v243
    %1213 = vmatpush.bf16.msra.mxu0 %v242
    %1214 = vmatmul.bf16.gmra.mxu0 %v1204
    %v1215 = vpop.f32.mrf.mxu0
    %v1216 = vadd.f32 0.0, %v1215
    %v1217 = vpop.f32.mrf.mxu0
    %1218 = vdwg.mxu0
    %v1219 = vadd.f32 %v1198, %v1216
    %v1220 = vld [vmem:[#allocation3] sm:$0xf]
    %v1221 = vunpack.c.l.bf16 %v1220
    %v1222 = vunpack.c.l.b16 %v1183
    %v1223 = vpack.c.b16 %v1222, %v1222
    %1224 = vrot.lane.b32.xlu0 %v1223, 32
    %v1225 = vpop.permute.xlu0 %1224
    %v1227 = vsel %vm101, %v1225, 0
    %1229 = vmatpush.bf16.msra.mxu0 0
    %1230 = vmatpush.bf16.msra.mxu0 0
    %1231 = vmatpush.bf16.msra.mxu0 0
    %1232 = vmatpush.bf16.msra.mxu0 0
    %1233 = vmatpush.bf16.msra.mxu0 0
    %1234 = vmatpush.bf16.msra.mxu0 0
    %1235 = vmatpush.bf16.msra.mxu0 %v275
    %1236 = vmatpush.bf16.msra.mxu0 %v274
    %1237 = vmatmul.bf16.gmra.mxu0 %v1227
    %v1238 = vpop.f32.mrf.mxu0
    %v1239 = vadd.f32 0.0, %v1238
    %v1240 = vpop.f32.mrf.mxu0
    %1241 = vdwg.mxu0
    %v1242 = vadd.f32 %v1221, %v1239
    %v1243 = vxor.u32 %v1219, 2147483648
    %v1244 = vmul.f32 %v1243, 1.442695
    %v1245 = vpow.pop %v1244
    %v1246 = vadd.f32 %v1245, 1.0
    %v1247 = vrcp.pop %v1246
    %v1248 = vmul.f32 %v1246, %v1247
    %v1249 = vsub.f32 1.0, %v1248
    %v1250 = vmul.f32 %v1247, %v1249
    %v1251 = vadd.f32 %v1247, %v1250
    %vm1252 = vweird.f32 %v1246
    %vm1253 = vweird.f32 %v1247
    %vm1254 = vmor %vm1252, %vm1253
    %v1255 = vsel %vm1254, %v1247, %v1251
    %v1256 = vand.u32 2147483647, %v1246
    %vm1257 = vcmp.eq.f32.partialorder %v1256, 8.507059e+37
    %v1258 = vand.u32 %v1246, 2147483648
    %v1259 = vor.u32 1.1754944e-38, %v1258
    %v1260 = vsel %vm1257, %v1259, %v1255
    %v1261 = vmul.f32 1.0, %v1260
    %v1262 = vtanh.pop %v1219
    %v1263 = vmul.f32 %v1261, %v1138
    %1265 = vrot.lane.b32.xlu0 %v1262, 64
    %v1266 = vpop.permute.xlu0 %1265
    %v1268 = vmul.f32 %v1261, %v1266
    %1270 = vrot.lane.b32.xlu0 %v1268, 32
    %v1271 = vpop.permute.xlu0 %1270
    %v1273 = vadd.f32 %v1263, %v1271
    %v1274 = vtanh.pop %v1273
    %1276 = vrot.lane.b32.xlu0 %v1274, 64
    %v1277 = vpop.permute.xlu0 %1276
    %v1279 = vmul.f32 %v1261, %v1277
    %v1280 = vpack.c.bf16 %v1279, %v1279
    %v1281 = vxor.u32 %v1242, 2147483648
    %v1282 = vmul.f32 %v1281, 1.442695
    %v1283 = vpow.pop %v1282
    %v1284 = vadd.f32 %v1283, 1.0
    %v1285 = vrcp.pop %v1284
    %v1286 = vmul.f32 %v1284, %v1285
    %v1287 = vsub.f32 1.0, %v1286
    %v1288 = vmul.f32 %v1285, %v1287
    %v1289 = vadd.f32 %v1285, %v1288
    %vm1290 = vweird.f32 %v1284
    %vm1291 = vweird.f32 %v1285
    %vm1292 = vmor %vm1290, %vm1291
    %v1293 = vsel %vm1292, %v1285, %v1289
    %v1294 = vand.u32 2147483647, %v1284
    %vm1295 = vcmp.eq.f32.partialorder %v1294, 8.507059e+37
    %v1296 = vand.u32 %v1284, 2147483648
    %v1297 = vor.u32 1.1754944e-38, %v1296
    %v1298 = vsel %vm1295, %v1297, %v1293
    %v1299 = vmul.f32 1.0, %v1298
    %v1300 = vtanh.pop %v1242
    %v1301 = vmul.f32 %v1299, %v1176
    %1303 = vrot.lane.b32.xlu0 %v1300, 64
    %v1304 = vpop.permute.xlu0 %1303
    %v1306 = vmul.f32 %v1299, %v1304
    %1308 = vrot.lane.b32.xlu0 %v1306, 32
    %v1309 = vpop.permute.xlu0 %1308
    %v1311 = vadd.f32 %v1301, %v1309
    %v1312 = vtanh.pop %v1311
    %1314 = vrot.lane.b32.xlu0 %v1312, 64
    %v1315 = vpop.permute.xlu0 %1314
    %v1317 = vmul.f32 %v1299, %v1315
    %v1318 = vpack.c.bf16 %v1317, %v1317
    %1320 = vrot.lane.b32.xlu0 %v1280, 32
    %v1321 = vpop.permute.xlu0 %1320
    %s1323 = scalar_lea.vmem [#allocation4], 28
    %1324 = vst.msk [vmem:[%s1323] sm:$0xf] %vm372, %v1321
    %1326 = vrot.lane.b32.xlu0 %v1318, 32
    %v1327 = vpop.permute.xlu0 %1326
    %1329 = vst.msk [vmem:[#allocation5] sm:$0xf] %vm372, %v1327
    %v1330 = vld [vmem:[#allocation4] sm:$0xf]
    %v1331 = vld [vmem:[#allocation4 + $0x4] sm:$0xf]
    %v1332 = vld [vmem:[#allocation4 + $0x8] sm:$0xf]
    %v1333 = vld [vmem:[#allocation4 + $0xc] sm:$0xf]
    %v1334 = vld [vmem:[#allocation4 + $0x10] sm:$0xf]
    %v1335 = vld [vmem:[#allocation4 + $0x14] sm:$0xf]
    %v1336 = vld [vmem:[#allocation4 + $0x18] sm:$0xf]
    %v1337 = vld [vmem:[#allocation4 + $0x1c] sm:$0xf]
    %v1338 = vld [vmem:[%s7] sm:$0xf]
    %v1339 = vld [vmem:[%s7 + $0x4] sm:$0xf]
    %v1340 = vld [vmem:[%s7 + $0x8] sm:$0xf]
    %v1341 = vld [vmem:[%s7 + $0xc] sm:$0xf]
    %v1342 = vld [vmem:[#allocation5] sm:$0xf]
    %v1343 = vld [vmem:[#allocation5 + $0x4] sm:$0xf]
    %v1344 = vld [vmem:[#allocation5 + $0x8] sm:$0xf]
    %v1345 = vld [vmem:[#allocation5 + $0xc] sm:$0xf]
    %v1346 = vld [vmem:[#allocation5 + $0x10] sm:$0xf]
    %v1347 = vld [vmem:[#allocation5 + $0x14] sm:$0xf]
    %v1348 = vld [vmem:[#allocation5 + $0x18] sm:$0xf]
    %v1349 = vld [vmem:[#allocation5 + $0x1c] sm:$0xf]
    %v1350 = vld [vmem:[%s8] sm:$0xf]
    %v1351 = vld [vmem:[%s8 + $0x4] sm:$0xf]
    %v1352 = vld [vmem:[%s8 + $0x8] sm:$0xf]
    %v1353 = vld [vmem:[%s8 + $0xc] sm:$0xf]
    %v1362 = vunpack.c.l.b16 %v1342
    %v1363 = vunpack.c.l.b16 %v1343
    %v1364 = vunpack.c.l.b16 %v1344
    %v1365 = vunpack.c.l.b16 %v1345
    %v1366 = vunpack.c.l.b16 %v1346
    %v1367 = vunpack.c.l.b16 %v1347
    %v1368 = vunpack.c.l.b16 %v1348
    %v1369 = vunpack.c.l.b16 %v1349
    %v1370 = vpack.c.b16 %v1363, %v1362
    %v1371 = vpack.c.b16 %v1365, %v1364
    %v1372 = vpack.c.b16 %v1367, %v1366
    %v1373 = vpack.c.b16 %v1369, %v1368
    %v1378 = vunpack.c.l.b16 %v1350
    %v1379 = vunpack.c.l.b16 %v1351
    %v1380 = vunpack.c.l.b16 %v1352
    %v1381 = vunpack.c.l.b16 %v1353
    %v1382 = vpack.c.b16 %v1379, %v1378
    %v1383 = vpack.c.b16 %v1381, %v1380
    %v1387 = vsel %vm101, %v1370, 0
    %v1390 = vsel %vm101, %v1371, 0
    %v1393 = vsel %vm101, %v1372, 0
    %v1396 = vsel %vm101, %v1373, 0
    %1398 = vmatpush.bf16.msra.mxu0 0
    %1399 = vmatpush.bf16.msra.mxu0 0
    %1400 = vmatpush.bf16.msra.mxu0 0
    %1401 = vmatpush.bf16.msra.mxu0 0
    %1402 = vmatpush.bf16.msra.mxu0 0
    %1403 = vmatpush.bf16.msra.mxu0 0
    %1404 = vmatpush.bf16.msra.mxu0 %v1383
    %1405 = vmatpush.bf16.msra.mxu0 %v1382
    %1406 = vmatmul.bf16.gmra.mxu0 %v1387
    %v1407 = vpop.f32.mrf.mxu0
    %v1408 = vadd.f32 0.0, %v1407
    %v1409 = vpop.f32.mrf.mxu0
    %v1410 = vadd.f32 0.0, %v1409
    %1411 = vmatmul.bf16.gmra.mxu0 %v1390
    %v1412 = vpop.f32.mrf.mxu0
    %v1413 = vadd.f32 0.0, %v1412
    %v1414 = vpop.f32.mrf.mxu0
    %v1415 = vadd.f32 0.0, %v1414
    %1416 = vmatmul.bf16.gmra.mxu0 %v1393
    %v1417 = vpop.f32.mrf.mxu0
    %v1418 = vadd.f32 0.0, %v1417
    %v1419 = vpop.f32.mrf.mxu0
    %v1420 = vadd.f32 0.0, %v1419
    %1421 = vmatmul.bf16.gmra.mxu0 %v1396
    %v1422 = vpop.f32.mrf.mxu0
    %v1423 = vadd.f32 0.0, %v1422
    %v1424 = vpop.f32.mrf.mxu0
    %v1425 = vadd.f32 0.0, %v1424
    %1426 = vdwg.mxu0
    %v1435 = vunpack.c.l.b16 %v1330
    %v1436 = vunpack.c.l.b16 %v1331
    %v1437 = vunpack.c.l.b16 %v1332
    %v1438 = vunpack.c.l.b16 %v1333
    %v1439 = vunpack.c.l.b16 %v1334
    %v1440 = vunpack.c.l.b16 %v1335
    %v1441 = vunpack.c.l.b16 %v1336
    %v1442 = vunpack.c.l.b16 %v1337
    %v1443 = vpack.c.b16 %v1436, %v1435
    %v1444 = vpack.c.b16 %v1438, %v1437
    %v1445 = vpack.c.b16 %v1440, %v1439
    %v1446 = vpack.c.b16 %v1442, %v1441
    %v1451 = vunpack.c.l.b16 %v1338
    %v1452 = vunpack.c.l.b16 %v1339
    %v1453 = vunpack.c.l.b16 %v1340
    %v1454 = vunpack.c.l.b16 %v1341
    %v1455 = vpack.c.b16 %v1452, %v1451
    %v1456 = vpack.c.b16 %v1454, %v1453
    %v1460 = vsel %vm101, %v1443, 0
    %v1463 = vsel %vm101, %v1444, 0
    %v1466 = vsel %vm101, %v1445, 0
    %v1469 = vsel %vm101, %v1446, 0
    %1471 = vmatpush.bf16.msra.mxu0 0
    %1472 = vmatpush.bf16.msra.mxu0 0
    %1473 = vmatpush.bf16.msra.mxu0 0
    %1474 = vmatpush.bf16.msra.mxu0 0
    %1475 = vmatpush.bf16.msra.mxu0 0
    %1476 = vmatpush.bf16.msra.mxu0 0
    %1477 = vmatpush.bf16.msra.mxu0 %v1456
    %1478 = vmatpush.bf16.msra.mxu0 %v1455
    %1479 = vmatmul.bf16.gmra.mxu0 %v1460
    %v1480 = vpop.f32.mrf.mxu0
    %v1481 = vadd.f32 %v1408, %v1480
    %v1482 = vpop.f32.mrf.mxu0
    %v1483 = vadd.f32 %v1410, %v1482
    %1484 = vmatmul.bf16.gmra.mxu0 %v1463
    %v1485 = vpop.f32.mrf.mxu0
    %v1486 = vadd.f32 %v1413, %v1485
    %v1487 = vpop.f32.mrf.mxu0
    %v1488 = vadd.f32 %v1415, %v1487
    %1489 = vmatmul.bf16.gmra.mxu0 %v1466
    %v1490 = vpop.f32.mrf.mxu0
    %v1491 = vadd.f32 %v1418, %v1490
    %v1492 = vpop.f32.mrf.mxu0
    %v1493 = vadd.f32 %v1420, %v1492
    %1494 = vmatmul.bf16.gmra.mxu0 %v1469
    %v1495 = vpop.f32.mrf.mxu0
    %v1496 = vadd.f32 %v1423, %v1495
    %v1497 = vpop.f32.mrf.mxu0
    %v1498 = vadd.f32 %v1425, %v1497
    %1499 = vdwg.mxu0
    %v1500 = vld [vmem:[%s9] sm:$0x1]
    %v1502 = vperm.slane %v1500, 0
    %v1504 = vadd.f32 %v1481, %v1502
    %v1505 = vadd.f32 %v1483, %v1502
    %v1506 = vadd.f32 %v1486, %v1502
    %v1507 = vadd.f32 %v1488, %v1502
    %v1508 = vadd.f32 %v1491, %v1502
    %v1509 = vadd.f32 %v1493, %v1502
    %v1510 = vadd.f32 %v1496, %v1502
    %v1511 = vadd.f32 %v1498, %v1502
    %vm1512 = vcmask 130048
    %1513 = vst.msk [vmem:[#allocation11] sm:$0xff] %vm1512, %v1504
    %1514 = vst.msk [vmem:[#allocation11 + $0x8] sm:$0xff] %vm1512, %v1505
    %1515 = vst.msk [vmem:[#allocation11 + $0x10] sm:$0xff] %vm1512, %v1506
    %1516 = vst.msk [vmem:[#allocation11 + $0x18] sm:$0xff] %vm1512, %v1507
    %1517 = vst.msk [vmem:[#allocation11 + $0x20] sm:$0xff] %vm1512, %v1508
    %1518 = vst.msk [vmem:[#allocation11 + $0x28] sm:$0xff] %vm1512, %v1509
    %1519 = vst.msk [vmem:[#allocation11 + $0x30] sm:$0xff] %vm1512, %v1510
    %1520 = vst.msk [vmem:[#allocation11 + $0x38] sm:$0xff] %vm1512, %v1511
    // Predicated region
    $region50: #{tpu_custom_call.1} parent=1 // pred_check
      _
    $region51: #{tpu_custom_call.1} parent=1 // pred_check_branch
      %1522 = sbr.rel (0) target = $region53
    $region52: #{tpu_custom_call.1} parent=1 // pred_region
      %1524 = vsyncadd [#allocation8], 0
      %s1525 = sshll.u32 [#allocation11], 4
      %s1526 = int_to_ptr.vmem [resolvable:$true] %s1525
      %s1527 = sshll.u32 %s10, 4
      %s1528 = int_to_ptr.hbm [resolvable:$true] %s1527
      %1533 = dma.vmem_to_hbm [thread:$0]  %s1526, 1024, %s1528, [#allocation8], 128, 128, 8
    $region53: #{tpu_custom_call.1} parent=1 // pred_fallthru
      _
    // Predicated region
    $region54: #{tpu_custom_call.1} parent=1 // pred_check
      _
    $region55: #{tpu_custom_call.1} parent=1 // pred_check_branch
      %1535 = sbr.rel (0) target = $region57
    $region56: #{tpu_custom_call.1} parent=1 // pred_region
      %1537 = dma.done [#allocation8], 1024
    $region57: #{tpu_custom_call.1} parent=1 // pred_fallthru
      _
    %1538 = vsyncpa [#allocation7], 1
    %1539 = vsyncpa [#allocation10], 1
    %1540 = vsyncpa [#allocation8], 1

// kernel: tpu_custom_call.1
$region0: #{tpu_custom_call.1}
  #allocation0 [shape = 'u32[]', space=smem, size = 0x4, offset = 0x4, fixed_abs, tag = 'smem constant byte address 0x4 - core index']
  #allocation1 [shape = 'u32[72,128]{1,0:T(1,128)}', space=vmem, size = 0x9000, scoped, tag = 'internal scratch']
  #allocation2 [shape = 'bf16[8,8,128]{2,1,0:T(8,128)(2,1)}', space=vmem, size = 0x4000, scoped, tag = 'scratch operand']
  #allocation3 [shape = 'bf16[8,8,128]{2,1,0:T(8,128)(2,1)}', space=vmem, size = 0x4000, scoped, tag = 'scratch operand']
  #allocation4 [shape = 'bf16[8,8,32]{2,1,0:T(8,128)(2,1)}', space=vmem, size = 0x4000, scoped, tag = 'scratch operand']
  #allocation5 [shape = 'bf16[8,8,32]{2,1,0:T(8,128)(2,1)}', space=vmem, size = 0x4000, scoped, tag = 'scratch operand']
  %s0 = inlined_call_operand.hbm [shape: f32[8,8,32], index: 0, kind: input, shape index: {}]
  %s1 = inlined_call_operand.vmem [shape: bf16[32,128], index: 1, kind: input, shape index: {}]
  %s2 = inlined_call_operand.vmem [shape: bf16[32,128], index: 2, kind: input, shape index: {}]
  %s3 = inlined_call_operand.vmem [shape: f32[1,128], index: 3, kind: input, shape index: {}]
  %s4 = inlined_call_operand.vmem [shape: f32[1,128], index: 4, kind: input, shape index: {}]
  %s5 = inlined_call_operand.vmem [shape: bf16[32,128], index: 5, kind: input, shape index: {}]
  %s6 = inlined_call_operand.hbm [shape: bf16[32,128], index: 6, kind: input, shape index: {}]
  %s7 = inlined_call_operand.vmem [shape: bf16[32,16], index: 7, kind: input, shape index: {}]
  %s8 = inlined_call_operand.vmem [shape: bf16[32,16], index: 8, kind: input, shape index: {}]
  %s9 = inlined_call_operand.vmem [shape: f32[1,16], index: 9, kind: input, shape index: {}]
  %s10 = inlined_call_operand.hbm [shape: f32[8,8,16], index: 10, kind: output, shape index: {}]
  %s11 = sld [smem:[#allocation0]]
  $region58: #{tpu_custom_call.1} parent=0
    _
  %s13 = ssub.s32 1, %s11
  %s14 = scalar_select 0, %s13, %s11
  $region1: #{tpu_custom_call.1} parent=0
    #allocation6 [shape = 'u8[32768]{0}', space=vmem, size = 0x8000, scoped, tag = 'input window, operand 0, single buffered']
    #allocation7 [shape = 's32[1]{0}', space=sflag, size = 0x4, scoped, tag = 'scoped memory for tpu_custom_call.1']
    #allocation8 [shape = 's32[1]{0}', space=sflag, size = 0x4, scoped, tag = 'scoped memory for tpu_custom_call.1']
    #allocation9 [shape = 'u8[8192]{0}', space=vmem, size = 0x2000, scoped, tag = 'input window, operand 6, single buffered']
    #allocation10 [shape = 's32[1]{0}', space=sflag, size = 0x4, scoped, tag = 'scoped memory for tpu_custom_call.1']
    #allocation11 [shape = 'u8[32768]{0}', space=vmem, size = 0x8000, scoped, tag = 'output window, operand 0, single buffered']
    %15 = vsyncpa [#allocation7], 0
    %16 = vsyncpa [#allocation10], 0
    %17 = vsyncpa [#allocation8], 0
    // Predicated region
    $region2: #{tpu_custom_call.1} parent=1 // pred_check
      _
    $region3: #{tpu_custom_call.1} parent=1 // pred_check_branch
      %19 = sbr.rel (0) target = $region5
    $region4: #{tpu_custom_call.1} parent=1 // pred_region
      %21 = vsyncadd [#allocation7], 0
      %s22 = sshll.u32 %s0, 4
      %s23 = int_to_ptr.hbm [resolvable:$true] %s22
      %s24 = sshll.u32 [#allocation6], 4
      %s25 = int_to_ptr.vmem [resolvable:$true] %s24
      %30 = dma.hbm_to_vmem [thread:$0]  %s23, 1024, %s25, [#allocation7], 128, 128, 8
    $region5: #{tpu_custom_call.1} parent=1 // pred_fallthru
      _
    // Predicated region
    $region6: #{tpu_custom_call.1} parent=1 // pred_check
      _
    $region7: #{tpu_custom_call.1} parent=1 // pred_check_branch
      %32 = sbr.rel (0) target = $region9
    $region8: #{tpu_custom_call.1} parent=1 // pred_region
      _
    $region9: #{tpu_custom_call.1} parent=1 // pred_fallthru
      _
    // Predicated region
    $region10: #{tpu_custom_call.1} parent=1 // pred_check
      _
    $region11: #{tpu_custom_call.1} parent=1 // pred_check_branch
      %34 = sbr.rel (0) target = $region13
    $region12: #{tpu_custom_call.1} parent=1 // pred_region
      _
    $region13: #{tpu_custom_call.1} parent=1 // pred_fallthru
      _
    // Predicated region
    $region14: #{tpu_custom_call.1} parent=1 // pred_check
      _
    $region15: #{tpu_custom_call.1} parent=1 // pred_check_branch
      %36 = sbr.rel (0) target = $region17
    $region16: #{tpu_custom_call.1} parent=1 // pred_region
      _
    $region17: #{tpu_custom_call.1} parent=1 // pred_fallthru
      _
    // Predicated region
    $region18: #{tpu_custom_call.1} parent=1 // pred_check
      _
    $region19: #{tpu_custom_call.1} parent=1 // pred_check_branch
      %38 = sbr.rel (0) target = $region21
    $region20: #{tpu_custom_call.1} parent=1 // pred_region
      _
    $region21: #{tpu_custom_call.1} parent=1 // pred_fallthru
      _
    // Predicated region
    $region22: #{tpu_custom_call.1} parent=1 // pred_check
      _
    $region23: #{tpu_custom_call.1} parent=1 // pred_check_branch
      %40 = sbr.rel (0) target = $region25
    $region24: #{tpu_custom_call.1} parent=1 // pred_region
      _
    $region25: #{tpu_custom_call.1} parent=1 // pred_fallthru
      _
    // Predicated region
    $region26: #{tpu_custom_call.1} parent=1 // pred_check
      _
    $region27: #{tpu_custom_call.1} parent=1 // pred_check_branch
      %42 = sbr.rel (0) target = $region29
    $region28: #{tpu_custom_call.1} parent=1 // pred_region
      %44 = vsyncadd [#allocation10], 0
      %s45 = sshll.u32 %s6, 4
      %s46 = int_to_ptr.hbm [resolvable:$true] %s45
      %s47 = sshll.u32 [#allocation9], 4
      %s48 = int_to_ptr.vmem [resolvable:$true] %s47
      %53 = dma.hbm_to_vmem [thread:$0]  %s46, 256, %s48, [#allocation10], 64, 64, 4
    $region29: #{tpu_custom_call.1} parent=1 // pred_fallthru
      _
    // Predicated region
    $region30: #{tpu_custom_call.1} parent=1 // pred_check
      _
    $region31: #{tpu_custom_call.1} parent=1 // pred_check_branch
      %55 = sbr.rel (0) target = $region33
    $region32: #{tpu_custom_call.1} parent=1 // pred_region
      _
    $region33: #{tpu_custom_call.1} parent=1 // pred_fallthru
      _
    // Predicated region
    $region34: #{tpu_custom_call.1} parent=1 // pred_check
      _
    $region35: #{tpu_custom_call.1} parent=1 // pred_check_branch
      %57 = sbr.rel (0) target = $region37
    $region36: #{tpu_custom_call.1} parent=1 // pred_region
      _
    $region37: #{tpu_custom_call.1} parent=1 // pred_fallthru
      _
    // Predicated region
    $region38: #{tpu_custom_call.1} parent=1 // pred_check
      _
    $region39: #{tpu_custom_call.1} parent=1 // pred_check_branch
      %59 = sbr.rel (0) target = $region41
    $region40: #{tpu_custom_call.1} parent=1 // pred_region
      _
    $region41: #{tpu_custom_call.1} parent=1 // pred_fallthru
      _
    // Predicated region
    $region42: #{tpu_custom_call.1} parent=1 // pred_check
      _
    $region43: #{tpu_custom_call.1} parent=1 // pred_check_branch
      %61 = sbr.rel (0) target = $region45
    $region44: #{tpu_custom_call.1} parent=1 // pred_region
      %63 = dma.done [#allocation7], 1024
    $region45: #{tpu_custom_call.1} parent=1 // pred_fallthru
      _
    // Predicated region
    $region46: #{tpu_custom_call.1} parent=1 // pred_check
      _
    $region47: #{tpu_custom_call.1} parent=1 // pred_check_branch
      %65 = sbr.rel (0) target = $region49
    $region48: #{tpu_custom_call.1} parent=1 // pred_region
      %67 = dma.done [#allocation10], 256
    $region49: #{tpu_custom_call.1} parent=1 // pred_fallthru
      _
    %v69 = vld [vmem:[#allocation6] sm:$0xff]
    %v70 = vld [vmem:[#allocation6 + $0x8] sm:$0xff]
    %v71 = vld [vmem:[#allocation6 + $0x10] sm:$0xff]
    %v72 = vld [vmem:[#allocation6 + $0x18] sm:$0xff]
    %v73 = vld [vmem:[#allocation6 + $0x20] sm:$0xff]
    %v74 = vld [vmem:[#allocation6 + $0x28] sm:$0xff]
    %v75 = vld [vmem:[#allocation6 + $0x30] sm:$0xff]
    %v76 = vld [vmem:[#allocation6 + $0x38] sm:$0xff]
    %v77 = vpack.c.bf16 %v70, %v69
    %v78 = vpack.c.bf16 %v72, %v71
    %v79 = vpack.c.bf16 %v74, %v73
    %v80 = vpack.c.bf16 %v76, %v75
    %v81 = vld [vmem:[%s1] sm:$0xf]
    %v82 = vld [vmem:[%s1 + $0x4] sm:$0xf]
    %v83 = vld [vmem:[%s1 + $0x8] sm:$0xf]
    %v84 = vld [vmem:[%s1 + $0xc] sm:$0xf]
    %v85 = vld [vmem:[%s3] sm:$0x1]
    %v87 = vperm.slane %v85, 0
    %v93 = vunpack.c.l.b16 %v81
    %v94 = vunpack.c.l.b16 %v82
    %v95 = vunpack.c.l.b16 %v83
    %v96 = vunpack.c.l.b16 %v84
    %v97 = vpack.c.b16 %v94, %v93
    %v98 = vpack.c.b16 %v96, %v95
    %vm101 = vcmask 261120
    %v103 = vsel %vm101, %v77, 0
    %v106 = vsel %vm101, %v78, 0
    %v109 = vsel %vm101, %v79, 0
    %v112 = vsel %vm101, %v80, 0
    %114 = vmatpush.bf16.msra.mxu0 0
    %115 = vmatpush.bf16.msra.mxu0 0
    %116 = vmatpush.bf16.msra.mxu0 0
    %117 = vmatpush.bf16.msra.mxu0 0
    %118 = vmatpush.bf16.msra.mxu0 0
    %119 = vmatpush.bf16.msra.mxu0 0
    %120 = vmatpush.bf16.msra.mxu0 %v98
    %121 = vmatpush.bf16.msra.mxu0 %v97
    %122 = vmatmul.bf16.gmra.mxu0 %v103
    %v123 = vpop.f32.mrf.mxu0
    %v124 = vadd.f32 %v87, %v123
    %v125 = vpop.f32.mrf.mxu0
    %v126 = vadd.f32 %v87, %v125
    %127 = vmatmul.bf16.gmra.mxu0 %v106
    %v128 = vpop.f32.mrf.mxu0
    %v129 = vadd.f32 %v87, %v128
    %v130 = vpop.f32.mrf.mxu0
    %v131 = vadd.f32 %v87, %v130
    %132 = vmatmul.bf16.gmra.mxu0 %v109
    %v133 = vpop.f32.mrf.mxu0
    %v134 = vadd.f32 %v87, %v133
    %v135 = vpop.f32.mrf.mxu0
    %v136 = vadd.f32 %v87, %v135
    %137 = vmatmul.bf16.gmra.mxu0 %v112
    %v138 = vpop.f32.mrf.mxu0
    %v139 = vadd.f32 %v87, %v138
    %v140 = vpop.f32.mrf.mxu0
    %v141 = vadd.f32 %v87, %v140
    %142 = vdwg.mxu0
    %v143 = vpack.c.bf16 %v124, %v124
    %v144 = vpack.c.bf16 %v126, %v126
    %v145 = vpack.c.bf16 %v129, %v129
    %v146 = vpack.c.bf16 %v131, %v131
    %v147 = vpack.c.bf16 %v134, %v134
    %v148 = vpack.c.bf16 %v136, %v136
    %v149 = vpack.c.bf16 %v139, %v139
    %v150 = vpack.c.bf16 %v141, %v141
    %151 = vst [vmem:[#allocation2] sm:$0xf] %v143
    %152 = vst [vmem:[#allocation2 + $0x4] sm:$0xf] %v144
    %153 = vst [vmem:[#allocation2 + $0x8] sm:$0xf] %v145
    %154 = vst [vmem:[#allocation2 + $0xc] sm:$0xf] %v146
    %155 = vst [vmem:[#allocation2 + $0x10] sm:$0xf] %v147
    %156 = vst [vmem:[#allocation2 + $0x14] sm:$0xf] %v148
    %157 = vst [vmem:[#allocation2 + $0x18] sm:$0xf] %v149
    %158 = vst [vmem:[#allocation2 + $0x1c] sm:$0xf] %v150
    %v159 = vld [vmem:[%s2] sm:$0xf]
    %v160 = vld [vmem:[%s2 + $0x4] sm:$0xf]
    %v161 = vld [vmem:[%s2 + $0x8] sm:$0xf]
    %v162 = vld [vmem:[%s2 + $0xc] sm:$0xf]
    %v163 = vld [vmem:[%s4] sm:$0x1]
    %v165 = vperm.slane %v163, 0
    %v171 = vunpack.c.l.b16 %v159
    %v172 = vunpack.c.l.b16 %v160
    %v173 = vunpack.c.l.b16 %v161
    %v174 = vunpack.c.l.b16 %v162
    %v175 = vpack.c.b16 %v172, %v171
    %v176 = vpack.c.b16 %v174, %v173
    %179 = vmatpush.bf16.msra.mxu0 0
    %180 = vmatpush.bf16.msra.mxu0 0
    %181 = vmatpush.bf16.msra.mxu0 0
    %182 = vmatpush.bf16.msra.mxu0 0
    %183 = vmatpush.bf16.msra.mxu0 0
    %184 = vmatpush.bf16.msra.mxu0 0
    %185 = vmatpush.bf16.msra.mxu0 %v176
    %186 = vmatpush.bf16.msra.mxu0 %v175
    %187 = vmatmul.bf16.gmra.mxu0 %v103
    %v188 = vpop.f32.mrf.mxu0
    %v189 = vadd.f32 %v165, %v188
    %v190 = vpop.f32.mrf.mxu0
    %v191 = vadd.f32 %v165, %v190
    %192 = vmatmul.bf16.gmra.mxu0 %v106
    %v193 = vpop.f32.mrf.mxu0
    %v194 = vadd.f32 %v165, %v193
    %v195 = vpop.f32.mrf.mxu0
    %v196 = vadd.f32 %v165, %v195
    %197 = vmatmul.bf16.gmra.mxu0 %v109
    %v198 = vpop.f32.mrf.mxu0
    %v199 = vadd.f32 %v165, %v198
    %v200 = vpop.f32.mrf.mxu0
    %v201 = vadd.f32 %v165, %v200
    %202 = vmatmul.bf16.gmra.mxu0 %v112
    %v203 = vpop.f32.mrf.mxu0
    %v204 = vadd.f32 %v165, %v203
    %v205 = vpop.f32.mrf.mxu0
    %v206 = vadd.f32 %v165, %v205
    %207 = vdwg.mxu0
    %v208 = vpack.c.bf16 %v189, %v189
    %v209 = vpack.c.bf16 %v191, %v191
    %v210 = vpack.c.bf16 %v194, %v194
    %v211 = vpack.c.bf16 %v196, %v196
    %v212 = vpack.c.bf16 %v199, %v199
    %v213 = vpack.c.bf16 %v201, %v201
    %v214 = vpack.c.bf16 %v204, %v204
    %v215 = vpack.c.bf16 %v206, %v206
    %216 = vst [vmem:[#allocation3] sm:$0xf] %v208
    %217 = vst [vmem:[#allocation3 + $0x4] sm:$0xf] %v209
    %218 = vst [vmem:[#allocation3 + $0x8] sm:$0xf] %v210
    %219 = vst [vmem:[#allocation3 + $0xc] sm:$0xf] %v211
    %220 = vst [vmem:[#allocation3 + $0x10] sm:$0xf] %v212
    %221 = vst [vmem:[#allocation3 + $0x14] sm:$0xf] %v213
    %222 = vst [vmem:[#allocation3 + $0x18] sm:$0xf] %v214
    %223 = vst [vmem:[#allocation3 + $0x1c] sm:$0xf] %v215
    %v224 = vld [vmem:[%s5] sm:$0xf]
    %v225 = vld [vmem:[%s5 + $0x4] sm:$0xf]
    %v226 = vld [vmem:[%s5 + $0x8] sm:$0xf]
    %v227 = vld [vmem:[%s5 + $0xc] sm:$0xf]
    %v228 = vld [vmem:[#allocation9] sm:$0xf]
    %v229 = vld [vmem:[#allocation9 + $0x4] sm:$0xf]
    %v230 = vld [vmem:[#allocation9 + $0x8] sm:$0xf]
    %v231 = vld [vmem:[#allocation9 + $0xc] sm:$0xf]
    %v232 = vld [vmem:[#allocation2] sm:$0xf]
    %v233 = vunpack.c.l.bf16 %v232
    %v238 = vunpack.c.l.b16 %v224
    %v239 = vunpack.c.l.b16 %v225
    %v240 = vunpack.c.l.b16 %v226
    %v241 = vunpack.c.l.b16 %v227
    %v242 = vpack.c.b16 %v239, %v238
    %v243 = vpack.c.b16 %v241, %v240
    %v247 = vsel %vm101, 0, 0
    %249 = vmatpush.bf16.msra.mxu0 0
    %250 = vmatpush.bf16.msra.mxu0 0
    %251 = vmatpush.bf16.msra.mxu0 0
    %252 = vmatpush.bf16.msra.mxu0 0
    %253 = vmatpush.bf16.msra.mxu0 0
    %254 = vmatpush.bf16.msra.mxu0 0
    %255 = vmatpush.bf16.msra.mxu0 %v243
    %256 = vmatpush.bf16.msra.mxu0 %v242
    %257 = vmatmul.bf16.gmra.mxu0 %v247
    %v258 = vpop.f32.mrf.mxu0
    %v259 = vadd.f32 0.0, %v258
    %v260 = vpop.f32.mrf.mxu0
    %261 = vdwg.mxu0
    %v262 = vadd.f32 %v233, %v259
    %s263 = scalar_lea.vmem [#allocation3], 28
    %v264 = vld [vmem:[%s263] sm:$0xf]
    %v265 = vunpack.c.l.bf16 %v264
    %v270 = vunpack.c.l.b16 %v228
    %v271 = vunpack.c.l.b16 %v229
    %v272 = vunpack.c.l.b16 %v230
    %v273 = vunpack.c.l.b16 %v231
    %v274 = vpack.c.b16 %v271, %v270
    %v275 = vpack.c.b16 %v273, %v272
    %278 = vmatpush.bf16.msra.mxu0 0
    %279 = vmatpush.bf16.msra.mxu0 0
    %280 = vmatpush.bf16.msra.mxu0 0
    %281 = vmatpush.bf16.msra.mxu0 0
    %282 = vmatpush.bf16.msra.mxu0 0
    %283 = vmatpush.bf16.msra.mxu0 0
    %284 = vmatpush.bf16.msra.mxu0 %v275
    %285 = vmatpush.bf16.msra.mxu0 %v274
    %286 = vmatmul.bf16.gmra.mxu0 %v247
    %v287 = vpop.f32.mrf.mxu0
    %v288 = vadd.f32 0.0, %v287
    %v289 = vpop.f32.mrf.mxu0
    %290 = vdwg.mxu0
    %v291 = vadd.f32 %v265, %v288
    %v292 = vxor.u32 %v262, 2147483648
    %v293 = vmul.f32 %v292, 1.442695
    %v294 = vpow.pop %v293
    %v295 = vadd.f32 %v294, 1.0
    %v296 = vrcp.pop %v295
    %v297 = vmul.f32 %v295, %v296
    %v298 = vsub.f32 1.0, %v297
    %v299 = vmul.f32 %v296, %v298
    %v300 = vadd.f32 %v296, %v299
    %vm301 = vweird.f32 %v295
    %vm302 = vweird.f32 %v296
    %vm303 = vmor %vm301, %vm302
    %v304 = vsel %vm303, %v296, %v300
    %v305 = vand.u32 2147483647, %v295
    %vm306 = vcmp.eq.f32.partialorder %v305, 8.507059e+37
    %v307 = vand.u32 %v295, 2147483648
    %v308 = vor.u32 1.1754944e-38, %v307
    %v309 = vsel %vm306, %v308, %v304
    %v310 = vmul.f32 1.0, %v309
    %v311 = vtanh.pop %v262
    %v312 = vmul.f32 %v310, 0.0
    %314 = vrot.lane.b32.xlu0 %v311, 64
    %v315 = vpop.permute.xlu0 %314
    %v317 = vmul.f32 %v310, %v315
    %319 = vrot.lane.b32.xlu0 %v317, 32
    %v320 = vpop.permute.xlu0 %319
    %v322 = vadd.f32 %v312, %v320
    %v323 = vtanh.pop %v322
    %325 = vrot.lane.b32.xlu0 %v323, 64
    %v326 = vpop.permute.xlu0 %325
    %v328 = vmul.f32 %v310, %v326
    %v329 = vpack.c.bf16 %v328, %v328
    %v330 = vxor.u32 %v291, 2147483648
    %v331 = vmul.f32 %v330, 1.442695
    %v332 = vpow.pop %v331
    %v333 = vadd.f32 %v332, 1.0
    %v334 = vrcp.pop %v333
    %v335 = vmul.f32 %v333, %v334
    %v336 = vsub.f32 1.0, %v335
    %v337 = vmul.f32 %v334, %v336
    %v338 = vadd.f32 %v334, %v337
    %vm339 = vweird.f32 %v333
    %vm340 = vweird.f32 %v334
    %vm341 = vmor %vm339, %vm340
    %v342 = vsel %vm341, %v334, %v338
    %v343 = vand.u32 2147483647, %v333
    %vm344 = vcmp.eq.f32.partialorder %v343, 8.507059e+37
    %v345 = vand.u32 %v333, 2147483648
    %v346 = vor.u32 1.1754944e-38, %v345
    %v347 = vsel %vm344, %v346, %v342
    %v348 = vmul.f32 1.0, %v347
    %v349 = vtanh.pop %v291
    %v350 = vmul.f32 %v348, 0.0
    %352 = vrot.lane.b32.xlu0 %v349, 64
    %v353 = vpop.permute.xlu0 %352
    %v355 = vmul.f32 %v348, %v353
    %357 = vrot.lane.b32.xlu0 %v355, 32
    %v358 = vpop.permute.xlu0 %357
    %v360 = vadd.f32 %v350, %v358
    %v361 = vtanh.pop %v360
    %363 = vrot.lane.b32.xlu0 %v361, 64
    %v364 = vpop.permute.xlu0 %363
    %v366 = vmul.f32 %v348, %v364
    %v367 = vpack.c.bf16 %v366, %v366
    %369 = vrot.lane.b32.xlu0 %v329, 32
    %v370 = vpop.permute.xlu0 %369
    %vm372 = vcmask 257024
    %373 = vst.msk [vmem:[#allocation4] sm:$0xf] %vm372, %v370
    %375 = vrot.lane.b32.xlu0 %v367, 32
    %v376 = vpop.permute.xlu0 %375
    %s378 = scalar_lea.vmem [#allocation5], 28
    %379 = vst.msk [vmem:[%s378] sm:$0xf] %vm372, %v376
    %s380 = scalar_lea.vmem [#allocation2], 4
    %v381 = vld [vmem:[%s380] sm:$0xf]
    %v382 = vunpack.c.l.bf16 %v381
    %v383 = vunpack.c.l.b16 %v329
    %v384 = vpack.c.b16 %v383, %v383
    %385 = vrot.lane.b32.xlu0 %v384, 32
    %v386 = vpop.permute.xlu0 %385
    %v388 = vsel %vm101, %v386, 0
    %390 = vmatpush.bf16.msra.mxu0 0
    %391 = vmatpush.bf16.msra.mxu0 0
    %392 = vmatpush.bf16.msra.mxu0 0
    %393 = vmatpush.bf16.msra.mxu0 0
    %394 = vmatpush.bf16.msra.mxu0 0
    %395 = vmatpush.bf16.msra.mxu0 0
    %396 = vmatpush.bf16.msra.mxu0 %v243
    %397 = vmatpush.bf16.msra.mxu0 %v242
    %398 = vmatmul.bf16.gmra.mxu0 %v388
    %v399 = vpop.f32.mrf.mxu0
    %v400 = vadd.f32 0.0, %v399
    %v401 = vpop.f32.mrf.mxu0
    %402 = vdwg.mxu0
    %v403 = vadd.f32 %v382, %v400
    %s404 = scalar_lea.vmem [#allocation3], 24
    %v405 = vld [vmem:[%s404] sm:$0xf]
    %v406 = vunpack.c.l.bf16 %v405
    %v407 = vunpack.c.l.b16 %v367
    %v408 = vpack.c.b16 %v407, %v407
    %409 = vrot.lane.b32.xlu0 %v408, 32
    %v410 = vpop.permute.xlu0 %409
    %v412 = vsel %vm101, %v410, 0
    %414 = vmatpush.bf16.msra.mxu0 0
    %415 = vmatpush.bf16.msra.mxu0 0
    %416 = vmatpush.bf16.msra.mxu0 0
    %417 = vmatpush.bf16.msra.mxu0 0
    %418 = vmatpush.bf16.msra.mxu0 0
    %419 = vmatpush.bf16.msra.mxu0 0
    %420 = vmatpush.bf16.msra.mxu0 %v275
    %421 = vmatpush.bf16.msra.mxu0 %v274
    %422 = vmatmul.bf16.gmra.mxu0 %v412
    %v423 = vpop.f32.mrf.mxu0
    %v424 = vadd.f32 0.0, %v423
    %v425 = vpop.f32.mrf.mxu0
    %426 = vdwg.mxu0
    %v427 = vadd.f32 %v406, %v424
    %v428 = vxor.u32 %v403, 2147483648
    %v429 = vmul.f32 %v428, 1.442695
    %v430 = vpow.pop %v429
    %v431 = vadd.f32 %v430, 1.0
    %v432 = vrcp.pop %v431
    %v433 = vmul.f32 %v431, %v432
    %v434 = vsub.f32 1.0, %v433
    %v435 = vmul.f32 %v432, %v434
    %v436 = vadd.f32 %v432, %v435
    %vm437 = vweird.f32 %v431
    %vm438 = vweird.f32 %v432
    %vm439 = vmor %vm437, %vm438
    %v440 = vsel %vm439, %v432, %v436
    %v441 = vand.u32 2147483647, %v431
    %vm442 = vcmp.eq.f32.partialorder %v441, 8.507059e+37
    %v443 = vand.u32 %v431, 2147483648
    %v444 = vor.u32 1.1754944e-38, %v443
    %v445 = vsel %vm442, %v444, %v440
    %v446 = vmul.f32 1.0, %v445
    %v447 = vtanh.pop %v403
    %v448 = vmul.f32 %v446, %v322
    %450 = vrot.lane.b32.xlu0 %v447, 64
    %v451 = vpop.permute.xlu0 %450
    %v453 = vmul.f32 %v446, %v451
    %455 = vrot.lane.b32.xlu0 %v453, 32
    %v456 = vpop.permute.xlu0 %455
    %v458 = vadd.f32 %v448, %v456
    %v459 = vtanh.pop %v458
    %461 = vrot.lane.b32.xlu0 %v459, 64
    %v462 = vpop.permute.xlu0 %461
    %v464 = vmul.f32 %v446, %v462
    %v465 = vpack.c.bf16 %v464, %v464
    %v466 = vxor.u32 %v427, 2147483648
    %v467 = vmul.f32 %v466, 1.442695
    %v468 = vpow.pop %v467
    %v469 = vadd.f32 %v468, 1.0
    %v470 = vrcp.pop %v469
    %v471 = vmul.f32 %v469, %v470
    %v472 = vsub.f32 1.0, %v471
    %v473 = vmul.f32 %v470, %v472
    %v474 = vadd.f32 %v470, %v473
    %vm475 = vweird.f32 %v469
    %vm476 = vweird.f32 %v470
    %vm477 = vmor %vm475, %vm476
    %v478 = vsel %vm477, %v470, %v474
    %v479 = vand.u32 2147483647, %v469
    %vm480 = vcmp.eq.f32.partialorder %v479, 8.507059e+37
    %v481 = vand.u32 %v469, 2147483648
    %v482 = vor.u32 1.1754944e-38, %v481
    %v483 = vsel %vm480, %v482, %v478
    %v484 = vmul.f32 1.0, %v483
    %v485 = vtanh.pop %v427
    %v486 = vmul.f32 %v484, %v360
    %488 = vrot.lane.b32.xlu0 %v485, 64
    %v489 = vpop.permute.xlu0 %488
    %v491 = vmul.f32 %v484, %v489
    %493 = vrot.lane.b32.xlu0 %v491, 32
    %v494 = vpop.permute.xlu0 %493
    %v496 = vadd.f32 %v486, %v494
    %v497 = vtanh.pop %v496
    %499 = vrot.lane.b32.xlu0 %v497, 64
    %v500 = vpop.permute.xlu0 %499
    %v502 = vmul.f32 %v484, %v500
    %v503 = vpack.c.bf16 %v502, %v502
    %505 = vrot.lane.b32.xlu0 %v465, 32
    %v506 = vpop.permute.xlu0 %505
    %s508 = scalar_lea.vmem [#allocation4], 4
    %509 = vst.msk [vmem:[%s508] sm:$0xf] %vm372, %v506
    %511 = vrot.lane.b32.xlu0 %v503, 32
    %v512 = vpop.permute.xlu0 %511
    %s514 = scalar_lea.vmem [#allocation5], 24
    %515 = vst.msk [vmem:[%s514] sm:$0xf] %vm372, %v512
    %s516 = scalar_lea.vmem [#allocation2], 8
    %v517 = vld [vmem:[%s516] sm:$0xf]
    %v518 = vunpack.c.l.bf16 %v517
    %v519 = vunpack.c.l.b16 %v465
    %v520 = vpack.c.b16 %v519, %v519
    %521 = vrot.lane.b32.xlu0 %v520, 32
    %v522 = vpop.permute.xlu0 %521
    %v524 = vsel %vm101, %v522, 0
    %526 = vmatpush.bf16.msra.mxu0 0
    %527 = vmatpush.bf16.msra.mxu0 0
    %528 = vmatpush.bf16.msra.mxu0 0
    %529 = vmatpush.bf16.msra.mxu0 0
    %530 = vmatpush.bf16.msra.mxu0 0
    %531 = vmatpush.bf16.msra.mxu0 0
    %532 = vmatpush.bf16.msra.mxu0 %v243
    %533 = vmatpush.bf16.msra.mxu0 %v242
    %534 = vmatmul.bf16.gmra.mxu0 %v524
    %v535 = vpop.f32.mrf.mxu0
    %v536 = vadd.f32 0.0, %v535
    %v537 = vpop.f32.mrf.mxu0
    %538 = vdwg.mxu0
    %v539 = vadd.f32 %v518, %v536
    %s540 = scalar_lea.vmem [#allocation3], 20
    %v541 = vld [vmem:[%s540] sm:$0xf]
    %v542 = vunpack.c.l.bf16 %v541
    %v543 = vunpack.c.l.b16 %v503
    %v544 = vpack.c.b16 %v543, %v543
    %545 = vrot.lane.b32.xlu0 %v544, 32
    %v546 = vpop.permute.xlu0 %545
    %v548 = vsel %vm101, %v546, 0
    %550 = vmatpush.bf16.msra.mxu0 0
    %551 = vmatpush.bf16.msra.mxu0 0
    %552 = vmatpush.bf16.msra.mxu0 0
    %553 = vmatpush.bf16.msra.mxu0 0
    %554 = vmatpush.bf16.msra.mxu0 0
    %555 = vmatpush.bf16.msra.mxu0 0
    %556 = vmatpush.bf16.msra.mxu0 %v275
    %557 = vmatpush.bf16.msra.mxu0 %v274
    %558 = vmatmul.bf16.gmra.mxu0 %v548
    %v559 = vpop.f32.mrf.mxu0
    %v560 = vadd.f32 0.0, %v559
    %v561 = vpop.f32.mrf.mxu0
    %562 = vdwg.mxu0
    %v563 = vadd.f32 %v542, %v560
    %v564 = vxor.u32 %v539, 2147483648
    %v565 = vmul.f32 %v564, 1.442695
    %v566 = vpow.pop %v565
    %v567 = vadd.f32 %v566, 1.0
    %v568 = vrcp.pop %v567
    %v569 = vmul.f32 %v567, %v568
    %v570 = vsub.f32 1.0, %v569
    %v571 = vmul.f32 %v568, %v570
    %v572 = vadd.f32 %v568, %v571
    %vm573 = vweird.f32 %v567
    %vm574 = vweird.f32 %v568
    %vm575 = vmor %vm573, %vm574
    %v576 = vsel %vm575, %v568, %v572
    %v577 = vand.u32 2147483647, %v567
    %vm578 = vcmp.eq.f32.partialorder %v577, 8.507059e+37
    %v579 = vand.u32 %v567, 2147483648
    %v580 = vor.u32 1.1754944e-38, %v579
    %v581 = vsel %vm578, %v580, %v576
    %v582 = vmul.f32 1.0, %v581
    %v583 = vtanh.pop %v539
    %v584 = vmul.f32 %v582, %v458
    %586 = vrot.lane.b32.xlu0 %v583, 64
    %v587 = vpop.permute.xlu0 %586
    %v589 = vmul.f32 %v582, %v587
    %591 = vrot.lane.b32.xlu0 %v589, 32
    %v592 = vpop.permute.xlu0 %591
    %v594 = vadd.f32 %v584, %v592
    %v595 = vtanh.pop %v594
    %597 = vrot.lane.b32.xlu0 %v595, 64
    %v598 = vpop.permute.xlu0 %597
    %v600 = vmul.f32 %v582, %v598
    %v601 = vpack.c.bf16 %v600, %v600
    %v602 = vxor.u32 %v563, 2147483648
    %v603 = vmul.f32 %v602, 1.442695
    %v604 = vpow.pop %v603
    %v605 = vadd.f32 %v604, 1.0
    %v606 = vrcp.pop %v605
    %v607 = vmul.f32 %v605, %v606
    %v608 = vsub.f32 1.0, %v607
    %v609 = vmul.f32 %v606, %v608
    %v610 = vadd.f32 %v606, %v609
    %vm611 = vweird.f32 %v605
    %vm612 = vweird.f32 %v606
    %vm613 = vmor %vm611, %vm612
    %v614 = vsel %vm613, %v606, %v610
    %v615 = vand.u32 2147483647, %v605
    %vm616 = vcmp.eq.f32.partialorder %v615, 8.507059e+37
    %v617 = vand.u32 %v605, 2147483648
    %v618 = vor.u32 1.1754944e-38, %v617
    %v619 = vsel %vm616, %v618, %v614
    %v620 = vmul.f32 1.0, %v619
    %v621 = vtanh.pop %v563
    %v622 = vmul.f32 %v620, %v496
    %624 = vrot.lane.b32.xlu0 %v621, 64
    %v625 = vpop.permute.xlu0 %624
    %v627 = vmul.f32 %v620, %v625
    %629 = vrot.lane.b32.xlu0 %v627, 32
    %v630 = vpop.permute.xlu0 %629
    %v632 = vadd.f32 %v622, %v630
    %v633 = vtanh.pop %v632
    %635 = vrot.lane.b32.xlu0 %v633, 64
    %v636 = vpop.permute.xlu0 %635
    %v638 = vmul.f32 %v620, %v636
    %v639 = vpack.c.bf16 %v638, %v638
    %641 = vrot.lane.b32.xlu0 %v601, 32
    %v642 = vpop.permute.xlu0 %641
    %s644 = scalar_lea.vmem [#allocation4], 8
    %645 = vst.msk [vmem:[%s644] sm:$0xf] %vm372, %v642
    %647 = vrot.lane.b32.xlu0 %v639, 32
    %v648 = vpop.permute.xlu0 %647
    %s650 = scalar_lea.vmem [#allocation5], 20
    %651 = vst.msk [vmem:[%s650] sm:$0xf] %vm372, %v648
    %s652 = scalar_lea.vmem [#allocation2], 12
    %v653 = vld [vmem:[%s652] sm:$0xf]
    %v654 = vunpack.c.l.bf16 %v653
    %v655 = vunpack.c.l.b16 %v601
    %v656 = vpack.c.b16 %v655, %v655
    %657 = vrot.lane.b32.xlu0 %v656, 32
    %v658 = vpop.permute.xlu0 %657
    %v660 = vsel %vm101, %v658, 0
    %662 = vmatpush.bf16.msra.mxu0 0
    %663 = vmatpush.bf16.msra.mxu0 0
    %664 = vmatpush.bf16.msra.mxu0 0
    %665 = vmatpush.bf16.msra.mxu0 0
    %666 = vmatpush.bf16.msra.mxu0 0
    %667 = vmatpush.bf16.msra.mxu0 0
    %668 = vmatpush.bf16.msra.mxu0 %v243
    %669 = vmatpush.bf16.msra.mxu0 %v242
    %670 = vmatmul.bf16.gmra.mxu0 %v660
    %v671 = vpop.f32.mrf.mxu0
    %v672 = vadd.f32 0.0, %v671
    %v673 = vpop.f32.mrf.mxu0
    %674 = vdwg.mxu0
    %v675 = vadd.f32 %v654, %v672
    %s676 = scalar_lea.vmem [#allocation3], 16
    %v677 = vld [vmem:[%s676] sm:$0xf]
    %v678 = vunpack.c.l.bf16 %v677
    %v679 = vunpack.c.l.b16 %v639
    %v680 = vpack.c.b16 %v679, %v679
    %681 = vrot.lane.b32.xlu0 %v680, 32
    %v682 = vpop.permute.xlu0 %681
    %v684 = vsel %vm101, %v682, 0
    %686 = vmatpush.bf16.msra.mxu0 0
    %687 = vmatpush.bf16.msra.mxu0 0
    %688 = vmatpush.bf16.msra.mxu0 0
    %689 = vmatpush.bf16.msra.mxu0 0
    %690 = vmatpush.bf16.msra.mxu0 0
    %691 = vmatpush.bf16.msra.mxu0 0
    %692 = vmatpush.bf16.msra.mxu0 %v275
    %693 = vmatpush.bf16.msra.mxu0 %v274
    %694 = vmatmul.bf16.gmra.mxu0 %v684
    %v695 = vpop.f32.mrf.mxu0
    %v696 = vadd.f32 0.0, %v695
    %v697 = vpop.f32.mrf.mxu0
    %698 = vdwg.mxu0
    %v699 = vadd.f32 %v678, %v696
    %v700 = vxor.u32 %v675, 2147483648
    %v701 = vmul.f32 %v700, 1.442695
    %v702 = vpow.pop %v701
    %v703 = vadd.f32 %v702, 1.0
    %v704 = vrcp.pop %v703
    %v705 = vmul.f32 %v703, %v704
    %v706 = vsub.f32 1.0, %v705
    %v707 = vmul.f32 %v704, %v706
    %v708 = vadd.f32 %v704, %v707
    %vm709 = vweird.f32 %v703
    %vm710 = vweird.f32 %v704
    %vm711 = vmor %vm709, %vm710
    %v712 = vsel %vm711, %v704, %v708
    %v713 = vand.u32 2147483647, %v703
    %vm714 = vcmp.eq.f32.partialorder %v713, 8.507059e+37
    %v715 = vand.u32 %v703, 2147483648
    %v716 = vor.u32 1.1754944e-38, %v715
    %v717 = vsel %vm714, %v716, %v712
    %v718 = vmul.f32 1.0, %v717
    %v719 = vtanh.pop %v675
    %v720 = vmul.f32 %v718, %v594
    %722 = vrot.lane.b32.xlu0 %v719, 64
    %v723 = vpop.permute.xlu0 %722
    %v725 = vmul.f32 %v718, %v723
    %727 = vrot.lane.b32.xlu0 %v725, 32
    %v728 = vpop.permute.xlu0 %727
    %v730 = vadd.f32 %v720, %v728
    %v731 = vtanh.pop %v730
    %733 = vrot.lane.b32.xlu0 %v731, 64
    %v734 = vpop.permute.xlu0 %733
    %v736 = vmul.f32 %v718, %v734
    %v737 = vpack.c.bf16 %v736, %v736
    %v738 = vxor.u32 %v699, 2147483648
    %v739 = vmul.f32 %v738, 1.442695
    %v740 = vpow.pop %v739
    %v741 = vadd.f32 %v740, 1.0
    %v742 = vrcp.pop %v741
    %v743 = vmul.f32 %v741, %v742
    %v744 = vsub.f32 1.0, %v743
    %v745 = vmul.f32 %v742, %v744
    %v746 = vadd.f32 %v742, %v745
    %vm747 = vweird.f32 %v741
    %vm748 = vweird.f32 %v742
    %vm749 = vmor %vm747, %vm748
    %v750 = vsel %vm749, %v742, %v746
    %v751 = vand.u32 2147483647, %v741
    %vm752 = vcmp.eq.f32.partialorder %v751, 8.507059e+37
    %v753 = vand.u32 %v741, 2147483648
    %v754 = vor.u32 1.1754944e-38, %v753
    %v755 = vsel %vm752, %v754, %v750
    %v756 = vmul.f32 1.0, %v755
    %v757 = vtanh.pop %v699
    %v758 = vmul.f32 %v756, %v632
    %760 = vrot.lane.b32.xlu0 %v757, 64
    %v761 = vpop.permute.xlu0 %760
    %v763 = vmul.f32 %v756, %v761
    %765 = vrot.lane.b32.xlu0 %v763, 32
    %v766 = vpop.permute.xlu0 %765
    %v768 = vadd.f32 %v758, %v766
    %v769 = vtanh.pop %v768
    %771 = vrot.lane.b32.xlu0 %v769, 64
    %v772 = vpop.permute.xlu0 %771
    %v774 = vmul.f32 %v756, %v772
    %v775 = vpack.c.bf16 %v774, %v774
    %777 = vrot.lane.b32.xlu0 %v737, 32
    %v778 = vpop.permute.xlu0 %777
    %s780 = scalar_lea.vmem [#allocation4], 12
    %781 = vst.msk [vmem:[%s780] sm:$0xf] %vm372, %v778
    %783 = vrot.lane.b32.xlu0 %v775, 32
    %v784 = vpop.permute.xlu0 %783
    %s786 = scalar_lea.vmem [#allocation5], 16
    %787 = vst.msk [vmem:[%s786] sm:$0xf] %vm372, %v784
    %s788 = scalar_lea.vmem [#allocation2], 16
    %v789 = vld [vmem:[%s788] sm:$0xf]
    %v790 = vunpack.c.l.bf16 %v789
    %v791 = vunpack.c.l.b16 %v737
    %v792 = vpack.c.b16 %v791, %v791
    %793 = vrot.lane.b32.xlu0 %v792, 32
    %v794 = vpop.permute.xlu0 %793
    %v796 = vsel %vm101, %v794, 0
    %798 = vmatpush.bf16.msra.mxu0 0
    %799 = vmatpush.bf16.msra.mxu0 0
    %800 = vmatpush.bf16.msra.mxu0 0
    %801 = vmatpush.bf16.msra.mxu0 0
    %802 = vmatpush.bf16.msra.mxu0 0
    %803 = vmatpush.bf16.msra.mxu0 0
    %804 = vmatpush.bf16.msra.mxu0 %v243
    %805 = vmatpush.bf16.msra.mxu0 %v242
    %806 = vmatmul.bf16.gmra.mxu0 %v796
    %v807 = vpop.f32.mrf.mxu0
    %v808 = vadd.f32 0.0, %v807
    %v809 = vpop.f32.mrf.mxu0
    %810 = vdwg.mxu0
    %v811 = vadd.f32 %v790, %v808
    %s812 = scalar_lea.vmem [#allocation3], 12
    %v813 = vld [vmem:[%s812] sm:$0xf]
    %v814 = vunpack.c.l.bf16 %v813
    %v815 = vunpack.c.l.b16 %v775
    %v816 = vpack.c.b16 %v815, %v815
    %817 = vrot.lane.b32.xlu0 %v816, 32
    %v818 = vpop.permute.xlu0 %817
    %v820 = vsel %vm101, %v818, 0
    %822 = vmatpush.bf16.msra.mxu0 0
    %823 = vmatpush.bf16.msra.mxu0 0
    %824 = vmatpush.bf16.msra.mxu0 0
    %825 = vmatpush.bf16.msra.mxu0 0
    %826 = vmatpush.bf16.msra.mxu0 0
    %827 = vmatpush.bf16.msra.mxu0 0
    %828 = vmatpush.bf16.msra.mxu0 %v275
    %829 = vmatpush.bf16.msra.mxu0 %v274
    %830 = vmatmul.bf16.gmra.mxu0 %v820
    %v831 = vpop.f32.mrf.mxu0
    %v832 = vadd.f32 0.0, %v831
    %v833 = vpop.f32.mrf.mxu0
    %834 = vdwg.mxu0
    %v835 = vadd.f32 %v814, %v832
    %v836 = vxor.u32 %v811, 2147483648
    %v837 = vmul.f32 %v836, 1.442695
    %v838 = vpow.pop %v837
    %v839 = vadd.f32 %v838, 1.0
    %v840 = vrcp.pop %v839
    %v841 = vmul.f32 %v839, %v840
    %v842 = vsub.f32 1.0, %v841
    %v843 = vmul.f32 %v840, %v842
    %v844 = vadd.f32 %v840, %v843
    %vm845 = vweird.f32 %v839
    %vm846 = vweird.f32 %v840
    %vm847 = vmor %vm845, %vm846
    %v848 = vsel %vm847, %v840, %v844
    %v849 = vand.u32 2147483647, %v839
    %vm850 = vcmp.eq.f32.partialorder %v849, 8.507059e+37
    %v851 = vand.u32 %v839, 2147483648
    %v852 = vor.u32 1.1754944e-38, %v851
    %v853 = vsel %vm850, %v852, %v848
    %v854 = vmul.f32 1.0, %v853
    %v855 = vtanh.pop %v811
    %v856 = vmul.f32 %v854, %v730
    %858 = vrot.lane.b32.xlu0 %v855, 64
    %v859 = vpop.permute.xlu0 %858
    %v861 = vmul.f32 %v854, %v859
    %863 = vrot.lane.b32.xlu0 %v861, 32
    %v864 = vpop.permute.xlu0 %863
    %v866 = vadd.f32 %v856, %v864
    %v867 = vtanh.pop %v866
    %869 = vrot.lane.b32.xlu0 %v867, 64
    %v870 = vpop.permute.xlu0 %869
    %v872 = vmul.f32 %v854, %v870
    %v873 = vpack.c.bf16 %v872, %v872
    %v874 = vxor.u32 %v835, 2147483648
    %v875 = vmul.f32 %v874, 1.442695
    %v876 = vpow.pop %v875
    %v877 = vadd.f32 %v876, 1.0
    %v878 = vrcp.pop %v877
    %v879 = vmul.f32 %v877, %v878
    %v880 = vsub.f32 1.0, %v879
    %v881 = vmul.f32 %v878, %v880
    %v882 = vadd.f32 %v878, %v881
    %vm883 = vweird.f32 %v877
    %vm884 = vweird.f32 %v878
    %vm885 = vmor %vm883, %vm884
    %v886 = vsel %vm885, %v878, %v882
    %v887 = vand.u32 2147483647, %v877
    %vm888 = vcmp.eq.f32.partialorder %v887, 8.507059e+37
    %v889 = vand.u32 %v877, 2147483648
    %v890 = vor.u32 1.1754944e-38, %v889
    %v891 = vsel %vm888, %v890, %v886
    %v892 = vmul.f32 1.0, %v891
    %v893 = vtanh.pop %v835
    %v894 = vmul.f32 %v892, %v768
    %896 = vrot.lane.b32.xlu0 %v893, 64
    %v897 = vpop.permute.xlu0 %896
    %v899 = vmul.f32 %v892, %v897
    %901 = vrot.lane.b32.xlu0 %v899, 32
    %v902 = vpop.permute.xlu0 %901
    %v904 = vadd.f32 %v894, %v902
    %v905 = vtanh.pop %v904
    %907 = vrot.lane.b32.xlu0 %v905, 64
    %v908 = vpop.permute.xlu0 %907
    %v910 = vmul.f32 %v892, %v908
    %v911 = vpack.c.bf16 %v910, %v910
    %913 = vrot.lane.b32.xlu0 %v873, 32
    %v914 = vpop.permute.xlu0 %913
    %s916 = scalar_lea.vmem [#allocation4], 16
    %917 = vst.msk [vmem:[%s916] sm:$0xf] %vm372, %v914
    %919 = vrot.lane.b32.xlu0 %v911, 32
    %v920 = vpop.permute.xlu0 %919
    %s922 = scalar_lea.vmem [#allocation5], 12
    %923 = vst.msk [vmem:[%s922] sm:$0xf] %vm372, %v920
    %s924 = scalar_lea.vmem [#allocation2], 20
    %v925 = vld [vmem:[%s924] sm:$0xf]
    %v926 = vunpack.c.l.bf16 %v925
    %v927 = vunpack.c.l.b16 %v873
    %v928 = vpack.c.b16 %v927, %v927
    %929 = vrot.lane.b32.xlu0 %v928, 32
    %v930 = vpop.permute.xlu0 %929
    %v932 = vsel %vm101, %v930, 0
    %934 = vmatpush.bf16.msra.mxu0 0
    %935 = vmatpush.bf16.msra.mxu0 0
    %936 = vmatpush.bf16.msra.mxu0 0
    %937 = vmatpush.bf16.msra.mxu0 0
    %938 = vmatpush.bf16.msra.mxu0 0
    %939 = vmatpush.bf16.msra.mxu0 0
    %940 = vmatpush.bf16.msra.mxu0 %v243
    %941 = vmatpush.bf16.msra.mxu0 %v242
    %942 = vmatmul.bf16.gmra.mxu0 %v932
    %v943 = vpop.f32.mrf.mxu0
    %v944 = vadd.f32 0.0, %v943
    %v945 = vpop.f32.mrf.mxu0
    %946 = vdwg.mxu0
    %v947 = vadd.f32 %v926, %v944
    %s948 = scalar_lea.vmem [#allocation3], 8
    %v949 = vld [vmem:[%s948] sm:$0xf]
    %v950 = vunpack.c.l.bf16 %v949
    %v951 = vunpack.c.l.b16 %v911
    %v952 = vpack.c.b16 %v951, %v951
    %953 = vrot.lane.b32.xlu0 %v952, 32
    %v954 = vpop.permute.xlu0 %953
    %v956 = vsel %vm101, %v954, 0
    %958 = vmatpush.bf16.msra.mxu0 0
    %959 = vmatpush.bf16.msra.mxu0 0
    %960 = vmatpush.bf16.msra.mxu0 0
    %961 = vmatpush.bf16.msra.mxu0 0
    %962 = vmatpush.bf16.msra.mxu0 0
    %963 = vmatpush.bf16.msra.mxu0 0
    %964 = vmatpush.bf16.msra.mxu0 %v275
    %965 = vmatpush.bf16.msra.mxu0 %v274
    %966 = vmatmul.bf16.gmra.mxu0 %v956
    %v967 = vpop.f32.mrf.mxu0
    %v968 = vadd.f32 0.0, %v967
    %v969 = vpop.f32.mrf.mxu0
    %970 = vdwg.mxu0
    %v971 = vadd.f32 %v950, %v968
    %v972 = vxor.u32 %v947, 2147483648
    %v973 = vmul.f32 %v972, 1.442695
    %v974 = vpow.pop %v973
    %v975 = vadd.f32 %v974, 1.0
    %v976 = vrcp.pop %v975
    %v977 = vmul.f32 %v975, %v976
    %v978 = vsub.f32 1.0, %v977
    %v979 = vmul.f32 %v976, %v978
    %v980 = vadd.f32 %v976, %v979
    %vm981 = vweird.f32 %v975
    %vm982 = vweird.f32 %v976
    %vm983 = vmor %vm981, %vm982
    %v984 = vsel %vm983, %v976, %v980
    %v985 = vand.u32 2147483647, %v975
    %vm986 = vcmp.eq.f32.partialorder %v985, 8.507059e+37
    %v987 = vand.u32 %v975, 2147483648
    %v988 = vor.u32 1.1754944e-38, %v987
    %v989 = vsel %vm986, %v988, %v984
    %v990 = vmul.f32 1.0, %v989
    %v991 = vtanh.pop %v947
    %v992 = vmul.f32 %v990, %v866
    %994 = vrot.lane.b32.xlu0 %v991, 64
    %v995 = vpop.permute.xlu0 %994
    %v997 = vmul.f32 %v990, %v995
    %999 = vrot.lane.b32.xlu0 %v997, 32
    %v1000 = vpop.permute.xlu0 %999
    %v1002 = vadd.f32 %v992, %v1000
    %v1003 = vtanh.pop %v1002
    %1005 = vrot.lane.b32.xlu0 %v1003, 64
    %v1006 = vpop.permute.xlu0 %1005
    %v1008 = vmul.f32 %v990, %v1006
    %v1009 = vpack.c.bf16 %v1008, %v1008
    %v1010 = vxor.u32 %v971, 2147483648
    %v1011 = vmul.f32 %v1010, 1.442695
    %v1012 = vpow.pop %v1011
    %v1013 = vadd.f32 %v1012, 1.0
    %v1014 = vrcp.pop %v1013
    %v1015 = vmul.f32 %v1013, %v1014
    %v1016 = vsub.f32 1.0, %v1015
    %v1017 = vmul.f32 %v1014, %v1016
    %v1018 = vadd.f32 %v1014, %v1017
    %vm1019 = vweird.f32 %v1013
    %vm1020 = vweird.f32 %v1014
    %vm1021 = vmor %vm1019, %vm1020
    %v1022 = vsel %vm1021, %v1014, %v1018
    %v1023 = vand.u32 2147483647, %v1013
    %vm1024 = vcmp.eq.f32.partialorder %v1023, 8.507059e+37
    %v1025 = vand.u32 %v1013, 2147483648
    %v1026 = vor.u32 1.1754944e-38, %v1025
    %v1027 = vsel %vm1024, %v1026, %v1022
    %v1028 = vmul.f32 1.0, %v1027
    %v1029 = vtanh.pop %v971
    %v1030 = vmul.f32 %v1028, %v904
    %1032 = vrot.lane.b32.xlu0 %v1029, 64
    %v1033 = vpop.permute.xlu0 %1032
    %v1035 = vmul.f32 %v1028, %v1033
    %1037 = vrot.lane.b32.xlu0 %v1035, 32
    %v1038 = vpop.permute.xlu0 %1037
    %v1040 = vadd.f32 %v1030, %v1038
    %v1041 = vtanh.pop %v1040
    %1043 = vrot.lane.b32.xlu0 %v1041, 64
    %v1044 = vpop.permute.xlu0 %1043
    %v1046 = vmul.f32 %v1028, %v1044
    %v1047 = vpack.c.bf16 %v1046, %v1046
    %1049 = vrot.lane.b32.xlu0 %v1009, 32
    %v1050 = vpop.permute.xlu0 %1049
    %s1052 = scalar_lea.vmem [#allocation4], 20
    %1053 = vst.msk [vmem:[%s1052] sm:$0xf] %vm372, %v1050
    %1055 = vrot.lane.b32.xlu0 %v1047, 32
    %v1056 = vpop.permute.xlu0 %1055
    %s1058 = scalar_lea.vmem [#allocation5], 8
    %1059 = vst.msk [vmem:[%s1058] sm:$0xf] %vm372, %v1056
    %s1060 = scalar_lea.vmem [#allocation2], 24
    %v1061 = vld [vmem:[%s1060] sm:$0xf]
    %v1062 = vunpack.c.l.bf16 %v1061
    %v1063 = vunpack.c.l.b16 %v1009
    %v1064 = vpack.c.b16 %v1063, %v1063
    %1065 = vrot.lane.b32.xlu0 %v1064, 32
    %v1066 = vpop.permute.xlu0 %1065
    %v1068 = vsel %vm101, %v1066, 0
    %1070 = vmatpush.bf16.msra.mxu0 0
    %1071 = vmatpush.bf16.msra.mxu0 0
    %1072 = vmatpush.bf16.msra.mxu0 0
    %1073 = vmatpush.bf16.msra.mxu0 0
    %1074 = vmatpush.bf16.msra.mxu0 0
    %1075 = vmatpush.bf16.msra.mxu0 0
    %1076 = vmatpush.bf16.msra.mxu0 %v243
    %1077 = vmatpush.bf16.msra.mxu0 %v242
    %1078 = vmatmul.bf16.gmra.mxu0 %v1068
    %v1079 = vpop.f32.mrf.mxu0
    %v1080 = vadd.f32 0.0, %v1079
    %v1081 = vpop.f32.mrf.mxu0
    %1082 = vdwg.mxu0
    %v1083 = vadd.f32 %v1062, %v1080
    %s1084 = scalar_lea.vmem [#allocation3], 4
    %v1085 = vld [vmem:[%s1084] sm:$0xf]
    %v1086 = vunpack.c.l.bf16 %v1085
    %v1087 = vunpack.c.l.b16 %v1047
    %v1088 = vpack.c.b16 %v1087, %v1087
    %1089 = vrot.lane.b32.xlu0 %v1088, 32
    %v1090 = vpop.permute.xlu0 %1089
    %v1092 = vsel %vm101, %v1090, 0
    %1094 = vmatpush.bf16.msra.mxu0 0
    %1095 = vmatpush.bf16.msra.mxu0 0
    %1096 = vmatpush.bf16.msra.mxu0 0
    %1097 = vmatpush.bf16.msra.mxu0 0
    %1098 = vmatpush.bf16.msra.mxu0 0
    %1099 = vmatpush.bf16.msra.mxu0 0
    %1100 = vmatpush.bf16.msra.mxu0 %v275
    %1101 = vmatpush.bf16.msra.mxu0 %v274
    %1102 = vmatmul.bf16.gmra.mxu0 %v1092
    %v1103 = vpop.f32.mrf.mxu0
    %v1104 = vadd.f32 0.0, %v1103
    %v1105 = vpop.f32.mrf.mxu0
    %1106 = vdwg.mxu0
    %v1107 = vadd.f32 %v1086, %v1104
    %v1108 = vxor.u32 %v1083, 2147483648
    %v1109 = vmul.f32 %v1108, 1.442695
    %v1110 = vpow.pop %v1109
    %v1111 = vadd.f32 %v1110, 1.0
    %v1112 = vrcp.pop %v1111
    %v1113 = vmul.f32 %v1111, %v1112
    %v1114 = vsub.f32 1.0, %v1113
    %v1115 = vmul.f32 %v1112, %v1114
    %v1116 = vadd.f32 %v1112, %v1115
    %vm1117 = vweird.f32 %v1111
    %vm1118 = vweird.f32 %v1112
    %vm1119 = vmor %vm1117, %vm1118
    %v1120 = vsel %vm1119, %v1112, %v1116
    %v1121 = vand.u32 2147483647, %v1111
    %vm1122 = vcmp.eq.f32.partialorder %v1121, 8.507059e+37
    %v1123 = vand.u32 %v1111, 2147483648
    %v1124 = vor.u32 1.1754944e-38, %v1123
    %v1125 = vsel %vm1122, %v1124, %v1120
    %v1126 = vmul.f32 1.0, %v1125
    %v1127 = vtanh.pop %v1083
    %v1128 = vmul.f32 %v1126, %v1002
    %1130 = vrot.lane.b32.xlu0 %v1127, 64
    %v1131 = vpop.permute.xlu0 %1130
    %v1133 = vmul.f32 %v1126, %v1131
    %1135 = vrot.lane.b32.xlu0 %v1133, 32
    %v1136 = vpop.permute.xlu0 %1135
    %v1138 = vadd.f32 %v1128, %v1136
    %v1139 = vtanh.pop %v1138
    %1141 = vrot.lane.b32.xlu0 %v1139, 64
    %v1142 = vpop.permute.xlu0 %1141
    %v1144 = vmul.f32 %v1126, %v1142
    %v1145 = vpack.c.bf16 %v1144, %v1144
    %v1146 = vxor.u32 %v1107, 2147483648
    %v1147 = vmul.f32 %v1146, 1.442695
    %v1148 = vpow.pop %v1147
    %v1149 = vadd.f32 %v1148, 1.0
    %v1150 = vrcp.pop %v1149
    %v1151 = vmul.f32 %v1149, %v1150
    %v1152 = vsub.f32 1.0, %v1151
    %v1153 = vmul.f32 %v1150, %v1152
    %v1154 = vadd.f32 %v1150, %v1153
    %vm1155 = vweird.f32 %v1149
    %vm1156 = vweird.f32 %v1150
    %vm1157 = vmor %vm1155, %vm1156
    %v1158 = vsel %vm1157, %v1150, %v1154
    %v1159 = vand.u32 2147483647, %v1149
    %vm1160 = vcmp.eq.f32.partialorder %v1159, 8.507059e+37
    %v1161 = vand.u32 %v1149, 2147483648
    %v1162 = vor.u32 1.1754944e-38, %v1161
    %v1163 = vsel %vm1160, %v1162, %v1158
    %v1164 = vmul.f32 1.0, %v1163
    %v1165 = vtanh.pop %v1107
    %v1166 = vmul.f32 %v1164, %v1040
    %1168 = vrot.lane.b32.xlu0 %v1165, 64
    %v1169 = vpop.permute.xlu0 %1168
    %v1171 = vmul.f32 %v1164, %v1169
    %1173 = vrot.lane.b32.xlu0 %v1171, 32
    %v1174 = vpop.permute.xlu0 %1173
    %v1176 = vadd.f32 %v1166, %v1174
    %v1177 = vtanh.pop %v1176
    %1179 = vrot.lane.b32.xlu0 %v1177, 64
    %v1180 = vpop.permute.xlu0 %1179
    %v1182 = vmul.f32 %v1164, %v1180
    %v1183 = vpack.c.bf16 %v1182, %v1182
    %1185 = vrot.lane.b32.xlu0 %v1145, 32
    %v1186 = vpop.permute.xlu0 %1185
    %s1188 = scalar_lea.vmem [#allocation4], 24
    %1189 = vst.msk [vmem:[%s1188] sm:$0xf] %vm372, %v1186
    %1191 = vrot.lane.b32.xlu0 %v1183, 32
    %v1192 = vpop.permute.xlu0 %1191
    %s1194 = scalar_lea.vmem [#allocation5], 4
    %1195 = vst.msk [vmem:[%s1194] sm:$0xf] %vm372, %v1192
    %s1196 = scalar_lea.vmem [#allocation2], 28
    %v1197 = vld [vmem:[%s1196] sm:$0xf]
    %v1198 = vunpack.c.l.bf16 %v1197
    %v1199 = vunpack.c.l.b16 %v1145
    %v1200 = vpack.c.b16 %v1199, %v1199
    %1201 = vrot.lane.b32.xlu0 %v1200, 32
    %v1202 = vpop.permute.xlu0 %1201
    %v1204 = vsel %vm101, %v1202, 0
    %1206 = vmatpush.bf16.msra.mxu0 0
    %1207 = vmatpush.bf16.msra.mxu0 0
    %1208 = vmatpush.bf16.msra.mxu0 0
    %1209 = vmatpush.bf16.msra.mxu0 0
    %1210 = vmatpush.bf16.msra.mxu0 0
    %1211 = vmatpush.bf16.msra.mxu0 0
    %1212 = vmatpush.bf16.msra.mxu0 %v243
    %1213 = vmatpush.bf16.msra.mxu0 %v242
    %1214 = vmatmul.bf16.gmra.mxu0 %v1204
    %v1215 = vpop.f32.mrf.mxu0
    %v1216 = vadd.f32 0.0, %v1215
    %v1217 = vpop.f32.mrf.mxu0
    %1218 = vdwg.mxu0
    %v1219 = vadd.f32 %v1198, %v1216
    %v1220 = vld [vmem:[#allocation3] sm:$0xf]
    %v1221 = vunpack.c.l.bf16 %v1220
    %v1222 = vunpack.c.l.b16 %v1183
    %v1223 = vpack.c.b16 %v1222, %v1222
    %1224 = vrot.lane.b32.xlu0 %v1223, 32
    %v1225 = vpop.permute.xlu0 %1224
    %v1227 = vsel %vm101, %v1225, 0
    %1229 = vmatpush.bf16.msra.mxu0 0
    %1230 = vmatpush.bf16.msra.mxu0 0
    %1231 = vmatpush.bf16.msra.mxu0 0
    %1232 = vmatpush.bf16.msra.mxu0 0
    %1233 = vmatpush.bf16.msra.mxu0 0
    %1234 = vmatpush.bf16.msra.mxu0 0
    %1235 = vmatpush.bf16.msra.mxu0 %v275
    %1236 = vmatpush.bf16.msra.mxu0 %v274
    %1237 = vmatmul.bf16.gmra.mxu0 %v1227
    %v1238 = vpop.f32.mrf.mxu0
    %v1239 = vadd.f32 0.0, %v1238
    %v1240 = vpop.f32.mrf.mxu0
    %1241 = vdwg.mxu0
    %v1242 = vadd.f32 %v1221, %v1239
    %v1243 = vxor.u32 %v1219, 2147483648
    %v1244 = vmul.f32 %v1243, 1.442695
    %v1245 = vpow.pop %v1244
    %v1246 = vadd.f32 %v1245, 1.0
    %v1247 = vrcp.pop %v1246
    %v1248 = vmul.f32 %v1246, %v1247
    %v1249 = vsub.f32 1.0, %v1248
    %v1250 = vmul.f32 %v1247, %v1249
    %v1251 = vadd.f32 %v1247, %v1250
    %vm1252 = vweird.f32 %v1246
    %vm1253 = vweird.f32 %v1247
    %vm1254 = vmor %vm1252, %vm1253
    %v1255 = vsel %vm1254, %v1247, %v1251
    %v1256 = vand.u32 2147483647, %v1246
    %vm1257 = vcmp.eq.f32.partialorder %v1256, 8.507059e+37
    %v1258 = vand.u32 %v1246, 2147483648
    %v1259 = vor.u32 1.1754944e-38, %v1258
    %v1260 = vsel %vm1257, %v1259, %v1255
    %v1261 = vmul.f32 1.0, %v1260
    %v1262 = vtanh.pop %v1219
    %v1263 = vmul.f32 %v1261, %v1138
    %1265 = vrot.lane.b32.xlu0 %v1262, 64
    %v1266 = vpop.permute.xlu0 %1265
    %v1268 = vmul.f32 %v1261, %v1266
    %1270 = vrot.lane.b32.xlu0 %v1268, 32
    %v1271 = vpop.permute.xlu0 %1270
    %v1273 = vadd.f32 %v1263, %v1271
    %v1274 = vtanh.pop %v1273
    %1276 = vrot.lane.b32.xlu0 %v1274, 64
    %v1277 = vpop.permute.xlu0 %1276
    %v1279 = vmul.f32 %v1261, %v1277
    %v1280 = vpack.c.bf16 %v1279, %v1279
    %v1281 = vxor.u32 %v1242, 2147483648
    %v1282 = vmul.f32 %v1281, 1.442695
    %v1283 = vpow.pop %v1282
    %v1284 = vadd.f32 %v1283, 1.0
    %v1285 = vrcp.pop %v1284
    %v1286 = vmul.f32 %v1284, %v1285
    %v1287 = vsub.f32 1.0, %v1286
    %v1288 = vmul.f32 %v1285, %v1287
    %v1289 = vadd.f32 %v1285, %v1288
    %vm1290 = vweird.f32 %v1284
    %vm1291 = vweird.f32 %v1285
    %vm1292 = vmor %vm1290, %vm1291
    %v1293 = vsel %vm1292, %v1285, %v1289
    %v1294 = vand.u32 2147483647, %v1284
    %vm1295 = vcmp.eq.f32.partialorder %v1294, 8.507059e+37
    %v1296 = vand.u32 %v1284, 2147483648
    %v1297 = vor.u32 1.1754944e-38, %v1296
    %v1298 = vsel %vm1295, %v1297, %v1293
    %v1299 = vmul.f32 1.0, %v1298
    %v1300 = vtanh.pop %v1242
    %v1301 = vmul.f32 %v1299, %v1176
    %1303 = vrot.lane.b32.xlu0 %v1300, 64
    %v1304 = vpop.permute.xlu0 %1303
    %v1306 = vmul.f32 %v1299, %v1304
    %1308 = vrot.lane.b32.xlu0 %v1306, 32
    %v1309 = vpop.permute.xlu0 %1308
    %v1311 = vadd.f32 %v1301, %v1309
    %v1312 = vtanh.pop %v1311
    %1314 = vrot.lane.b32.xlu0 %v1312, 64
    %v1315 = vpop.permute.xlu0 %1314
    %v1317 = vmul.f32 %v1299, %v1315
    %v1318 = vpack.c.bf16 %v1317, %v1317
    %1320 = vrot.lane.b32.xlu0 %v1280, 32
    %v1321 = vpop.permute.xlu0 %1320
    %s1323 = scalar_lea.vmem [#allocation4], 28
    %1324 = vst.msk [vmem:[%s1323] sm:$0xf] %vm372, %v1321
    %1326 = vrot.lane.b32.xlu0 %v1318, 32
    %v1327 = vpop.permute.xlu0 %1326
    %1329 = vst.msk [vmem:[#allocation5] sm:$0xf] %vm372, %v1327
    %v1330 = vld [vmem:[#allocation4] sm:$0xf]
    %v1331 = vld [vmem:[#allocation4 + $0x4] sm:$0xf]
    %v1332 = vld [vmem:[#allocation4 + $0x8] sm:$0xf]
    %v1333 = vld [vmem:[#allocation4 + $0xc] sm:$0xf]
    %v1334 = vld [vmem:[#allocation4 + $0x10] sm:$0xf]
    %v1335 = vld [vmem:[#allocation4 + $0x14] sm:$0xf]
    %v1336 = vld [vmem:[#allocation4 + $0x18] sm:$0xf]
    %v1337 = vld [vmem:[#allocation4 + $0x1c] sm:$0xf]
    %v1338 = vld [vmem:[%s7] sm:$0xf]
    %v1339 = vld [vmem:[%s7 + $0x4] sm:$0xf]
    %v1340 = vld [vmem:[%s7 + $0x8] sm:$0xf]
    %v1341 = vld [vmem:[%s7 + $0xc] sm:$0xf]
    %v1342 = vld [vmem:[#allocation5] sm:$0xf]
    %v1343 = vld [vmem:[#allocation5 + $0x4] sm:$0xf]
    %v1344 = vld [vmem:[#allocation5 + $0x8] sm:$0xf]
    %v1345 = vld [vmem:[#allocation5 + $0xc] sm:$0xf]
    %v1346 = vld [vmem:[#allocation5 + $0x10] sm:$0xf]
    %v1347 = vld [vmem:[#allocation5 + $0x14] sm:$0xf]
    %v1348 = vld [vmem:[#allocation5 + $0x18] sm:$0xf]
    %v1349 = vld [vmem:[#allocation5 + $0x1c] sm:$0xf]
    %v1350 = vld [vmem:[%s8] sm:$0xf]
    %v1351 = vld [vmem:[%s8 + $0x4] sm:$0xf]
    %v1352 = vld [vmem:[%s8 + $0x8] sm:$0xf]
    %v1353 = vld [vmem:[%s8 + $0xc] sm:$0xf]
    %v1362 = vunpack.c.l.b16 %v1342
    %v1363 = vunpack.c.l.b16 %v1343
    %v1364 = vunpack.c.l.b16 %v1344
    %v1365 = vunpack.c.l.b16 %v1345
    %v1366 = vunpack.c.l.b16 %v1346
    %v1367 = vunpack.c.l.b16 %v1347
    %v1368 = vunpack.c.l.b16 %v1348
    %v1369 = vunpack.c.l.b16 %v1349
    %v1370 = vpack.c.b16 %v1363, %v1362
    %v1371 = vpack.c.b16 %v1365, %v1364
    %v1372 = vpack.c.b16 %v1367, %v1366
    %v1373 = vpack.c.b16 %v1369, %v1368
    %v1378 = vunpack.c.l.b16 %v1350
    %v1379 = vunpack.c.l.b16 %v1351
    %v1380 = vunpack.c.l.b16 %v1352
    %v1381 = vunpack.c.l.b16 %v1353
    %v1382 = vpack.c.b16 %v1379, %v1378
    %v1383 = vpack.c.b16 %v1381, %v1380
    %v1387 = vsel %vm101, %v1370, 0
    %v1390 = vsel %vm101, %v1371, 0
    %v1393 = vsel %vm101, %v1372, 0
    %v1396 = vsel %vm101, %v1373, 0
    %1398 = vmatpush.bf16.msra.mxu0 0
    %1399 = vmatpush.bf16.msra.mxu0 0
    %1400 = vmatpush.bf16.msra.mxu0 0
    %1401 = vmatpush.bf16.msra.mxu0 0
    %1402 = vmatpush.bf16.msra.mxu0 0
    %1403 = vmatpush.bf16.msra.mxu0 0
    %1404 = vmatpush.bf16.msra.mxu0 %v1383
    %1405 = vmatpush.bf16.msra.mxu0 %v1382
    %1406 = vmatmul.bf16.gmra.mxu0 %v1387
    %v1407 = vpop.f32.mrf.mxu0
    %v1408 = vadd.f32 0.0, %v1407
    %v1409 = vpop.f32.mrf.mxu0
    %v1410 = vadd.f32 0.0, %v1409
    %1411 = vmatmul.bf16.gmra.mxu0 %v1390
    %v1412 = vpop.f32.mrf.mxu0
    %v1413 = vadd.f32 0.0, %v1412
    %v1414 = vpop.f32.mrf.mxu0
    %v1415 = vadd.f32 0.0, %v1414
    %1416 = vmatmul.bf16.gmra.mxu0 %v1393
    %v1417 = vpop.f32.mrf.mxu0
    %v1418 = vadd.f32 0.0, %v1417
    %v1419 = vpop.f32.mrf.mxu0
    %v1420 = vadd.f32 0.0, %v1419
    %1421 = vmatmul.bf16.gmra.mxu0 %v1396
    %v1422 = vpop.f32.mrf.mxu0
    %v1423 = vadd.f32 0.0, %v1422
    %v1424 = vpop.f32.mrf.mxu0
    %v1425 = vadd.f32 0.0, %v1424
    %1426 = vdwg.mxu0
    %v1435 = vunpack.c.l.b16 %v1330
    %v1436 = vunpack.c.l.b16 %v1331
    %v1437 = vunpack.c.l.b16 %v1332
    %v1438 = vunpack.c.l.b16 %v1333
    %v1439 = vunpack.c.l.b16 %v1334
    %v1440 = vunpack.c.l.b16 %v1335
    %v1441 = vunpack.c.l.b16 %v1336
    %v1442 = vunpack.c.l.b16 %v1337
    %v1443 = vpack.c.b16 %v1436, %v1435
    %v1444 = vpack.c.b16 %v1438, %v1437
    %v1445 = vpack.c.b16 %v1440, %v1439
    %v1446 = vpack.c.b16 %v1442, %v1441
    %v1451 = vunpack.c.l.b16 %v1338
    %v1452 = vunpack.c.l.b16 %v1339
    %v1453 = vunpack.c.l.b16 %v1340
    %v1454 = vunpack.c.l.b16 %v1341
    %v1455 = vpack.c.b16 %v1452, %v1451
    %v1456 = vpack.c.b16 %v1454, %v1453
    %v1460 = vsel %vm101, %v1443, 0
    %v1463 = vsel %vm101, %v1444, 0
    %v1466 = vsel %vm101, %v1445, 0
    %v1469 = vsel %vm101, %v1446, 0
    %1471 = vmatpush.bf16.msra.mxu0 0
    %1472 = vmatpush.bf16.msra.mxu0 0
    %1473 = vmatpush.bf16.msra.mxu0 0
    %1474 = vmatpush.bf16.msra.mxu0 0
    %1475 = vmatpush.bf16.msra.mxu0 0
    %1476 = vmatpush.bf16.msra.mxu0 0
    %1477 = vmatpush.bf16.msra.mxu0 %v1456
    %1478 = vmatpush.bf16.msra.mxu0 %v1455
    %1479 = vmatmul.bf16.gmra.mxu0 %v1460
    %v1480 = vpop.f32.mrf.mxu0
    %v1481 = vadd.f32 %v1408, %v1480
    %v1482 = vpop.f32.mrf.mxu0
    %v1483 = vadd.f32 %v1410, %v1482
    %1484 = vmatmul.bf16.gmra.mxu0 %v1463
    %v1485 = vpop.f32.mrf.mxu0
    %v1486 = vadd.f32 %v1413, %v1485
    %v1487 = vpop.f32.mrf.mxu0
    %v1488 = vadd.f32 %v1415, %v1487
    %1489 = vmatmul.bf16.gmra.mxu0 %v1466
    %v1490 = vpop.f32.mrf.mxu0
    %v1491 = vadd.f32 %v1418, %v1490
    %v1492 = vpop.f32.mrf.mxu0
    %v1493 = vadd.f32 %v1420, %v1492
    %1494 = vmatmul.bf16.gmra.mxu0 %v1469
    %v1495 = vpop.f32.mrf.mxu0
    %v1496 = vadd.f32 %v1423, %v1495
    %v1497 = vpop.f32.mrf.mxu0
    %v1498 = vadd.f32 %v1425, %v1497
    %1499 = vdwg.mxu0
    %v1500 = vld [vmem:[%s9] sm:$0x1]
    %v1502 = vperm.slane %v1500, 0
    %v1504 = vadd.f32 %v1481, %v1502
    %v1505 = vadd.f32 %v1483, %v1502
    %v1506 = vadd.f32 %v1486, %v1502
    %v1507 = vadd.f32 %v1488, %v1502
    %v1508 = vadd.f32 %v1491, %v1502
    %v1509 = vadd.f32 %v1493, %v1502
    %v1510 = vadd.f32 %v1496, %v1502
    %v1511 = vadd.f32 %v1498, %v1502
    %vm1512 = vcmask 130048
    %1513 = vst.msk [vmem:[#allocation11] sm:$0xff] %vm1512, %v1504
    %1514 = vst.msk [vmem:[#allocation11 + $0x8] sm:$0xff] %vm1512, %v1505
    %1515 = vst.msk [vmem:[#allocation11 + $0x10] sm:$0xff] %vm1512, %v1506
    %1516 = vst.msk [vmem:[#allocation11 + $0x18] sm:$0xff] %vm1512, %v1507
    %1517 = vst.msk [vmem:[#allocation11 + $0x20] sm:$0xff] %vm1512, %v1508
    %1518 = vst.msk [vmem:[#allocation11 + $0x28] sm:$0xff] %vm1512, %v1509
    %1519 = vst.msk [vmem:[#allocation11 + $0x30] sm:$0xff] %vm1512, %v1510
    %1520 = vst.msk [vmem:[#allocation11 + $0x38] sm:$0xff] %vm1512, %v1511
    // Predicated region
    $region50: #{tpu_custom_call.1} parent=1 // pred_check
      _
    $region51: #{tpu_custom_call.1} parent=1 // pred_check_branch
      %1522 = sbr.rel (0) target = $region53
    $region52: #{tpu_custom_call.1} parent=1 // pred_region
      %1524 = vsyncadd [#allocation8], 0
      %s1525 = sshll.u32 [#allocation11], 4
      %s1526 = int_to_ptr.vmem [resolvable:$true] %s1525
      %s1527 = sshll.u32 %s10, 4
      %s1528 = int_to_ptr.hbm [resolvable:$true] %s1527
      %1533 = dma.vmem_to_hbm [thread:$0]  %s1526, 1024, %s1528, [#allocation8], 128, 128, 8
    $region53: #{tpu_custom_call.1} parent=1 // pred_fallthru
      _
    // Predicated region
    $region54: #{tpu_custom_call.1} parent=1 // pred_check
      _
    $region55: #{tpu_custom_call.1} parent=1 // pred_check_branch
      %1535 = sbr.rel (0) target = $region57
    $region56: #{tpu_custom_call.1} parent=1 // pred_region
      %1537 = dma.done [#allocation8], 1024
    $region57: #{tpu_custom_call.1} parent=1 // pred_fallthru
      _
    %1538 = vsyncpa [#allocation7], 1
    %1539 = vsyncpa [#allocation10], 1
    %1540 = vsyncpa [#allocation8], 1

</llo_original>
